<compile_context>
chip_gen: v7x
topology: tpu7x:2x2x1
jax: 0.10.0
libtpu: 0.0.40
codegen_flags: <defaults>
</compile_context>

<pallas_src>
from functools import partial

import jax
import jax.numpy as jnp
from jax.experimental import pallas as pl
from jax.experimental.pallas import tpu as pltpu


def _layernorm(x, g, b, eps=1e-5):
    mu = jnp.mean(x, axis=-1, keepdims=True)
    xc = x - mu
    var = jnp.mean(xc * xc, axis=-1, keepdims=True)
    return xc * jax.lax.rsqrt(var + eps) * g + b


def slot_attention_kernel(
    inputs_ref, slots_init_ref, aux_ref,
    w_kv_ref, w_q_ref, w_ih_ref, w_hh_ref, w1_ref, w2_ref,
    out_ref,
    *, iters, eps, scale,
):
    f32 = jnp.float32
    bt, n, d = inputs_ref.shape
    s = slots_init_ref.shape[1]
    rs = bt * s                              # rows of the flattened slot matrix
    hidden = w1_ref.shape[1]

    # ---- packed per-feature params (one load, static slices, hoisted) -------
    # rows: [in_g, in_b, slot_g, slot_b, mlp_g, mlp_b, b_kv, b_q, b_ih, b_hh, b1, b2]
    aux = aux_ref[...]
    ln_in_g, ln_in_b = aux[0:1, :d], aux[1:2, :d]
    b_kv = aux[6:7, :2 * d]
    # loop-invariant broadcasts, hoisted out of the unrolled iteration loop
    ln_s_g = jnp.broadcast_to(aux[2:3, :d], (rs, d))
    ln_s_b = jnp.broadcast_to(aux[3:4, :d], (rs, d))
    ln_m_g = jnp.broadcast_to(aux[4:5, :d], (rs, d))
    ln_m_b = jnp.broadcast_to(aux[5:6, :d], (rs, d))
    b_q  = jnp.broadcast_to(aux[7:8, :d], (rs, d))
    b_ih = jnp.broadcast_to(aux[8:9, :3 * d], (rs, 3 * d))
    b_hh = jnp.broadcast_to(aux[9:10, :3 * d], (rs, 3 * d))
    b1   = jnp.broadcast_to(aux[10:11, :hidden], (rs, hidden))
    b2   = jnp.broadcast_to(aux[11:12, :d], (rs, d))

    # ---- loop-invariant: inputs LayerNorm + fused K|V projection ------------
    x = inputs_ref[...].reshape(bt * n, d)
    x_n = _layernorm(x, ln_in_g, ln_in_b)
    kv = jnp.dot(x_n, w_kv_ref[...], preferred_element_type=f32) + b_kv
    k = kv[:, :d].reshape(bt, n, d)          # (Bt, N, D)
    v = kv[:, d:].reshape(bt, n, d)          # (Bt, N, D)

    slots = slots_init_ref[...].reshape(rs, d).astype(f32)

    for _ in range(iters):
        slots_prev = slots

        # q projection on the flattened slot rows
        s_n = _layernorm(slots, ln_s_g, ln_s_b)
        q = (jnp.dot(s_n, w_q_ref[...], preferred_element_type=f32) + b_q)
        q = q.reshape(bt, s, d)

        # dots = einsum('bid,bjd->bij', q, k) * scale  (contract D directly)
        dots = jnp.einsum('bid,bjd->bij', q, k,
                          preferred_element_type=f32) * scale      # (Bt, S, N)

        # softmax over the slot axis (torch dim=1), then renormalize over N
        d_max = jnp.max(dots, axis=1, keepdims=True)
        e = jnp.exp(dots - d_max)
        attn = e * pl.reciprocal(jnp.sum(e, axis=1, keepdims=True), approx=True)
        attn = attn + eps
        attn = attn * pl.reciprocal(jnp.sum(attn, axis=-1, keepdims=True),
                                    approx=True)

        # updates = einsum('bjd,bij->bid', v, attn)
        updates = jnp.einsum('bij,bjd->bid', attn, v,
                             preferred_element_type=f32)            # (Bt, S, D)
        updates = updates.reshape(rs, d)

        # GRUCell with fused (D, 3D) weights; gate order r | z | n
        gi = jnp.dot(updates, w_ih_ref[...], preferred_element_type=f32) + b_ih
        gh = jnp.dot(slots_prev, w_hh_ref[...], preferred_element_type=f32) + b_hh
        r = jax.nn.sigmoid(gi[:, :d] + gh[:, :d])
        z = jax.nn.sigmoid(gi[:, d:2 * d] + gh[:, d:2 * d])
        n_gate = jnp.tanh(gi[:, 2 * d:] + r * gh[:, 2 * d:])
        slots = (1.0 - z) * n_gate + z * slots_prev

        # slots = slots + mlp(norm_mlp(slots))
        m = _layernorm(slots, ln_m_g, ln_m_b)
        h = jnp.maximum(jnp.dot(m, w1_ref[...], preferred_element_type=f32) + b1,
                        0.0)
        slots = slots + jnp.dot(h, w2_ref[...], preferred_element_type=f32) + b2

    out_ref[...] = slots.reshape(bt, s, d).astype(out_ref.dtype)


def slot_attention(inputs, slots_init, params, *, iters=3, eps=1e-8,
                   batch_tile=None):
    b, n, d = inputs.shape
    s = slots_init.shape[1]
    hidden = params["w1"].shape[1]
    scale = float(d) ** -0.5

    if batch_tile is None:
        # keep grid >= 2 so both v7x TensorCores get work
        batch_tile = b // 2 if (b >= 2 and b % 2 == 0) else b
    assert b % batch_tile == 0
    grid = b // batch_tile

    # ---- pack LayerNorm gammas/betas + all bias vectors into one (12, W) ----
    width = max(3 * d, hidden, 2 * d)

    def pad_row(v):
        v = jnp.asarray(v, jnp.float32).reshape(-1)
        return jnp.pad(v, (0, width - v.shape[0]))

    ln = params["ln"]                         # (6, d): in_g,in_b,slot_g,slot_b,mlp_g,mlp_b
    aux = jnp.stack([
        pad_row(ln[0]), pad_row(ln[1]), pad_row(ln[2]),
        pad_row(ln[3]), pad_row(ln[4]), pad_row(ln[5]),
        pad_row(params["b_kv"]), pad_row(params["b_q"]),
        pad_row(params["b_ih"]), pad_row(params["b_hh"]),
        pad_row(params["b1"]), pad_row(params["b2"]),
    ])                                        # (12, W)

    weights = [params[k] for k in ("w_kv", "w_q", "w_ih", "w_hh", "w1", "w2")]

    def wspec(a):
        # constant-index full-array weight block (not re-fetched across steps)
        return pl.BlockSpec(a.shape, lambda i: (0,) * a.ndim)

    kernel = partial(slot_attention_kernel, iters=iters, eps=eps, scale=scale)

    return pl.pallas_call(
        kernel,
        out_shape=jax.ShapeDtypeStruct((b, s, d), inputs.dtype),
        grid_spec=pltpu.PrefetchScalarGridSpec(
            num_scalar_prefetch=0,
            grid=(grid,),
            in_specs=[
                pl.BlockSpec((batch_tile, n, d), lambda i: (i, 0, 0)),  # inputs
                pl.BlockSpec((batch_tile, s, d), lambda i: (i, 0, 0)),  # init slots
                wspec(aux),
            ] + [wspec(w) for w in weights],
            out_specs=pl.BlockSpec((batch_tile, s, d), lambda i: (i, 0, 0)),
        ),
        compiler_params=pltpu.CompilerParams(dimension_semantics=("parallel",)),
    )(inputs, slots_init, aux, *weights)


def init_params(key, dim, hidden_dim):
    hidden = max(dim, hidden_dim)
    ks = jax.random.split(key, 6)

    def linear(k, fan_in, fan_out):
        kw, kb = jax.random.split(k)
        bound = 1.0 / float(fan_in) ** 0.5
        w = jax.random.uniform(kw, (fan_out, fan_in), jnp.float32, -bound, bound)
        bvec = jax.random.uniform(kb, (fan_out,), jnp.float32, -bound, bound)
        return w, bvec

    wq, bq = linear(ks[0], dim, dim)
    wk, bk = linear(ks[1], dim, dim)
    wv, bv = linear(ks[2], dim, dim)

    # nn.GRUCell(dim, dim): weight_ih/hh (3*dim, dim), rows ordered [r; z; n]
    kih, khh, kbih, kbhh = jax.random.split(ks[3], 4)
    bound = 1.0 / float(dim) ** 0.5
    w_ih = jax.random.uniform(kih, (3 * dim, dim), jnp.float32, -bound, bound)
    w_hh = jax.random.uniform(khh, (3 * dim, dim), jnp.float32, -bound, bound)
    b_ih = jax.random.uniform(kbih, (3 * dim,), jnp.float32, -bound, bound)
    b_hh = jax.random.uniform(kbhh, (3 * dim,), jnp.float32, -bound, bound)

    w1, b1 = linear(ks[4], dim, hidden)
    w2, b2 = linear(ks[5], hidden, dim)

    def t(w):          # (out, in) -> (in, out) for in-kernel x @ W
        return jnp.transpose(w)

    one = jnp.ones((dim,), jnp.float32)
    zero = jnp.zeros((dim,), jnp.float32)

    return {
        # LayerNorm params: rows = [in_g, in_b, slot_g, slot_b, mlp_g, mlp_b]
        "ln": jnp.stack([one, zero, one, zero, one, zero]),
        # fused K | V projection
        "w_kv": jnp.concatenate([t(wk), t(wv)], axis=1),
        "b_kv": jnp.concatenate([bk, bv]),
        "w_q": t(wq), "b_q": bq,
        # fused GRU weights, gate column order r | z | n (PyTorch layout)
        "w_ih": t(w_ih), "b_ih": b_ih,
        "w_hh": t(w_hh), "b_hh": b_hh,
        "w1": t(w1), "b1": b1,
        "w2": t(w2), "b2": b2,
    }


if __name__ == "__main__":
    B, N, D = 8, 16, 32          # batch, num input tokens, slot/feature dim
    NUM_SLOTS, ITERS, HIDDEN = 4, 3, 128

    key = jax.random.PRNGKey(0)
    k_in, k_noise, k_mu, k_sig, k_param = jax.random.split(key, 5)

    inputs = jax.random.normal(k_in, (B, N, D), dtype=jnp.float32)

    # slots = torch.normal(mu.expand(b, n_s, -1), sigma.expand(b, n_s, -1))
    # (sampled host-side with jax.random, matching the module's stochastic init)
    slots_mu = jax.random.normal(k_mu, (1, 1, D), dtype=jnp.float32)
    slots_sigma = jnp.abs(jax.random.normal(k_sig, (1, 1, D), dtype=jnp.float32))
    noise = jax.random.normal(k_noise, (B, NUM_SLOTS, D), dtype=jnp.float32)
    slots_init = slots_mu + slots_sigma * noise

    params = init_params(k_param, D, HIDDEN)

    out = slot_attention(inputs, slots_init, params, iters=ITERS, eps=1e-8)
    out = jax.block_until_ready(out)
    assert out.shape == (B, NUM_SLOTS, D) and out.dtype == jnp.float32
    assert bool(jnp.all(jnp.isfinite(out)))
    print("KERNEL_OK")
</pallas_src>

<mosaic_0001>
module attributes {stable_mosaic.version = 11 : i64} {
  func.func @slot_attention_kernel(%arg0: i32, %arg1: memref<4x16x32xf32, #tpu.memory_space<vmem>>, %arg2: memref<4x4x32xf32, #tpu.memory_space<vmem>>, %arg3: memref<12x128xf32, #tpu.memory_space<vmem>>, %arg4: memref<32x64xf32, #tpu.memory_space<vmem>>, %arg5: memref<32x32xf32, #tpu.memory_space<vmem>>, %arg6: memref<32x96xf32, #tpu.memory_space<vmem>>, %arg7: memref<32x96xf32, #tpu.memory_space<vmem>>, %arg8: memref<32x128xf32, #tpu.memory_space<vmem>>, %arg9: memref<128x32xf32, #tpu.memory_space<vmem>>, %arg10: memref<4x4x32xf32, #tpu.memory_space<vmem>>) attributes {dimension_semantics = [#tpu.dimension_semantics<parallel>], iteration_bounds = array<i64: 2>, scalar_prefetch = 0 : i64, scratch_operands = 0 : i64, tpu.core_type = #tpu.core_type<tc>, window_params = [{transform_indices = @transform_0, window_bounds = array<i64: 4, 16, 32>}, {transform_indices = @transform_1, window_bounds = array<i64: 4, 4, 32>}, {pipeline_mode = #tpu.pipeline_mode<synchronous>, transform_indices = @transform_2, window_bounds = array<i64: 12, 128>}, {pipeline_mode = #tpu.pipeline_mode<synchronous>, transform_indices = @transform_3, window_bounds = array<i64: 32, 64>}, {pipeline_mode = #tpu.pipeline_mode<synchronous>, transform_indices = @transform_4, window_bounds = array<i64: 32, 32>}, {pipeline_mode = #tpu.pipeline_mode<synchronous>, transform_indices = @transform_5, window_bounds = array<i64: 32, 96>}, {pipeline_mode = #tpu.pipeline_mode<synchronous>, transform_indices = @transform_6, window_bounds = array<i64: 32, 96>}, {pipeline_mode = #tpu.pipeline_mode<synchronous>, transform_indices = @transform_7, window_bounds = array<i64: 32, 128>}, {pipeline_mode = #tpu.pipeline_mode<synchronous>, transform_indices = @transform_8, window_bounds = array<i64: 128, 32>}, {transform_indices = @transform_9, window_bounds = array<i64: 4, 4, 32>}]} {
    %c0 = arith.constant 0 : index
    %c0_0 = arith.constant 0 : index
    %0 = vector.load %arg3[%c0, %c0_0] : memref<12x128xf32, #tpu.memory_space<vmem>>, vector<12x128xf32>
    %1 = vector.extract_strided_slice %0 {offsets = [0, 0], sizes = [1, 32], strides = [1, 1]} : vector<12x128xf32> to vector<1x32xf32>
    %2 = vector.extract_strided_slice %0 {offsets = [1, 0], sizes = [1, 32], strides = [1, 1]} : vector<12x128xf32> to vector<1x32xf32>
    %3 = vector.extract_strided_slice %0 {offsets = [6, 0], sizes = [1, 64], strides = [1, 1]} : vector<12x128xf32> to vector<1x64xf32>
    %4 = vector.extract_strided_slice %0 {offsets = [2, 0], sizes = [1, 32], strides = [1, 1]} : vector<12x128xf32> to vector<1x32xf32>
    %5 = vector.shape_cast %4 : vector<1x32xf32> to vector<1x32xf32>
    %6 = vector.broadcast %5 : vector<1x32xf32> to vector<16x32xf32>
    %7 = vector.extract_strided_slice %0 {offsets = [3, 0], sizes = [1, 32], strides = [1, 1]} : vector<12x128xf32> to vector<1x32xf32>
    %8 = vector.shape_cast %7 : vector<1x32xf32> to vector<1x32xf32>
    %9 = vector.broadcast %8 : vector<1x32xf32> to vector<16x32xf32>
    %10 = vector.extract_strided_slice %0 {offsets = [4, 0], sizes = [1, 32], strides = [1, 1]} : vector<12x128xf32> to vector<1x32xf32>
    %11 = vector.shape_cast %10 : vector<1x32xf32> to vector<1x32xf32>
    %12 = vector.broadcast %11 : vector<1x32xf32> to vector<16x32xf32>
    %13 = vector.extract_strided_slice %0 {offsets = [5, 0], sizes = [1, 32], strides = [1, 1]} : vector<12x128xf32> to vector<1x32xf32>
    %14 = vector.shape_cast %13 : vector<1x32xf32> to vector<1x32xf32>
    %15 = vector.broadcast %14 : vector<1x32xf32> to vector<16x32xf32>
    %16 = vector.extract_strided_slice %0 {offsets = [7, 0], sizes = [1, 32], strides = [1, 1]} : vector<12x128xf32> to vector<1x32xf32>
    %17 = vector.shape_cast %16 : vector<1x32xf32> to vector<1x32xf32>
    %18 = vector.broadcast %17 : vector<1x32xf32> to vector<16x32xf32>
    %19 = vector.extract_strided_slice %0 {offsets = [8, 0], sizes = [1, 96], strides = [1, 1]} : vector<12x128xf32> to vector<1x96xf32>
    %20 = vector.shape_cast %19 : vector<1x96xf32> to vector<1x96xf32>
    %21 = vector.broadcast %20 : vector<1x96xf32> to vector<16x96xf32>
    %22 = vector.extract_strided_slice %0 {offsets = [9, 0], sizes = [1, 96], strides = [1, 1]} : vector<12x128xf32> to vector<1x96xf32>
    %23 = vector.shape_cast %22 : vector<1x96xf32> to vector<1x96xf32>
    %24 = vector.broadcast %23 : vector<1x96xf32> to vector<16x96xf32>
    %25 = vector.extract_strided_slice %0 {offsets = [10, 0], sizes = [1, 128], strides = [1, 1]} : vector<12x128xf32> to vector<1x128xf32>
    %26 = vector.shape_cast %25 : vector<1x128xf32> to vector<1x128xf32>
    %27 = vector.broadcast %26 : vector<1x128xf32> to vector<16x128xf32>
    %28 = vector.extract_strided_slice %0 {offsets = [11, 0], sizes = [1, 32], strides = [1, 1]} : vector<12x128xf32> to vector<1x32xf32>
    %29 = vector.shape_cast %28 : vector<1x32xf32> to vector<1x32xf32>
    %30 = vector.broadcast %29 : vector<1x32xf32> to vector<16x32xf32>
    %c0_1 = arith.constant 0 : index
    %c0_2 = arith.constant 0 : index
    %c0_3 = arith.constant 0 : index
    %31 = vector.load %arg1[%c0_1, %c0_2, %c0_3] : memref<4x16x32xf32, #tpu.memory_space<vmem>>, vector<4x16x32xf32>
    %32 = vector.shape_cast %31 : vector<4x16x32xf32> to vector<64x32xf32>
    %cst = arith.constant dense<0.000000e+00> : vector<64xf32>
    %33 = vector.multi_reduction <add>, %32, %cst [1] : vector<64x32xf32> to vector<64xf32>
    %34 = vector.shape_cast %33 : vector<64xf32> to vector<64x1xf32>
    %cst_4 = arith.constant 3.200000e+01 : f32
    %35 = vector.broadcast %cst_4 : f32 to vector<64x1xf32>
    %36 = arith.divf %34, %35 : vector<64x1xf32>
    %37 = vector.broadcast %36 : vector<64x1xf32> to vector<64x32xf32>
    %38 = arith.subf %32, %37 : vector<64x32xf32>
    %39 = arith.mulf %38, %38 : vector<64x32xf32>
    %cst_5 = arith.constant dense<0.000000e+00> : vector<64xf32>
    %40 = vector.multi_reduction <add>, %39, %cst_5 [1] : vector<64x32xf32> to vector<64xf32>
    %41 = vector.shape_cast %40 : vector<64xf32> to vector<64x1xf32>
    %cst_6 = arith.constant 3.200000e+01 : f32
    %42 = vector.broadcast %cst_6 : f32 to vector<64x1xf32>
    %43 = arith.divf %41, %42 : vector<64x1xf32>
    %cst_7 = arith.constant 9.99999974E-6 : f32
    %44 = vector.broadcast %cst_7 : f32 to vector<64x1xf32>
    %45 = arith.addf %43, %44 : vector<64x1xf32>
    %46 = math.rsqrt %45 : vector<64x1xf32>
    %47 = vector.broadcast %46 : vector<64x1xf32> to vector<64x32xf32>
    %48 = arith.mulf %38, %47 : vector<64x32xf32>
    %49 = vector.broadcast %1 : vector<1x32xf32> to vector<64x32xf32>
    %50 = arith.mulf %48, %49 : vector<64x32xf32>
    %51 = vector.broadcast %2 : vector<1x32xf32> to vector<64x32xf32>
    %52 = arith.addf %50, %51 : vector<64x32xf32>
    %c0_8 = arith.constant 0 : index
    %c0_9 = arith.constant 0 : index
    %53 = vector.load %arg4[%c0_8, %c0_9] : memref<32x64xf32, #tpu.memory_space<vmem>>, vector<32x64xf32>
    %cst_10 = arith.constant dense<0.000000e+00> : vector<64x64xf32>
    %54 = tpu.matmul %52, %53, %cst_10 {dimension_numbers = #tpu.dot_dimension_numbers<[1], [0], [0], [1], [0, 0, 1, 1], [], []>} : vector<64x32xf32>, vector<32x64xf32>, vector<64x64xf32> -> vector<64x64xf32>
    %55 = vector.broadcast %3 : vector<1x64xf32> to vector<64x64xf32>
    %56 = arith.addf %54, %55 : vector<64x64xf32>
    %57 = vector.extract_strided_slice %56 {offsets = [0, 0], sizes = [64, 32], strides = [1, 1]} : vector<64x64xf32> to vector<64x32xf32>
    %58 = vector.shape_cast %57 : vector<64x32xf32> to vector<4x16x32xf32>
    %59 = vector.extract_strided_slice %56 {offsets = [0, 32], sizes = [64, 32], strides = [1, 1]} : vector<64x64xf32> to vector<64x32xf32>
    %60 = vector.shape_cast %59 : vector<64x32xf32> to vector<4x16x32xf32>
    %c0_11 = arith.constant 0 : index
    %c0_12 = arith.constant 0 : index
    %c0_13 = arith.constant 0 : index
    %61 = vector.load %arg2[%c0_11, %c0_12, %c0_13] : memref<4x4x32xf32, #tpu.memory_space<vmem>>, vector<4x4x32xf32>
    %62 = vector.shape_cast %61 : vector<4x4x32xf32> to vector<16x32xf32>
    %cst_14 = arith.constant dense<0.000000e+00> : vector<16xf32>
    %63 = vector.multi_reduction <add>, %62, %cst_14 [1] : vector<16x32xf32> to vector<16xf32>
    %64 = vector.shape_cast %63 : vector<16xf32> to vector<16x1xf32>
    %cst_15 = arith.constant 3.200000e+01 : f32
    %65 = vector.broadcast %cst_15 : f32 to vector<16x1xf32>
    %66 = arith.divf %64, %65 : vector<16x1xf32>
    %67 = vector.broadcast %66 : vector<16x1xf32> to vector<16x32xf32>
    %68 = arith.subf %62, %67 : vector<16x32xf32>
    %69 = arith.mulf %68, %68 : vector<16x32xf32>
    %cst_16 = arith.constant dense<0.000000e+00> : vector<16xf32>
    %70 = vector.multi_reduction <add>, %69, %cst_16 [1] : vector<16x32xf32> to vector<16xf32>
    %71 = vector.shape_cast %70 : vector<16xf32> to vector<16x1xf32>
    %cst_17 = arith.constant 3.200000e+01 : f32
    %72 = vector.broadcast %cst_17 : f32 to vector<16x1xf32>
    %73 = arith.divf %71, %72 : vector<16x1xf32>
    %cst_18 = arith.constant 9.99999974E-6 : f32
    %74 = vector.broadcast %cst_18 : f32 to vector<16x1xf32>
    %75 = arith.addf %73, %74 : vector<16x1xf32>
    %76 = math.rsqrt %75 : vector<16x1xf32>
    %77 = vector.broadcast %76 : vector<16x1xf32> to vector<16x32xf32>
    %78 = arith.mulf %68, %77 : vector<16x32xf32>
    %79 = arith.mulf %78, %6 : vector<16x32xf32>
    %80 = arith.addf %79, %9 : vector<16x32xf32>
    %c0_19 = arith.constant 0 : index
    %c0_20 = arith.constant 0 : index
    %81 = vector.load %arg5[%c0_19, %c0_20] : memref<32x32xf32, #tpu.memory_space<vmem>>, vector<32x32xf32>
    %cst_21 = arith.constant dense<0.000000e+00> : vector<16x32xf32>
    %82 = tpu.matmul %80, %81, %cst_21 {dimension_numbers = #tpu.dot_dimension_numbers<[1], [0], [0], [1], [0, 0, 1, 1], [], []>} : vector<16x32xf32>, vector<32x32xf32>, vector<16x32xf32> -> vector<16x32xf32>
    %83 = arith.addf %82, %18 : vector<16x32xf32>
    %84 = vector.shape_cast %83 : vector<16x32xf32> to vector<4x4x32xf32>
    "tpu.trace_start"() <{level = 10 : i32, message = "bid,bjd->bij"}> : () -> ()
    %cst_22 = arith.constant dense<0.000000e+00> : vector<4x4x16xf32>
    %85 = tpu.matmul %84, %58, %cst_22 {dimension_numbers = #tpu.dot_dimension_numbers<[2], [2], [1], [1], [0, 0, 0, 1, 1, 1], [0], [0]>} : vector<4x4x32xf32>, vector<4x16x32xf32>, vector<4x4x16xf32> -> vector<4x4x16xf32>
    "tpu.trace_stop"() : () -> ()
    %cst_23 = arith.constant 0.176776692 : f32
    %86 = vector.broadcast %cst_23 : f32 to vector<4x4x16xf32>
    %87 = arith.mulf %85, %86 : vector<4x4x16xf32>
    %cst_24 = arith.constant dense<0xFF800000> : vector<4x16xf32>
    %88 = vector.multi_reduction <maximumf>, %87, %cst_24 [1] : vector<4x4x16xf32> to vector<4x16xf32>
    %89 = vector.shape_cast %88 : vector<4x16xf32> to vector<4x1x16xf32>
    %90 = vector.broadcast %89 : vector<4x1x16xf32> to vector<4x4x16xf32>
    %91 = arith.subf %87, %90 : vector<4x4x16xf32>
    %92 = math.exp %91 : vector<4x4x16xf32>
    %cst_25 = arith.constant dense<0.000000e+00> : vector<4x16xf32>
    %93 = vector.multi_reduction <add>, %92, %cst_25 [1] : vector<4x4x16xf32> to vector<4x16xf32>
    %94 = vector.shape_cast %93 : vector<4x16xf32> to vector<4x1x16xf32>
    %95 = tpu.reciprocal %94 {approx = true} : vector<4x1x16xf32> -> vector<4x1x16xf32>
    %96 = vector.broadcast %95 : vector<4x1x16xf32> to vector<4x4x16xf32>
    %97 = arith.mulf %92, %96 : vector<4x4x16xf32>
    %cst_26 = arith.constant 9.99999993E-9 : f32
    %98 = vector.broadcast %cst_26 : f32 to vector<4x4x16xf32>
    %99 = arith.addf %97, %98 : vector<4x4x16xf32>
    %cst_27 = arith.constant dense<0.000000e+00> : vector<4x4xf32>
    %100 = vector.multi_reduction <add>, %99, %cst_27 [2] : vector<4x4x16xf32> to vector<4x4xf32>
    %101 = vector.shape_cast %100 : vector<4x4xf32> to vector<4x4x1xf32>
    %102 = tpu.reciprocal %101 {approx = true} : vector<4x4x1xf32> -> vector<4x4x1xf32>
    %103 = vector.broadcast %102 : vector<4x4x1xf32> to vector<4x4x16xf32>
    %104 = arith.mulf %99, %103 : vector<4x4x16xf32>
    "tpu.trace_start"() <{level = 10 : i32, message = "bij,bjd->bid"}> : () -> ()
    %cst_28 = arith.constant dense<0.000000e+00> : vector<4x4x32xf32>
    %105 = tpu.matmul %104, %60, %cst_28 {dimension_numbers = #tpu.dot_dimension_numbers<[2], [1], [1], [2], [0, 0, 0, 1, 1, 2], [0], [0]>} : vector<4x4x16xf32>, vector<4x16x32xf32>, vector<4x4x32xf32> -> vector<4x4x32xf32>
    "tpu.trace_stop"() : () -> ()
    %106 = vector.shape_cast %105 : vector<4x4x32xf32> to vector<16x32xf32>
    %c0_29 = arith.constant 0 : index
    %c0_30 = arith.constant 0 : index
    %107 = vector.load %arg6[%c0_29, %c0_30] : memref<32x96xf32, #tpu.memory_space<vmem>>, vector<32x96xf32>
    %cst_31 = arith.constant dense<0.000000e+00> : vector<16x96xf32>
    %108 = tpu.matmul %106, %107, %cst_31 {dimension_numbers = #tpu.dot_dimension_numbers<[1], [0], [0], [1], [0, 0, 1, 1], [], []>} : vector<16x32xf32>, vector<32x96xf32>, vector<16x96xf32> -> vector<16x96xf32>
    %109 = arith.addf %108, %21 : vector<16x96xf32>
    %c0_32 = arith.constant 0 : index
    %c0_33 = arith.constant 0 : index
    %110 = vector.load %arg7[%c0_32, %c0_33] : memref<32x96xf32, #tpu.memory_space<vmem>>, vector<32x96xf32>
    %cst_34 = arith.constant dense<0.000000e+00> : vector<16x96xf32>
    %111 = tpu.matmul %62, %110, %cst_34 {dimension_numbers = #tpu.dot_dimension_numbers<[1], [0], [0], [1], [0, 0, 1, 1], [], []>} : vector<16x32xf32>, vector<32x96xf32>, vector<16x96xf32> -> vector<16x96xf32>
    %112 = arith.addf %111, %24 : vector<16x96xf32>
    %113 = vector.extract_strided_slice %109 {offsets = [0, 0], sizes = [16, 32], strides = [1, 1]} : vector<16x96xf32> to vector<16x32xf32>
    %114 = vector.extract_strided_slice %112 {offsets = [0, 0], sizes = [16, 32], strides = [1, 1]} : vector<16x96xf32> to vector<16x32xf32>
    %115 = arith.addf %113, %114 : vector<16x32xf32>
    %116 = arith.negf %115 : vector<16x32xf32>
    %117 = math.exp %116 : vector<16x32xf32>
    %cst_35 = arith.constant 1.000000e+00 : f32
    %118 = vector.broadcast %cst_35 : f32 to vector<16x32xf32>
    %119 = arith.addf %118, %117 : vector<16x32xf32>
    %120 = arith.divf %118, %119 : vector<16x32xf32>
    %121 = vector.extract_strided_slice %109 {offsets = [0, 32], sizes = [16, 32], strides = [1, 1]} : vector<16x96xf32> to vector<16x32xf32>
    %122 = vector.extract_strided_slice %112 {offsets = [0, 32], sizes = [16, 32], strides = [1, 1]} : vector<16x96xf32> to vector<16x32xf32>
    %123 = arith.addf %121, %122 : vector<16x32xf32>
    %124 = arith.negf %123 : vector<16x32xf32>
    %125 = math.exp %124 : vector<16x32xf32>
    %cst_36 = arith.constant 1.000000e+00 : f32
    %126 = vector.broadcast %cst_36 : f32 to vector<16x32xf32>
    %127 = arith.addf %126, %125 : vector<16x32xf32>
    %128 = arith.divf %126, %127 : vector<16x32xf32>
    %129 = vector.extract_strided_slice %109 {offsets = [0, 64], sizes = [16, 32], strides = [1, 1]} : vector<16x96xf32> to vector<16x32xf32>
    %130 = vector.extract_strided_slice %112 {offsets = [0, 64], sizes = [16, 32], strides = [1, 1]} : vector<16x96xf32> to vector<16x32xf32>
    %131 = arith.mulf %120, %130 : vector<16x32xf32>
    %132 = arith.addf %129, %131 : vector<16x32xf32>
    %133 = math.tanh %132 : vector<16x32xf32>
    %cst_37 = arith.constant 1.000000e+00 : f32
    %134 = vector.broadcast %cst_37 : f32 to vector<16x32xf32>
    %135 = arith.subf %134, %128 : vector<16x32xf32>
    %136 = arith.mulf %135, %133 : vector<16x32xf32>
    %137 = arith.mulf %128, %62 : vector<16x32xf32>
    %138 = arith.addf %136, %137 : vector<16x32xf32>
    %cst_38 = arith.constant dense<0.000000e+00> : vector<16xf32>
    %139 = vector.multi_reduction <add>, %138, %cst_38 [1] : vector<16x32xf32> to vector<16xf32>
    %140 = vector.shape_cast %139 : vector<16xf32> to vector<16x1xf32>
    %cst_39 = arith.constant 3.200000e+01 : f32
    %141 = vector.broadcast %cst_39 : f32 to vector<16x1xf32>
    %142 = arith.divf %140, %141 : vector<16x1xf32>
    %143 = vector.broadcast %142 : vector<16x1xf32> to vector<16x32xf32>
    %144 = arith.subf %138, %143 : vector<16x32xf32>
    %145 = arith.mulf %144, %144 : vector<16x32xf32>
    %cst_40 = arith.constant dense<0.000000e+00> : vector<16xf32>
    %146 = vector.multi_reduction <add>, %145, %cst_40 [1] : vector<16x32xf32> to vector<16xf32>
    %147 = vector.shape_cast %146 : vector<16xf32> to vector<16x1xf32>
    %cst_41 = arith.constant 3.200000e+01 : f32
    %148 = vector.broadcast %cst_41 : f32 to vector<16x1xf32>
    %149 = arith.divf %147, %148 : vector<16x1xf32>
    %cst_42 = arith.constant 9.99999974E-6 : f32
    %150 = vector.broadcast %cst_42 : f32 to vector<16x1xf32>
    %151 = arith.addf %149, %150 : vector<16x1xf32>
    %152 = math.rsqrt %151 : vector<16x1xf32>
    %153 = vector.broadcast %152 : vector<16x1xf32> to vector<16x32xf32>
    %154 = arith.mulf %144, %153 : vector<16x32xf32>
    %155 = arith.mulf %154, %12 : vector<16x32xf32>
    %156 = arith.addf %155, %15 : vector<16x32xf32>
    %c0_43 = arith.constant 0 : index
    %c0_44 = arith.constant 0 : index
    %157 = vector.load %arg8[%c0_43, %c0_44] : memref<32x128xf32, #tpu.memory_space<vmem>>, vector<32x128xf32>
    %cst_45 = arith.constant dense<0.000000e+00> : vector<16x128xf32>
    %158 = tpu.matmul %156, %157, %cst_45 {dimension_numbers = #tpu.dot_dimension_numbers<[1], [0], [0], [1], [0, 0, 1, 1], [], []>} : vector<16x32xf32>, vector<32x128xf32>, vector<16x128xf32> -> vector<16x128xf32>
    %159 = arith.addf %158, %27 : vector<16x128xf32>
    %cst_46 = arith.constant 0.000000e+00 : f32
    %160 = vector.broadcast %cst_46 : f32 to vector<16x128xf32>
    %161 = arith.maximumf %159, %160 : vector<16x128xf32>
    %c0_47 = arith.constant 0 : index
    %c0_48 = arith.constant 0 : index
    %162 = vector.load %arg9[%c0_47, %c0_48] : memref<128x32xf32, #tpu.memory_space<vmem>>, vector<128x32xf32>
    %cst_49 = arith.constant dense<0.000000e+00> : vector<16x32xf32>
    %163 = tpu.matmul %161, %162, %cst_49 {dimension_numbers = #tpu.dot_dimension_numbers<[1], [0], [0], [1], [0, 0, 1, 1], [], []>} : vector<16x128xf32>, vector<128x32xf32>, vector<16x32xf32> -> vector<16x32xf32>
    %164 = arith.addf %138, %163 : vector<16x32xf32>
    %165 = arith.addf %164, %30 : vector<16x32xf32>
    %cst_50 = arith.constant dense<0.000000e+00> : vector<16xf32>
    %166 = vector.multi_reduction <add>, %165, %cst_50 [1] : vector<16x32xf32> to vector<16xf32>
    %167 = vector.shape_cast %166 : vector<16xf32> to vector<16x1xf32>
    %cst_51 = arith.constant 3.200000e+01 : f32
    %168 = vector.broadcast %cst_51 : f32 to vector<16x1xf32>
    %169 = arith.divf %167, %168 : vector<16x1xf32>
    %170 = vector.broadcast %169 : vector<16x1xf32> to vector<16x32xf32>
    %171 = arith.subf %165, %170 : vector<16x32xf32>
    %172 = arith.mulf %171, %171 : vector<16x32xf32>
    %cst_52 = arith.constant dense<0.000000e+00> : vector<16xf32>
    %173 = vector.multi_reduction <add>, %172, %cst_52 [1] : vector<16x32xf32> to vector<16xf32>
    %174 = vector.shape_cast %173 : vector<16xf32> to vector<16x1xf32>
    %cst_53 = arith.constant 3.200000e+01 : f32
    %175 = vector.broadcast %cst_53 : f32 to vector<16x1xf32>
    %176 = arith.divf %174, %175 : vector<16x1xf32>
    %cst_54 = arith.constant 9.99999974E-6 : f32
    %177 = vector.broadcast %cst_54 : f32 to vector<16x1xf32>
    %178 = arith.addf %176, %177 : vector<16x1xf32>
    %179 = math.rsqrt %178 : vector<16x1xf32>
    %180 = vector.broadcast %179 : vector<16x1xf32> to vector<16x32xf32>
    %181 = arith.mulf %171, %180 : vector<16x32xf32>
    %182 = arith.mulf %181, %6 : vector<16x32xf32>
    %183 = arith.addf %182, %9 : vector<16x32xf32>
    %c0_55 = arith.constant 0 : index
    %c0_56 = arith.constant 0 : index
    %184 = vector.load %arg5[%c0_55, %c0_56] : memref<32x32xf32, #tpu.memory_space<vmem>>, vector<32x32xf32>
    %cst_57 = arith.constant dense<0.000000e+00> : vector<16x32xf32>
    %185 = tpu.matmul %183, %184, %cst_57 {dimension_numbers = #tpu.dot_dimension_numbers<[1], [0], [0], [1], [0, 0, 1, 1], [], []>} : vector<16x32xf32>, vector<32x32xf32>, vector<16x32xf32> -> vector<16x32xf32>
    %186 = arith.addf %185, %18 : vector<16x32xf32>
    %187 = vector.shape_cast %186 : vector<16x32xf32> to vector<4x4x32xf32>
    "tpu.trace_start"() <{level = 10 : i32, message = "bid,bjd->bij"}> : () -> ()
    %cst_58 = arith.constant dense<0.000000e+00> : vector<4x4x16xf32>
    %188 = tpu.matmul %187, %58, %cst_58 {dimension_numbers = #tpu.dot_dimension_numbers<[2], [2], [1], [1], [0, 0, 0, 1, 1, 1], [0], [0]>} : vector<4x4x32xf32>, vector<4x16x32xf32>, vector<4x4x16xf32> -> vector<4x4x16xf32>
    "tpu.trace_stop"() : () -> ()
    %cst_59 = arith.constant 0.176776692 : f32
    %189 = vector.broadcast %cst_59 : f32 to vector<4x4x16xf32>
    %190 = arith.mulf %188, %189 : vector<4x4x16xf32>
    %cst_60 = arith.constant dense<0xFF800000> : vector<4x16xf32>
    %191 = vector.multi_reduction <maximumf>, %190, %cst_60 [1] : vector<4x4x16xf32> to vector<4x16xf32>
    %192 = vector.shape_cast %191 : vector<4x16xf32> to vector<4x1x16xf32>
    %193 = vector.broadcast %192 : vector<4x1x16xf32> to vector<4x4x16xf32>
    %194 = arith.subf %190, %193 : vector<4x4x16xf32>
    %195 = math.exp %194 : vector<4x4x16xf32>
    %cst_61 = arith.constant dense<0.000000e+00> : vector<4x16xf32>
    %196 = vector.multi_reduction <add>, %195, %cst_61 [1] : vector<4x4x16xf32> to vector<4x16xf32>
    %197 = vector.shape_cast %196 : vector<4x16xf32> to vector<4x1x16xf32>
    %198 = tpu.reciprocal %197 {approx = true} : vector<4x1x16xf32> -> vector<4x1x16xf32>
    %199 = vector.broadcast %198 : vector<4x1x16xf32> to vector<4x4x16xf32>
    %200 = arith.mulf %195, %199 : vector<4x4x16xf32>
    %cst_62 = arith.constant 9.99999993E-9 : f32
    %201 = vector.broadcast %cst_62 : f32 to vector<4x4x16xf32>
    %202 = arith.addf %200, %201 : vector<4x4x16xf32>
    %cst_63 = arith.constant dense<0.000000e+00> : vector<4x4xf32>
    %203 = vector.multi_reduction <add>, %202, %cst_63 [2] : vector<4x4x16xf32> to vector<4x4xf32>
    %204 = vector.shape_cast %203 : vector<4x4xf32> to vector<4x4x1xf32>
    %205 = tpu.reciprocal %204 {approx = true} : vector<4x4x1xf32> -> vector<4x4x1xf32>
    %206 = vector.broadcast %205 : vector<4x4x1xf32> to vector<4x4x16xf32>
    %207 = arith.mulf %202, %206 : vector<4x4x16xf32>
    "tpu.trace_start"() <{level = 10 : i32, message = "bij,bjd->bid"}> : () -> ()
    %cst_64 = arith.constant dense<0.000000e+00> : vector<4x4x32xf32>
    %208 = tpu.matmul %207, %60, %cst_64 {dimension_numbers = #tpu.dot_dimension_numbers<[2], [1], [1], [2], [0, 0, 0, 1, 1, 2], [0], [0]>} : vector<4x4x16xf32>, vector<4x16x32xf32>, vector<4x4x32xf32> -> vector<4x4x32xf32>
    "tpu.trace_stop"() : () -> ()
    %209 = vector.shape_cast %208 : vector<4x4x32xf32> to vector<16x32xf32>
    %c0_65 = arith.constant 0 : index
    %c0_66 = arith.constant 0 : index
    %210 = vector.load %arg6[%c0_65, %c0_66] : memref<32x96xf32, #tpu.memory_space<vmem>>, vector<32x96xf32>
    %cst_67 = arith.constant dense<0.000000e+00> : vector<16x96xf32>
    %211 = tpu.matmul %209, %210, %cst_67 {dimension_numbers = #tpu.dot_dimension_numbers<[1], [0], [0], [1], [0, 0, 1, 1], [], []>} : vector<16x32xf32>, vector<32x96xf32>, vector<16x96xf32> -> vector<16x96xf32>
    %212 = arith.addf %211, %21 : vector<16x96xf32>
    %c0_68 = arith.constant 0 : index
    %c0_69 = arith.constant 0 : index
    %213 = vector.load %arg7[%c0_68, %c0_69] : memref<32x96xf32, #tpu.memory_space<vmem>>, vector<32x96xf32>
    %cst_70 = arith.constant dense<0.000000e+00> : vector<16x96xf32>
    %214 = tpu.matmul %165, %213, %cst_70 {dimension_numbers = #tpu.dot_dimension_numbers<[1], [0], [0], [1], [0, 0, 1, 1], [], []>} : vector<16x32xf32>, vector<32x96xf32>, vector<16x96xf32> -> vector<16x96xf32>
    %215 = arith.addf %214, %24 : vector<16x96xf32>
    %216 = vector.extract_strided_slice %212 {offsets = [0, 0], sizes = [16, 32], strides = [1, 1]} : vector<16x96xf32> to vector<16x32xf32>
    %217 = vector.extract_strided_slice %215 {offsets = [0, 0], sizes = [16, 32], strides = [1, 1]} : vector<16x96xf32> to vector<16x32xf32>
    %218 = arith.addf %216, %217 : vector<16x32xf32>
    %219 = arith.negf %218 : vector<16x32xf32>
    %220 = math.exp %219 : vector<16x32xf32>
    %cst_71 = arith.constant 1.000000e+00 : f32
    %221 = vector.broadcast %cst_71 : f32 to vector<16x32xf32>
    %222 = arith.addf %221, %220 : vector<16x32xf32>
    %223 = arith.divf %221, %222 : vector<16x32xf32>
    %224 = vector.extract_strided_slice %212 {offsets = [0, 32], sizes = [16, 32], strides = [1, 1]} : vector<16x96xf32> to vector<16x32xf32>
    %225 = vector.extract_strided_slice %215 {offsets = [0, 32], sizes = [16, 32], strides = [1, 1]} : vector<16x96xf32> to vector<16x32xf32>
    %226 = arith.addf %224, %225 : vector<16x32xf32>
    %227 = arith.negf %226 : vector<16x32xf32>
    %228 = math.exp %227 : vector<16x32xf32>
    %cst_72 = arith.constant 1.000000e+00 : f32
    %229 = vector.broadcast %cst_72 : f32 to vector<16x32xf32>
    %230 = arith.addf %229, %228 : vector<16x32xf32>
    %231 = arith.divf %229, %230 : vector<16x32xf32>
    %232 = vector.extract_strided_slice %212 {offsets = [0, 64], sizes = [16, 32], strides = [1, 1]} : vector<16x96xf32> to vector<16x32xf32>
    %233 = vector.extract_strided_slice %215 {offsets = [0, 64], sizes = [16, 32], strides = [1, 1]} : vector<16x96xf32> to vector<16x32xf32>
    %234 = arith.mulf %223, %233 : vector<16x32xf32>
    %235 = arith.addf %232, %234 : vector<16x32xf32>
    %236 = math.tanh %235 : vector<16x32xf32>
    %cst_73 = arith.constant 1.000000e+00 : f32
    %237 = vector.broadcast %cst_73 : f32 to vector<16x32xf32>
    %238 = arith.subf %237, %231 : vector<16x32xf32>
    %239 = arith.mulf %238, %236 : vector<16x32xf32>
    %240 = arith.mulf %231, %165 : vector<16x32xf32>
    %241 = arith.addf %239, %240 : vector<16x32xf32>
    %cst_74 = arith.constant dense<0.000000e+00> : vector<16xf32>
    %242 = vector.multi_reduction <add>, %241, %cst_74 [1] : vector<16x32xf32> to vector<16xf32>
    %243 = vector.shape_cast %242 : vector<16xf32> to vector<16x1xf32>
    %cst_75 = arith.constant 3.200000e+01 : f32
    %244 = vector.broadcast %cst_75 : f32 to vector<16x1xf32>
    %245 = arith.divf %243, %244 : vector<16x1xf32>
    %246 = vector.broadcast %245 : vector<16x1xf32> to vector<16x32xf32>
    %247 = arith.subf %241, %246 : vector<16x32xf32>
    %248 = arith.mulf %247, %247 : vector<16x32xf32>
    %cst_76 = arith.constant dense<0.000000e+00> : vector<16xf32>
    %249 = vector.multi_reduction <add>, %248, %cst_76 [1] : vector<16x32xf32> to vector<16xf32>
    %250 = vector.shape_cast %249 : vector<16xf32> to vector<16x1xf32>
    %cst_77 = arith.constant 3.200000e+01 : f32
    %251 = vector.broadcast %cst_77 : f32 to vector<16x1xf32>
    %252 = arith.divf %250, %251 : vector<16x1xf32>
    %cst_78 = arith.constant 9.99999974E-6 : f32
    %253 = vector.broadcast %cst_78 : f32 to vector<16x1xf32>
    %254 = arith.addf %252, %253 : vector<16x1xf32>
    %255 = math.rsqrt %254 : vector<16x1xf32>
    %256 = vector.broadcast %255 : vector<16x1xf32> to vector<16x32xf32>
    %257 = arith.mulf %247, %256 : vector<16x32xf32>
    %258 = arith.mulf %257, %12 : vector<16x32xf32>
    %259 = arith.addf %258, %15 : vector<16x32xf32>
    %c0_79 = arith.constant 0 : index
    %c0_80 = arith.constant 0 : index
    %260 = vector.load %arg8[%c0_79, %c0_80] : memref<32x128xf32, #tpu.memory_space<vmem>>, vector<32x128xf32>
    %cst_81 = arith.constant dense<0.000000e+00> : vector<16x128xf32>
    %261 = tpu.matmul %259, %260, %cst_81 {dimension_numbers = #tpu.dot_dimension_numbers<[1], [0], [0], [1], [0, 0, 1, 1], [], []>} : vector<16x32xf32>, vector<32x128xf32>, vector<16x128xf32> -> vector<16x128xf32>
    %262 = arith.addf %261, %27 : vector<16x128xf32>
    %cst_82 = arith.constant 0.000000e+00 : f32
    %263 = vector.broadcast %cst_82 : f32 to vector<16x128xf32>
    %264 = arith.maximumf %262, %263 : vector<16x128xf32>
    %c0_83 = arith.constant 0 : index
    %c0_84 = arith.constant 0 : index
    %265 = vector.load %arg9[%c0_83, %c0_84] : memref<128x32xf32, #tpu.memory_space<vmem>>, vector<128x32xf32>
    %cst_85 = arith.constant dense<0.000000e+00> : vector<16x32xf32>
    %266 = tpu.matmul %264, %265, %cst_85 {dimension_numbers = #tpu.dot_dimension_numbers<[1], [0], [0], [1], [0, 0, 1, 1], [], []>} : vector<16x128xf32>, vector<128x32xf32>, vector<16x32xf32> -> vector<16x32xf32>
    %267 = arith.addf %241, %266 : vector<16x32xf32>
    %268 = arith.addf %267, %30 : vector<16x32xf32>
    %cst_86 = arith.constant dense<0.000000e+00> : vector<16xf32>
    %269 = vector.multi_reduction <add>, %268, %cst_86 [1] : vector<16x32xf32> to vector<16xf32>
    %270 = vector.shape_cast %269 : vector<16xf32> to vector<16x1xf32>
    %cst_87 = arith.constant 3.200000e+01 : f32
    %271 = vector.broadcast %cst_87 : f32 to vector<16x1xf32>
    %272 = arith.divf %270, %271 : vector<16x1xf32>
    %273 = vector.broadcast %272 : vector<16x1xf32> to vector<16x32xf32>
    %274 = arith.subf %268, %273 : vector<16x32xf32>
    %275 = arith.mulf %274, %274 : vector<16x32xf32>
    %cst_88 = arith.constant dense<0.000000e+00> : vector<16xf32>
    %276 = vector.multi_reduction <add>, %275, %cst_88 [1] : vector<16x32xf32> to vector<16xf32>
    %277 = vector.shape_cast %276 : vector<16xf32> to vector<16x1xf32>
    %cst_89 = arith.constant 3.200000e+01 : f32
    %278 = vector.broadcast %cst_89 : f32 to vector<16x1xf32>
    %279 = arith.divf %277, %278 : vector<16x1xf32>
    %cst_90 = arith.constant 9.99999974E-6 : f32
    %280 = vector.broadcast %cst_90 : f32 to vector<16x1xf32>
    %281 = arith.addf %279, %280 : vector<16x1xf32>
    %282 = math.rsqrt %281 : vector<16x1xf32>
    %283 = vector.broadcast %282 : vector<16x1xf32> to vector<16x32xf32>
    %284 = arith.mulf %274, %283 : vector<16x32xf32>
    %285 = arith.mulf %284, %6 : vector<16x32xf32>
    %286 = arith.addf %285, %9 : vector<16x32xf32>
    %c0_91 = arith.constant 0 : index
    %c0_92 = arith.constant 0 : index
    %287 = vector.load %arg5[%c0_91, %c0_92] : memref<32x32xf32, #tpu.memory_space<vmem>>, vector<32x32xf32>
    %cst_93 = arith.constant dense<0.000000e+00> : vector<16x32xf32>
    %288 = tpu.matmul %286, %287, %cst_93 {dimension_numbers = #tpu.dot_dimension_numbers<[1], [0], [0], [1], [0, 0, 1, 1], [], []>} : vector<16x32xf32>, vector<32x32xf32>, vector<16x32xf32> -> vector<16x32xf32>
    %289 = arith.addf %288, %18 : vector<16x32xf32>
    %290 = vector.shape_cast %289 : vector<16x32xf32> to vector<4x4x32xf32>
    "tpu.trace_start"() <{level = 10 : i32, message = "bid,bjd->bij"}> : () -> ()
    %cst_94 = arith.constant dense<0.000000e+00> : vector<4x4x16xf32>
    %291 = tpu.matmul %290, %58, %cst_94 {dimension_numbers = #tpu.dot_dimension_numbers<[2], [2], [1], [1], [0, 0, 0, 1, 1, 1], [0], [0]>} : vector<4x4x32xf32>, vector<4x16x32xf32>, vector<4x4x16xf32> -> vector<4x4x16xf32>
    "tpu.trace_stop"() : () -> ()
    %cst_95 = arith.constant 0.176776692 : f32
    %292 = vector.broadcast %cst_95 : f32 to vector<4x4x16xf32>
    %293 = arith.mulf %291, %292 : vector<4x4x16xf32>
    %cst_96 = arith.constant dense<0xFF800000> : vector<4x16xf32>
    %294 = vector.multi_reduction <maximumf>, %293, %cst_96 [1] : vector<4x4x16xf32> to vector<4x16xf32>
    %295 = vector.shape_cast %294 : vector<4x16xf32> to vector<4x1x16xf32>
    %296 = vector.broadcast %295 : vector<4x1x16xf32> to vector<4x4x16xf32>
    %297 = arith.subf %293, %296 : vector<4x4x16xf32>
    %298 = math.exp %297 : vector<4x4x16xf32>
    %cst_97 = arith.constant dense<0.000000e+00> : vector<4x16xf32>
    %299 = vector.multi_reduction <add>, %298, %cst_97 [1] : vector<4x4x16xf32> to vector<4x16xf32>
    %300 = vector.shape_cast %299 : vector<4x16xf32> to vector<4x1x16xf32>
    %301 = tpu.reciprocal %300 {approx = true} : vector<4x1x16xf32> -> vector<4x1x16xf32>
    %302 = vector.broadcast %301 : vector<4x1x16xf32> to vector<4x4x16xf32>
    %303 = arith.mulf %298, %302 : vector<4x4x16xf32>
    %cst_98 = arith.constant 9.99999993E-9 : f32
    %304 = vector.broadcast %cst_98 : f32 to vector<4x4x16xf32>
    %305 = arith.addf %303, %304 : vector<4x4x16xf32>
    %cst_99 = arith.constant dense<0.000000e+00> : vector<4x4xf32>
    %306 = vector.multi_reduction <add>, %305, %cst_99 [2] : vector<4x4x16xf32> to vector<4x4xf32>
    %307 = vector.shape_cast %306 : vector<4x4xf32> to vector<4x4x1xf32>
    %308 = tpu.reciprocal %307 {approx = true} : vector<4x4x1xf32> -> vector<4x4x1xf32>
    %309 = vector.broadcast %308 : vector<4x4x1xf32> to vector<4x4x16xf32>
    %310 = arith.mulf %305, %309 : vector<4x4x16xf32>
    "tpu.trace_start"() <{level = 10 : i32, message = "bij,bjd->bid"}> : () -> ()
    %cst_100 = arith.constant dense<0.000000e+00> : vector<4x4x32xf32>
    %311 = tpu.matmul %310, %60, %cst_100 {dimension_numbers = #tpu.dot_dimension_numbers<[2], [1], [1], [2], [0, 0, 0, 1, 1, 2], [0], [0]>} : vector<4x4x16xf32>, vector<4x16x32xf32>, vector<4x4x32xf32> -> vector<4x4x32xf32>
    "tpu.trace_stop"() : () -> ()
    %312 = vector.shape_cast %311 : vector<4x4x32xf32> to vector<16x32xf32>
    %c0_101 = arith.constant 0 : index
    %c0_102 = arith.constant 0 : index
    %313 = vector.load %arg6[%c0_101, %c0_102] : memref<32x96xf32, #tpu.memory_space<vmem>>, vector<32x96xf32>
    %cst_103 = arith.constant dense<0.000000e+00> : vector<16x96xf32>
    %314 = tpu.matmul %312, %313, %cst_103 {dimension_numbers = #tpu.dot_dimension_numbers<[1], [0], [0], [1], [0, 0, 1, 1], [], []>} : vector<16x32xf32>, vector<32x96xf32>, vector<16x96xf32> -> vector<16x96xf32>
    %315 = arith.addf %314, %21 : vector<16x96xf32>
    %c0_104 = arith.constant 0 : index
    %c0_105 = arith.constant 0 : index
    %316 = vector.load %arg7[%c0_104, %c0_105] : memref<32x96xf32, #tpu.memory_space<vmem>>, vector<32x96xf32>
    %cst_106 = arith.constant dense<0.000000e+00> : vector<16x96xf32>
    %317 = tpu.matmul %268, %316, %cst_106 {dimension_numbers = #tpu.dot_dimension_numbers<[1], [0], [0], [1], [0, 0, 1, 1], [], []>} : vector<16x32xf32>, vector<32x96xf32>, vector<16x96xf32> -> vector<16x96xf32>
    %318 = arith.addf %317, %24 : vector<16x96xf32>
    %319 = vector.extract_strided_slice %315 {offsets = [0, 0], sizes = [16, 32], strides = [1, 1]} : vector<16x96xf32> to vector<16x32xf32>
    %320 = vector.extract_strided_slice %318 {offsets = [0, 0], sizes = [16, 32], strides = [1, 1]} : vector<16x96xf32> to vector<16x32xf32>
    %321 = arith.addf %319, %320 : vector<16x32xf32>
    %322 = arith.negf %321 : vector<16x32xf32>
    %323 = math.exp %322 : vector<16x32xf32>
    %cst_107 = arith.constant 1.000000e+00 : f32
    %324 = vector.broadcast %cst_107 : f32 to vector<16x32xf32>
    %325 = arith.addf %324, %323 : vector<16x32xf32>
    %326 = arith.divf %324, %325 : vector<16x32xf32>
    %327 = vector.extract_strided_slice %315 {offsets = [0, 32], sizes = [16, 32], strides = [1, 1]} : vector<16x96xf32> to vector<16x32xf32>
    %328 = vector.extract_strided_slice %318 {offsets = [0, 32], sizes = [16, 32], strides = [1, 1]} : vector<16x96xf32> to vector<16x32xf32>
    %329 = arith.addf %327, %328 : vector<16x32xf32>
    %330 = arith.negf %329 : vector<16x32xf32>
    %331 = math.exp %330 : vector<16x32xf32>
    %cst_108 = arith.constant 1.000000e+00 : f32
    %332 = vector.broadcast %cst_108 : f32 to vector<16x32xf32>
    %333 = arith.addf %332, %331 : vector<16x32xf32>
    %334 = arith.divf %332, %333 : vector<16x32xf32>
    %335 = vector.extract_strided_slice %315 {offsets = [0, 64], sizes = [16, 32], strides = [1, 1]} : vector<16x96xf32> to vector<16x32xf32>
    %336 = vector.extract_strided_slice %318 {offsets = [0, 64], sizes = [16, 32], strides = [1, 1]} : vector<16x96xf32> to vector<16x32xf32>
    %337 = arith.mulf %326, %336 : vector<16x32xf32>
    %338 = arith.addf %335, %337 : vector<16x32xf32>
    %339 = math.tanh %338 : vector<16x32xf32>
    %cst_109 = arith.constant 1.000000e+00 : f32
    %340 = vector.broadcast %cst_109 : f32 to vector<16x32xf32>
    %341 = arith.subf %340, %334 : vector<16x32xf32>
    %342 = arith.mulf %341, %339 : vector<16x32xf32>
    %343 = arith.mulf %334, %268 : vector<16x32xf32>
    %344 = arith.addf %342, %343 : vector<16x32xf32>
    %cst_110 = arith.constant dense<0.000000e+00> : vector<16xf32>
    %345 = vector.multi_reduction <add>, %344, %cst_110 [1] : vector<16x32xf32> to vector<16xf32>
    %346 = vector.shape_cast %345 : vector<16xf32> to vector<16x1xf32>
    %cst_111 = arith.constant 3.200000e+01 : f32
    %347 = vector.broadcast %cst_111 : f32 to vector<16x1xf32>
    %348 = arith.divf %346, %347 : vector<16x1xf32>
    %349 = vector.broadcast %348 : vector<16x1xf32> to vector<16x32xf32>
    %350 = arith.subf %344, %349 : vector<16x32xf32>
    %351 = arith.mulf %350, %350 : vector<16x32xf32>
    %cst_112 = arith.constant dense<0.000000e+00> : vector<16xf32>
    %352 = vector.multi_reduction <add>, %351, %cst_112 [1] : vector<16x32xf32> to vector<16xf32>
    %353 = vector.shape_cast %352 : vector<16xf32> to vector<16x1xf32>
    %cst_113 = arith.constant 3.200000e+01 : f32
    %354 = vector.broadcast %cst_113 : f32 to vector<16x1xf32>
    %355 = arith.divf %353, %354 : vector<16x1xf32>
    %cst_114 = arith.constant 9.99999974E-6 : f32
    %356 = vector.broadcast %cst_114 : f32 to vector<16x1xf32>
    %357 = arith.addf %355, %356 : vector<16x1xf32>
    %358 = math.rsqrt %357 : vector<16x1xf32>
    %359 = vector.broadcast %358 : vector<16x1xf32> to vector<16x32xf32>
    %360 = arith.mulf %350, %359 : vector<16x32xf32>
    %361 = arith.mulf %360, %12 : vector<16x32xf32>
    %362 = arith.addf %361, %15 : vector<16x32xf32>
    %c0_115 = arith.constant 0 : index
    %c0_116 = arith.constant 0 : index
    %363 = vector.load %arg8[%c0_115, %c0_116] : memref<32x128xf32, #tpu.memory_space<vmem>>, vector<32x128xf32>
    %cst_117 = arith.constant dense<0.000000e+00> : vector<16x128xf32>
    %364 = tpu.matmul %362, %363, %cst_117 {dimension_numbers = #tpu.dot_dimension_numbers<[1], [0], [0], [1], [0, 0, 1, 1], [], []>} : vector<16x32xf32>, vector<32x128xf32>, vector<16x128xf32> -> vector<16x128xf32>
    %365 = arith.addf %364, %27 : vector<16x128xf32>
    %cst_118 = arith.constant 0.000000e+00 : f32
    %366 = vector.broadcast %cst_118 : f32 to vector<16x128xf32>
    %367 = arith.maximumf %365, %366 : vector<16x128xf32>
    %c0_119 = arith.constant 0 : index
    %c0_120 = arith.constant 0 : index
    %368 = vector.load %arg9[%c0_119, %c0_120] : memref<128x32xf32, #tpu.memory_space<vmem>>, vector<128x32xf32>
    %cst_121 = arith.constant dense<0.000000e+00> : vector<16x32xf32>
    %369 = tpu.matmul %367, %368, %cst_121 {dimension_numbers = #tpu.dot_dimension_numbers<[1], [0], [0], [1], [0, 0, 1, 1], [], []>} : vector<16x128xf32>, vector<128x32xf32>, vector<16x32xf32> -> vector<16x32xf32>
    %370 = arith.addf %344, %369 : vector<16x32xf32>
    %371 = arith.addf %370, %30 : vector<16x32xf32>
    %372 = vector.shape_cast %371 : vector<16x32xf32> to vector<4x4x32xf32>
    %c0_122 = arith.constant 0 : index
    %c0_123 = arith.constant 0 : index
    %c0_124 = arith.constant 0 : index
    %373 = vector.load %arg10[%c0_122, %c0_123, %c0_124] : memref<4x4x32xf32, #tpu.memory_space<vmem>>, vector<4x4x32xf32>
    tpu.vector_store %arg10[%c0_122, %c0_123, %c0_124], %372 {strides = array<i32>} : memref<4x4x32xf32, #tpu.memory_space<vmem>>, vector<4x4x32xf32>,
    return
  }
  func.func @transform_0(%arg0: i32) -> (i32, i32, i32) {
    %c0_i32 = arith.constant 0 : i32
    %c0_i32_0 = arith.constant 0 : i32
    %c0_i32_1 = arith.constant 0 : i32
    return %arg0, %c0_i32, %c0_i32_0 : i32, i32, i32
  }
  func.func @transform_1(%arg0: i32) -> (i32, i32, i32) {
    %c0_i32 = arith.constant 0 : i32
    %c0_i32_0 = arith.constant 0 : i32
    %c0_i32_1 = arith.constant 0 : i32
    return %arg0, %c0_i32, %c0_i32_0 : i32, i32, i32
  }
  func.func @transform_2(%arg0: i32) -> (i32, i32) {
    %c0_i32 = arith.constant 0 : i32
    %c0_i32_0 = arith.constant 0 : i32
    %c0_i32_1 = arith.constant 0 : i32
    return %c0_i32, %c0_i32_0 : i32, i32
  }
  func.func @transform_3(%arg0: i32) -> (i32, i32) {
    %c0_i32 = arith.constant 0 : i32
    %c0_i32_0 = arith.constant 0 : i32
    %c0_i32_1 = arith.constant 0 : i32
    return %c0_i32, %c0_i32_0 : i32, i32
  }
  func.func @transform_4(%arg0: i32) -> (i32, i32) {
    %c0_i32 = arith.constant 0 : i32
    %c0_i32_0 = arith.constant 0 : i32
    %c0_i32_1 = arith.constant 0 : i32
    return %c0_i32, %c0_i32_0 : i32, i32
  }
  func.func @transform_5(%arg0: i32) -> (i32, i32) {
    %c0_i32 = arith.constant 0 : i32
    %c0_i32_0 = arith.constant 0 : i32
    %c0_i32_1 = arith.constant 0 : i32
    return %c0_i32, %c0_i32_0 : i32, i32
  }
  func.func @transform_6(%arg0: i32) -> (i32, i32) {
    %c0_i32 = arith.constant 0 : i32
    %c0_i32_0 = arith.constant 0 : i32
    %c0_i32_1 = arith.constant 0 : i32
    return %c0_i32, %c0_i32_0 : i32, i32
  }
  func.func @transform_7(%arg0: i32) -> (i32, i32) {
    %c0_i32 = arith.constant 0 : i32
    %c0_i32_0 = arith.constant 0 : i32
    %c0_i32_1 = arith.constant 0 : i32
    return %c0_i32, %c0_i32_0 : i32, i32
  }
  func.func @transform_8(%arg0: i32) -> (i32, i32) {
    %c0_i32 = arith.constant 0 : i32
    %c0_i32_0 = arith.constant 0 : i32
    %c0_i32_1 = arith.constant 0 : i32
    return %c0_i32, %c0_i32_0 : i32, i32
  }
  func.func @transform_9(%arg0: i32) -> (i32, i32, i32) {
    %c0_i32 = arith.constant 0 : i32
    %c0_i32_0 = arith.constant 0 : i32
    %c0_i32_1 = arith.constant 0 : i32
    return %arg0, %c0_i32, %c0_i32_0 : i32, i32, i32
  }
}

</mosaic_0001>

<llo_original>
// kernel: tpu_custom_call.1
$region0: #{tpu_custom_call.1}
  #allocation0 [shape = 'u32[]', space=smem, size = 0x4, offset = 0x4, fixed_abs, tag = 'smem constant byte address 0x4 - core index']
  #allocation1 [shape = 'u32[144,128]{1,0:T(1,128)}', space=vmem, size = 0x12000, scoped, tag = 'internal scratch']
  %s0 = inlined_call_operand.vmem [shape: f32[8,16,32], index: 0, kind: input, shape index: {}]
  %s1 = inlined_call_operand.vmem [shape: f32[8,4,32], index: 1, kind: input, shape index: {}]
  %s2 = inlined_call_operand.hbm [shape: f32[12,128], index: 2, kind: input, shape index: {}]
  %s3 = inlined_call_operand.hbm [shape: f32[32,64], index: 3, kind: input, shape index: {}]
  %s4 = inlined_call_operand.hbm [shape: f32[32,32], index: 4, kind: input, shape index: {}]
  %s5 = inlined_call_operand.hbm [shape: f32[32,96], index: 5, kind: input, shape index: {}]
  %s6 = inlined_call_operand.hbm [shape: f32[32,96], index: 6, kind: input, shape index: {}]
  %s7 = inlined_call_operand.hbm [shape: f32[32,128], index: 7, kind: input, shape index: {}]
  %s8 = inlined_call_operand.vmem [shape: f32[128,32], index: 8, kind: input, shape index: {}]
  %s9 = inlined_call_operand.hbm [shape: f32[8,4,32], index: 9, kind: output, shape index: {}]
  %s10 = sld [smem:[#allocation0]]
  $region93: #{tpu_custom_call.1} parent=0
    _
  %s12 = ssub.s32 1, %s10
  %s13 = scalar_select 0, %s12, %s10
  $region1: #{tpu_custom_call.1} parent=0
    #allocation2 [shape = 'u8[8192]{0}', space=vmem, size = 0x2000, scoped, tag = 'input window, operand 2, single buffered']
    #allocation3 [shape = 's32[2]{0}', space=sflag, size = 0x8, scoped, tag = 'scoped memory for tpu_custom_call.1']
    #allocation4 [shape = 's32[2]{0}', space=sflag, size = 0x8, scoped, tag = 'scoped memory for tpu_custom_call.1']
    #allocation5 [shape = 'u8[16384]{0}', space=vmem, size = 0x4000, scoped, tag = 'input window, operand 3, single buffered']
    #allocation6 [shape = 's32[1]{0}', space=sflag, size = 0x4, scoped, tag = 'scoped memory for tpu_custom_call.1']
    #allocation7 [shape = 'u8[16384]{0}', space=vmem, size = 0x4000, scoped, tag = 'input window, operand 4, single buffered']
    #allocation8 [shape = 'u8[16384]{0}', space=vmem, size = 0x4000, scoped, tag = 'input window, operand 5, single buffered']
    #allocation9 [shape = 's32[1]{0}', space=sflag, size = 0x4, scoped, tag = 'scoped memory for tpu_custom_call.1']
    #allocation10 [shape = 'u8[16384]{0}', space=vmem, size = 0x4000, scoped, tag = 'input window, operand 6, single buffered']
    #allocation11 [shape = 'u8[16384]{0}', space=vmem, size = 0x4000, scoped, tag = 'input window, operand 7, single buffered']
    #allocation12 [shape = 's32[1]{0}', space=sflag, size = 0x4, scoped, tag = 'scoped memory for tpu_custom_call.1']
    #allocation13 [shape = 'u8[16384]{0}', space=vmem, size = 0x4000, scoped, tag = 'output window, operand 0']
    %14 = vsyncpa [#allocation3], 0
    %15 = vsyncpa [#allocation6], 0
    %16 = vsyncpa [#allocation9], 0
    %17 = vsyncpa [#allocation12], 0
    %18 = vsyncpa [#allocation4], 0
    %s19 = scalar_lea.sflag [#allocation4], 1
    %20 = vsyncpa %s19, 0
    loop: start=0, step=1, limit=4
    $region2: #{tpu_custom_call.1} parent=1 // loop_pre_header
      _
    $region3: #{tpu_custom_call.1} parent=1 // loop_header
      %s22 = sphi 0, %s26
      %p23 = scmp.ge.s32.totalorder %s22, 4
      %s32 = sphi 0, %s34
      %s35 = sphi 0, %s32
      %s36 = sphi 0, %s35
      %s52 = sphi 0, %s36
      %s58 = sphi 0, %s60
      %s61 = sphi 0, %s58
      %s62 = sphi 0, %s61
      %s78 = sphi 0, %s62
      %s82 = sphi 0, %s82
      %s84 = sphi 0, %s82
      %s85 = sphi 0, %s84
      %s99 = sphi 0, %s85
      %s103 = sphi 0, %s103
      %s105 = sphi 0, %s103
      %s106 = sphi 0, %s105
      %s120 = sphi 0, %s106
      %s124 = sphi 0, %s124
      %s126 = sphi 0, %s124
      %s127 = sphi 0, %s126
      %s141 = sphi 0, %s127
      %s145 = sphi 0, %s145
      %s147 = sphi 0, %s145
      %s148 = sphi 0, %s147
      %s162 = sphi 0, %s148
      %s166 = sphi 0, %s166
      %s168 = sphi 0, %s166
      %s169 = sphi 0, %s168
      %s183 = sphi 0, %s169
      %s187 = sphi 0, %s187
      %s189 = sphi 0, %s187
      %s190 = sphi 0, %s189
      %s204 = sphi 0, %s190
      %s208 = sphi 0, %s208
      %s210 = sphi 0, %s208
      %s211 = sphi 0, %s210
      %s225 = sphi 0, %s211
      %s231 = sphi 0, %s233
      %s234 = sphi 0, %s231
      %s235 = sphi 0, %s234
      %s251 = sphi 0, %s235
    $region4: #{tpu_custom_call.1} parent=1 // loop_header_branch
      %25 = sbr.rel (%p23) target = $region8
    $region5: #{tpu_custom_call.1} parent=1 // loop_body
      %s27 = ssub.s32 %s22, 1
      %s28 = ssub.s32 %s22, 2
      %s29 = sadd.s32 %s22, 1
      %s30 = ssub.s32 %s22, %s29
      %p31 = scmp.eq.s32.totalorder %s30, 0
      %s33 = sadd.s32 %s32, 1
      %s34 = scalar_select %p31, %s32, %s33
      %p37 = pneg %p31
      %p38 = scmp.eq.s32.totalorder %s22, 1
      %p39 = por %p37, %p38
      %p40 = scmp.ne.s32.totalorder %s32, %s35
      %p41 = scmp.eq.s32.totalorder %s22, 0
      %p42 = por %p40, %p41
      %p43 = scmp.ne.s32.totalorder %s32, %s35
      %p44 = scmp.eq.s32.totalorder %s27, 1
      %p45 = por %p43, %p44
      %p46 = scmp.ne.s32.totalorder %s35, %s36
      %p47 = scmp.eq.s32.totalorder %s27, 0
      %p48 = por %p46, %p47
      %p49 = scmp.ne.s32.totalorder %s35, %s36
      %p50 = scmp.eq.s32.totalorder %s28, 1
      %p51 = por %p49, %p50
      %p53 = scmp.ne.s32.totalorder %s36, %s52
      %p54 = scmp.eq.s32.totalorder %s28, 0
      %p55 = por %p53, %p54
      %s56 = ssub.s32 %s22, %s29
      %p57 = scmp.eq.s32.totalorder %s56, 0
      %s59 = sadd.s32 %s58, 1
      %s60 = scalar_select %p57, %s58, %s59
      %p63 = pneg %p57
      %p64 = scmp.eq.s32.totalorder %s22, 1
      %p65 = por %p63, %p64
      %p66 = scmp.ne.s32.totalorder %s58, %s61
      %p67 = scmp.eq.s32.totalorder %s22, 0
      %p68 = por %p66, %p67
      %p69 = scmp.ne.s32.totalorder %s58, %s61
      %p70 = scmp.eq.s32.totalorder %s27, 1
      %p71 = por %p69, %p70
      %p72 = scmp.ne.s32.totalorder %s61, %s62
      %p73 = scmp.eq.s32.totalorder %s27, 0
      %p74 = por %p72, %p73
      %p75 = scmp.ne.s32.totalorder %s61, %s62
      %p76 = scmp.eq.s32.totalorder %s28, 1
      %p77 = por %p75, %p76
      %p79 = scmp.ne.s32.totalorder %s62, %s78
      %p80 = scmp.eq.s32.totalorder %s28, 0
      %p81 = por %p79, %p80
      %s83 = sadd.s32 %s82, 1
      %p86 = scmp.eq.s32.totalorder %s22, 1
      %p87 = scmp.ne.s32.totalorder %s82, %s84
      %p88 = scmp.eq.s32.totalorder %s22, 0
      %p89 = por %p87, %p88
      %p90 = scmp.ne.s32.totalorder %s82, %s84
      %p91 = scmp.eq.s32.totalorder %s27, 1
      %p92 = por %p90, %p91
      %p93 = scmp.ne.s32.totalorder %s84, %s85
      %p94 = scmp.eq.s32.totalorder %s27, 0
      %p95 = por %p93, %p94
      %p96 = scmp.ne.s32.totalorder %s84, %s85
      %p97 = scmp.eq.s32.totalorder %s28, 1
      %p98 = por %p96, %p97
      %p100 = scmp.ne.s32.totalorder %s85, %s99
      %p101 = scmp.eq.s32.totalorder %s28, 0
      %p102 = por %p100, %p101
      %s104 = sadd.s32 %s103, 1
      %p107 = scmp.eq.s32.totalorder %s22, 1
      %p108 = scmp.ne.s32.totalorder %s103, %s105
      %p109 = scmp.eq.s32.totalorder %s22, 0
      %p110 = por %p108, %p109
      %p111 = scmp.ne.s32.totalorder %s103, %s105
      %p112 = scmp.eq.s32.totalorder %s27, 1
      %p113 = por %p111, %p112
      %p114 = scmp.ne.s32.totalorder %s105, %s106
      %p115 = scmp.eq.s32.totalorder %s27, 0
      %p116 = por %p114, %p115
      %p117 = scmp.ne.s32.totalorder %s105, %s106
      %p118 = scmp.eq.s32.totalorder %s28, 1
      %p119 = por %p117, %p118
      %p121 = scmp.ne.s32.totalorder %s106, %s120
      %p122 = scmp.eq.s32.totalorder %s28, 0
      %p123 = por %p121, %p122
      %s125 = sadd.s32 %s124, 1
      %p128 = scmp.eq.s32.totalorder %s22, 1
      %p129 = scmp.ne.s32.totalorder %s124, %s126
      %p130 = scmp.eq.s32.totalorder %s22, 0
      %p131 = por %p129, %p130
      %p132 = scmp.ne.s32.totalorder %s124, %s126
      %p133 = scmp.eq.s32.totalorder %s27, 1
      %p134 = por %p132, %p133
      %p135 = scmp.ne.s32.totalorder %s126, %s127
      %p136 = scmp.eq.s32.totalorder %s27, 0
      %p137 = por %p135, %p136
      %p138 = scmp.ne.s32.totalorder %s126, %s127
      %p139 = scmp.eq.s32.totalorder %s28, 1
      %p140 = por %p138, %p139
      %p142 = scmp.ne.s32.totalorder %s127, %s141
      %p143 = scmp.eq.s32.totalorder %s28, 0
      %p144 = por %p142, %p143
      %s146 = sadd.s32 %s145, 1
      %p149 = scmp.eq.s32.totalorder %s22, 1
      %p150 = scmp.ne.s32.totalorder %s145, %s147
      %p151 = scmp.eq.s32.totalorder %s22, 0
      %p152 = por %p150, %p151
      %p153 = scmp.ne.s32.totalorder %s145, %s147
      %p154 = scmp.eq.s32.totalorder %s27, 1
      %p155 = por %p153, %p154
      %p156 = scmp.ne.s32.totalorder %s147, %s148
      %p157 = scmp.eq.s32.totalorder %s27, 0
      %p158 = por %p156, %p157
      %p159 = scmp.ne.s32.totalorder %s147, %s148
      %p160 = scmp.eq.s32.totalorder %s28, 1
      %p161 = por %p159, %p160
      %p163 = scmp.ne.s32.totalorder %s148, %s162
      %p164 = scmp.eq.s32.totalorder %s28, 0
      %p165 = por %p163, %p164
      %s167 = sadd.s32 %s166, 1
      %p170 = scmp.eq.s32.totalorder %s22, 1
      %p171 = scmp.ne.s32.totalorder %s166, %s168
      %p172 = scmp.eq.s32.totalorder %s22, 0
      %p173 = por %p171, %p172
      %p174 = scmp.ne.s32.totalorder %s166, %s168
      %p175 = scmp.eq.s32.totalorder %s27, 1
      %p176 = por %p174, %p175
      %p177 = scmp.ne.s32.totalorder %s168, %s169
      %p178 = scmp.eq.s32.totalorder %s27, 0
      %p179 = por %p177, %p178
      %p180 = scmp.ne.s32.totalorder %s168, %s169
      %p181 = scmp.eq.s32.totalorder %s28, 1
      %p182 = por %p180, %p181
      %p184 = scmp.ne.s32.totalorder %s169, %s183
      %p185 = scmp.eq.s32.totalorder %s28, 0
      %p186 = por %p184, %p185
      %s188 = sadd.s32 %s187, 1
      %p191 = scmp.eq.s32.totalorder %s22, 1
      %p192 = scmp.ne.s32.totalorder %s187, %s189
      %p193 = scmp.eq.s32.totalorder %s22, 0
      %p194 = por %p192, %p193
      %p195 = scmp.ne.s32.totalorder %s187, %s189
      %p196 = scmp.eq.s32.totalorder %s27, 1
      %p197 = por %p195, %p196
      %p198 = scmp.ne.s32.totalorder %s189, %s190
      %p199 = scmp.eq.s32.totalorder %s27, 0
      %p200 = por %p198, %p199
      %p201 = scmp.ne.s32.totalorder %s189, %s190
      %p202 = scmp.eq.s32.totalorder %s28, 1
      %p203 = por %p201, %p202
      %p205 = scmp.ne.s32.totalorder %s190, %s204
      %p206 = scmp.eq.s32.totalorder %s28, 0
      %p207 = por %p205, %p206
      %s209 = sadd.s32 %s208, 1
      %p212 = scmp.eq.s32.totalorder %s22, 1
      %p213 = scmp.ne.s32.totalorder %s208, %s210
      %p214 = scmp.eq.s32.totalorder %s22, 0
      %p215 = por %p213, %p214
      %p216 = scmp.ne.s32.totalorder %s208, %s210
      %p217 = scmp.eq.s32.totalorder %s27, 1
      %p218 = por %p216, %p217
      %p219 = scmp.ne.s32.totalorder %s210, %s211
      %p220 = scmp.eq.s32.totalorder %s27, 0
      %p221 = por %p219, %p220
      %p222 = scmp.ne.s32.totalorder %s210, %s211
      %p223 = scmp.eq.s32.totalorder %s28, 1
      %p224 = por %p222, %p223
      %p226 = scmp.ne.s32.totalorder %s211, %s225
      %p227 = scmp.eq.s32.totalorder %s28, 0
      %p228 = por %p226, %p227
      %s229 = ssub.s32 %s22, %s29
      %p230 = scmp.eq.s32.totalorder %s229, 0
      %s232 = sadd.s32 %s231, 1
      %s233 = scalar_select %p230, %s231, %s232
      %p236 = pneg %p230
      %p237 = scmp.eq.s32.totalorder %s22, 1
      %p238 = por %p236, %p237
      %p239 = scmp.ne.s32.totalorder %s231, %s234
      %p240 = scmp.eq.s32.totalorder %s22, 0
      %p241 = por %p239, %p240
      %p242 = scmp.ne.s32.totalorder %s231, %s234
      %p243 = scmp.eq.s32.totalorder %s27, 1
      %p244 = por %p242, %p243
      %p245 = scmp.ne.s32.totalorder %s234, %s235
      %p246 = scmp.eq.s32.totalorder %s27, 0
      %p247 = por %p245, %p246
      %p248 = scmp.ne.s32.totalorder %s234, %s235
      %p249 = scmp.eq.s32.totalorder %s28, 1
      %p250 = por %p248, %p249
      %p252 = scmp.ne.s32.totalorder %s235, %s251
      %p253 = scmp.eq.s32.totalorder %s28, 0
      %p254 = por %p252, %p253
      %p255 = scmp.le.s32.totalorder 1, %s22
      %p256 = scmp.lt.s32.totalorder %s22, 3
      %p257 = pnand %p255, %p256
      %p258 = pneg %p257
      // Predicated region
      $region9: #{tpu_custom_call.1} parent=5 // pred_check
        _
      $region10: #{tpu_custom_call.1} parent=5 // pred_check_branch
        %260 = sbr.rel (%p257) target = $region12
      $region11: #{tpu_custom_call.1} parent=5 // pred_region
        %s261 = ssub.s32 %s22, 1
        // Predicated region
        $region13: #{tpu_custom_call.1} parent=11 // pred_check
          %p262 = pneg %p95
        $region14: #{tpu_custom_call.1} parent=11 // pred_check_branch
          %264 = sbr.rel (%p262) target = $region16
        $region15: #{tpu_custom_call.1} parent=11 // pred_region
          %s266 = ssub.s32 256, 256
          %267 = vsyncadd [#allocation3], %s266
          %s268 = sshll.u32 [#allocation2], 4
          %s269 = int_to_ptr.vmem [resolvable:$true] %s268
          %274 = dma.hbm_to_vmem [thread:$0]  %s2, 256, %s269, [#allocation3], 128, 128, 8
        $region16: #{tpu_custom_call.1} parent=11 // pred_fallthru
          _
        // Predicated region
        $region17: #{tpu_custom_call.1} parent=11 // pred_check
          %p275 = pneg %p116
        $region18: #{tpu_custom_call.1} parent=11 // pred_check_branch
          %277 = sbr.rel (%p275) target = $region20
        $region19: #{tpu_custom_call.1} parent=11 // pred_region
          %s279 = ssub.s32 512, 512
          %280 = vsyncadd [#allocation6], %s279
          %s281 = sshll.u32 [#allocation5], 4
          %s282 = int_to_ptr.vmem [resolvable:$true] %s281
          %287 = dma.hbm_to_vmem [thread:$0]  %s3, 512, %s282, [#allocation6], 128, 128, 8
        $region20: #{tpu_custom_call.1} parent=11 // pred_fallthru
          _
        // Predicated region
        $region21: #{tpu_custom_call.1} parent=11 // pred_check
          %p288 = pneg %p137
        $region22: #{tpu_custom_call.1} parent=11 // pred_check_branch
          %290 = sbr.rel (%p288) target = $region24
        $region23: #{tpu_custom_call.1} parent=11 // pred_region
          %s292 = ssub.s32 512, 512
          %293 = vsyncadd [#allocation6], %s292
          %s294 = sshll.u32 [#allocation7], 4
          %s295 = int_to_ptr.vmem [resolvable:$true] %s294
          %300 = dma.hbm_to_vmem [thread:$0]  %s4, 512, %s295, [#allocation6], 128, 128, 8
        $region24: #{tpu_custom_call.1} parent=11 // pred_fallthru
          _
        // Predicated region
        $region25: #{tpu_custom_call.1} parent=11 // pred_check
          %p301 = pneg %p158
        $region26: #{tpu_custom_call.1} parent=11 // pred_check_branch
          %303 = sbr.rel (%p301) target = $region28
        $region27: #{tpu_custom_call.1} parent=11 // pred_region
          %s305 = ssub.s32 512, 512
          %306 = vsyncadd [#allocation9], %s305
          %s307 = sshll.u32 [#allocation8], 4
          %s308 = int_to_ptr.vmem [resolvable:$true] %s307
          %313 = dma.hbm_to_vmem [thread:$0]  %s5, 512, %s308, [#allocation9], 128, 128, 8
        $region28: #{tpu_custom_call.1} parent=11 // pred_fallthru
          _
        // Predicated region
        $region29: #{tpu_custom_call.1} parent=11 // pred_check
          %p314 = pneg %p179
        $region30: #{tpu_custom_call.1} parent=11 // pred_check_branch
          %316 = sbr.rel (%p314) target = $region32
        $region31: #{tpu_custom_call.1} parent=11 // pred_region
          %s318 = ssub.s32 512, 512
          %319 = vsyncadd [#allocation9], %s318
          %s320 = sshll.u32 [#allocation10], 4
          %s321 = int_to_ptr.vmem [resolvable:$true] %s320
          %326 = dma.hbm_to_vmem [thread:$0]  %s6, 512, %s321, [#allocation9], 128, 128, 8
        $region32: #{tpu_custom_call.1} parent=11 // pred_fallthru
          _
        // Predicated region
        $region33: #{tpu_custom_call.1} parent=11 // pred_check
          %p327 = pneg %p200
        $region34: #{tpu_custom_call.1} parent=11 // pred_check_branch
          %329 = sbr.rel (%p327) target = $region36
        $region35: #{tpu_custom_call.1} parent=11 // pred_region
          %s331 = ssub.s32 512, 512
          %332 = vsyncadd [#allocation12], %s331
          %s333 = sshll.u32 [#allocation11], 4
          %s334 = int_to_ptr.vmem [resolvable:$true] %s333
          %339 = dma.hbm_to_vmem [thread:$0]  %s7, 512, %s334, [#allocation12], 128, 128, 8
        $region36: #{tpu_custom_call.1} parent=11 // pred_fallthru
          _
        // Predicated region
        $region37: #{tpu_custom_call.1} parent=11 // pred_check
          %p340 = pneg %p221
        $region38: #{tpu_custom_call.1} parent=11 // pred_check_branch
          %342 = sbr.rel (%p340) target = $region40
        $region39: #{tpu_custom_call.1} parent=11 // pred_region
          _
        $region40: #{tpu_custom_call.1} parent=11 // pred_fallthru
          _
      $region12: #{tpu_custom_call.1} parent=5 // pred_fallthru
        _
      %p343 = scmp.lt.s32.totalorder %s22, 2
      // Predicated region
      $region41: #{tpu_custom_call.1} parent=5 // pred_check
        %p344 = pneg %p343
      $region42: #{tpu_custom_call.1} parent=5 // pred_check_branch
        %346 = sbr.rel (%p344) target = $region44
      $region43: #{tpu_custom_call.1} parent=5 // pred_region
        // Predicated region
        $region45: #{tpu_custom_call.1} parent=43 // pred_check
          %p347 = pneg %p42
        $region46: #{tpu_custom_call.1} parent=43 // pred_check_branch
          %349 = sbr.rel (%p347) target = $region48
        $region47: #{tpu_custom_call.1} parent=43 // pred_region
          %s350 = smul.u32 4, %s22
          %p351 = scmp.lt.s32.totalorder %s350, 7
          %s352 = scalar_select %p351, %s350, 7
          %s353 = smul.addr %s352, 2
          %s354 = smul.addr %s353, 8
          %s355 = scalar_lea.vmem %s0, %s354
          %s356 = smul.u32 4, %s22
        $region48: #{tpu_custom_call.1} parent=43 // pred_fallthru
          _
        // Predicated region
        $region49: #{tpu_custom_call.1} parent=43 // pred_check
          %p357 = pneg %p68
        $region50: #{tpu_custom_call.1} parent=43 // pred_check_branch
          %359 = sbr.rel (%p357) target = $region52
        $region51: #{tpu_custom_call.1} parent=43 // pred_region
          %s360 = smul.u32 4, %s22
          %p361 = scmp.lt.s32.totalorder %s360, 7
          %s362 = scalar_select %p361, %s360, 7
          %s363 = smul.addr %s362, 4
          %s364 = scalar_lea.vmem %s1, %s363
          %s365 = smul.u32 4, %s22
        $region52: #{tpu_custom_call.1} parent=43 // pred_fallthru
          _
      $region44: #{tpu_custom_call.1} parent=5 // pred_fallthru
        _
      %p366 = scmp.le.s32.totalorder 1, %s22
      %p367 = scmp.lt.s32.totalorder %s22, 3
      %p368 = pnand %p366, %p367
      %p369 = pneg %p368
      // Predicated region
      $region53: #{tpu_custom_call.1} parent=5 // pred_check
        _
      $region54: #{tpu_custom_call.1} parent=5 // pred_check_branch
        %371 = sbr.rel (%p368) target = $region56
      $region55: #{tpu_custom_call.1} parent=5 // pred_region
        %s372 = ssub.s32 %s22, 1
        // Predicated region
        $region57: #{tpu_custom_call.1} parent=55 // pred_check
          %p373 = pneg %p95
        $region58: #{tpu_custom_call.1} parent=55 // pred_check_branch
          %375 = sbr.rel (%p373) target = $region60
        $region59: #{tpu_custom_call.1} parent=55 // pred_region
          %376 = dma.done [#allocation3], 256
        $region60: #{tpu_custom_call.1} parent=55 // pred_fallthru
          _
        // Predicated region
        $region61: #{tpu_custom_call.1} parent=55 // pred_check
          %p377 = pneg %p116
        $region62: #{tpu_custom_call.1} parent=55 // pred_check_branch
          %379 = sbr.rel (%p377) target = $region64
        $region63: #{tpu_custom_call.1} parent=55 // pred_region
          %380 = dma.done [#allocation6], 512
        $region64: #{tpu_custom_call.1} parent=55 // pred_fallthru
          _
        // Predicated region
        $region65: #{tpu_custom_call.1} parent=55 // pred_check
          %p381 = pneg %p137
        $region66: #{tpu_custom_call.1} parent=55 // pred_check_branch
          %383 = sbr.rel (%p381) target = $region68
        $region67: #{tpu_custom_call.1} parent=55 // pred_region
          %384 = dma.done [#allocation6], 512
        $region68: #{tpu_custom_call.1} parent=55 // pred_fallthru
          _
        // Predicated region
        $region69: #{tpu_custom_call.1} parent=55 // pred_check
          %p385 = pneg %p158
        $region70: #{tpu_custom_call.1} parent=55 // pred_check_branch
          %387 = sbr.rel (%p385) target = $region72
        $region71: #{tpu_custom_call.1} parent=55 // pred_region
          %388 = dma.done [#allocation9], 512
        $region72: #{tpu_custom_call.1} parent=55 // pred_fallthru
          _
        // Predicated region
        $region73: #{tpu_custom_call.1} parent=55 // pred_check
          %p389 = pneg %p179
        $region74: #{tpu_custom_call.1} parent=55 // pred_check_branch
          %391 = sbr.rel (%p389) target = $region76
        $region75: #{tpu_custom_call.1} parent=55 // pred_region
          %392 = dma.done [#allocation9], 512
        $region76: #{tpu_custom_call.1} parent=55 // pred_fallthru
          _
        // Predicated region
        $region77: #{tpu_custom_call.1} parent=55 // pred_check
          %p393 = pneg %p200
        $region78: #{tpu_custom_call.1} parent=55 // pred_check_branch
          %395 = sbr.rel (%p393) target = $region80
        $region79: #{tpu_custom_call.1} parent=55 // pred_region
          %396 = dma.done [#allocation12], 512
        $region80: #{tpu_custom_call.1} parent=55 // pred_fallthru
          _
        %s397 = smul.u32 4, %s27
        %p398 = scmp.lt.s32.totalorder %s397, 7
        %s399 = scalar_select %p398, %s397, 7
        %s400 = smul.addr %s399, 2
        %s401 = smul.addr %s400, 8
        %s402 = scalar_lea.vmem %s0, %s401
        %p403 = pneg %p48
        %p404 = pneg %p45
        %s405 = smul.u32 4, %s27
        %p406 = scmp.lt.s32.totalorder %s405, 7
        %s407 = scalar_select %p406, %s405, 7
        %s408 = smul.addr %s407, 4
        %s409 = scalar_lea.vmem %s1, %s408
        %p410 = pneg %p74
        %p411 = pneg %p71
        %p412 = pneg %p95
        %p413 = pneg %p92
        %p414 = pneg %p116
        %p415 = pneg %p113
        %p416 = pneg %p137
        %p417 = pneg %p134
        %p418 = pneg %p158
        %p419 = pneg %p155
        %p420 = pneg %p179
        %p421 = pneg %p176
        %p422 = pneg %p200
        %p423 = pneg %p197
        %p424 = pneg %p221
        %p425 = pneg %p218
        %p426 = pneg %p247
        %p427 = pneg %p244
        %s428 = sand.u32 %s234, 1
        %s429 = scalar_lea.sflag [#allocation4], %s428
        %s430 = sand.u32 %s234, 1
        %s431 = smul.addr %s430, 16
        %s432 = scalar_lea.vmem [#allocation13], %s431
        %s433 = smul.u32 4, %s27
        %p434 = scmp.lt.s32.totalorder %s433, 7
        %s435 = scalar_select %p434, %s433, 7
        %s436 = smul.addr %s435, 2
        %s437 = smul.addr %s436, 8
        %s438 = scalar_lea.vmem %s0, %s437
        %s439 = smul.u32 4, %s27
        %s440 = smul.u32 4, %s27
        %p441 = scmp.lt.s32.totalorder %s440, 7
        %s442 = scalar_select %p441, %s440, 7
        %s443 = smul.addr %s442, 4
        %s444 = scalar_lea.vmem %s1, %s443
        %s445 = smul.u32 4, %s27
        %s446 = smul.u32 4, %s27
        %v447 = vld [vmem:[#allocation2] sm:$0xff]
        %v448 = vld [vmem:[#allocation2 + $0x8] sm:$0xf]
        %v449 = vlaneseq
        %v450 = vshrl.u32 %v449, 7
        %v451 = vsub.s32 2, %v450
        %v452 = vrot.slane %v447, %v451
        %v453 = vlaneseq
        %v454 = vshrl.u32 %v453, 7
        %v455 = vsub.s32 3, %v454
        %v456 = vrot.slane %v447, %v455
        %v457 = vlaneseq
        %v458 = vshrl.u32 %v457, 7
        %v459 = vsub.s32 4, %v458
        %v460 = vrot.slane %v447, %v459
        %v461 = vlaneseq
        %v462 = vshrl.u32 %v461, 7
        %v463 = vsub.s32 5, %v462
        %v464 = vrot.slane %v447, %v463
        %v465 = vlaneseq
        %v466 = vshrl.u32 %v465, 7
        %v467 = vsub.s32 7, %v466
        %v468 = vrot.slane %v447, %v467
        %v469 = vlaneseq
        %v470 = vshrl.u32 %v469, 7
        %v471 = vsub.s32 0, %v470
        %v472 = vrot.slane %v448, %v471
        %v473 = vlaneseq
        %v474 = vshrl.u32 %v473, 7
        %v475 = vsub.s32 1, %v474
        %v476 = vrot.slane %v448, %v475
        %v477 = vlaneseq
        %v478 = vshrl.u32 %v477, 7
        %v479 = vsub.s32 2, %v478
        %v480 = vrot.slane %v448, %v479
        %v481 = vlaneseq
        %v482 = vshrl.u32 %v481, 7
        %v483 = vsub.s32 3, %v482
        %v484 = vrot.slane %v448, %v483
        %v485 = vld [vmem:[%s438] sm:$0xff]
        %v486 = vld [vmem:[%s438 + $0x8] sm:$0xff]
        %v487 = vld [vmem:[%s438 + $0x10] sm:$0xff]
        %v488 = vld [vmem:[%s438 + $0x18] sm:$0xff]
        %v489 = vld [vmem:[%s438 + $0x20] sm:$0xff]
        %v490 = vld [vmem:[%s438 + $0x28] sm:$0xff]
        %v491 = vld [vmem:[%s438 + $0x30] sm:$0xff]
        %v492 = vld [vmem:[%s438 + $0x38] sm:$0xff]
        %vm493 = vcmask 261120
        %v494 = vsel %vm493, %v485, 0.0
        %495 = vadd.xlane.f32.xlu0 %v494
        %v496 = vpop.xlane.xlu0 %495
        %v497 = vsel %vm493, %v486, 0.0
        %498 = vadd.xlane.f32.xlu0 %v497
        %v499 = vpop.xlane.xlu0 %498
        %v500 = vsel %vm493, %v487, 0.0
        %501 = vadd.xlane.f32.xlu0 %v500
        %v502 = vpop.xlane.xlu0 %501
        %v503 = vsel %vm493, %v488, 0.0
        %504 = vadd.xlane.f32.xlu0 %v503
        %v505 = vpop.xlane.xlu0 %504
        %v506 = vsel %vm493, %v489, 0.0
        %507 = vadd.xlane.f32.xlu0 %v506
        %v508 = vpop.xlane.xlu0 %507
        %v509 = vsel %vm493, %v490, 0.0
        %510 = vadd.xlane.f32.xlu0 %v509
        %v511 = vpop.xlane.xlu0 %510
        %v512 = vsel %vm493, %v491, 0.0
        %513 = vadd.xlane.f32.xlu0 %v512
        %v514 = vpop.xlane.xlu0 %513
        %v515 = vsel %vm493, %v492, 0.0
        %516 = vadd.xlane.f32.xlu0 %v515
        %v517 = vpop.xlane.xlu0 %516
        %v518 = vrcp.pop 32.0
        %v519 = vmul.f32 %v496, %v518
        %v520 = vmul.f32 %v499, %v518
        %v521 = vmul.f32 %v502, %v518
        %v522 = vmul.f32 %v505, %v518
        %v523 = vmul.f32 %v508, %v518
        %v524 = vmul.f32 %v511, %v518
        %v525 = vmul.f32 %v514, %v518
        %v526 = vmul.f32 %v517, %v518
        %v527 = vsub.f32 %v485, %v519
        %v528 = vsub.f32 %v486, %v520
        %v529 = vsub.f32 %v487, %v521
        %v530 = vsub.f32 %v488, %v522
        %v531 = vsub.f32 %v489, %v523
        %v532 = vsub.f32 %v490, %v524
        %v533 = vsub.f32 %v491, %v525
        %v534 = vsub.f32 %v492, %v526
        %v535 = vmul.f32 %v527, %v527
        %v536 = vmul.f32 %v528, %v528
        %v537 = vmul.f32 %v529, %v529
        %v538 = vmul.f32 %v530, %v530
        %v539 = vmul.f32 %v531, %v531
        %v540 = vmul.f32 %v532, %v532
        %v541 = vmul.f32 %v533, %v533
        %v542 = vmul.f32 %v534, %v534
        %v543 = vsel %vm493, %v535, 0.0
        %544 = vadd.xlane.f32.xlu0 %v543
        %v545 = vpop.xlane.xlu0 %544
        %v546 = vsel %vm493, %v536, 0.0
        %547 = vadd.xlane.f32.xlu0 %v546
        %v548 = vpop.xlane.xlu0 %547
        %v549 = vsel %vm493, %v537, 0.0
        %550 = vadd.xlane.f32.xlu0 %v549
        %v551 = vpop.xlane.xlu0 %550
        %v552 = vsel %vm493, %v538, 0.0
        %553 = vadd.xlane.f32.xlu0 %v552
        %v554 = vpop.xlane.xlu0 %553
        %v555 = vsel %vm493, %v539, 0.0
        %556 = vadd.xlane.f32.xlu0 %v555
        %v557 = vpop.xlane.xlu0 %556
        %v558 = vsel %vm493, %v540, 0.0
        %559 = vadd.xlane.f32.xlu0 %v558
        %v560 = vpop.xlane.xlu0 %559
        %v561 = vsel %vm493, %v541, 0.0
        %562 = vadd.xlane.f32.xlu0 %v561
        %v563 = vpop.xlane.xlu0 %562
        %v564 = vsel %vm493, %v542, 0.0
        %565 = vadd.xlane.f32.xlu0 %v564
        %v566 = vpop.xlane.xlu0 %565
        %v567 = vmul.f32 %v545, %v518
        %v568 = vmul.f32 %v548, %v518
        %v569 = vmul.f32 %v551, %v518
        %v570 = vmul.f32 %v554, %v518
        %v571 = vmul.f32 %v557, %v518
        %v572 = vmul.f32 %v560, %v518
        %v573 = vmul.f32 %v563, %v518
        %v574 = vmul.f32 %v566, %v518
        %v575 = vadd.f32 %v567, 1e-05
        %v576 = vadd.f32 %v568, 1e-05
        %v577 = vadd.f32 %v569, 1e-05
        %v578 = vadd.f32 %v570, 1e-05
        %v579 = vadd.f32 %v571, 1e-05
        %v580 = vadd.f32 %v572, 1e-05
        %v581 = vadd.f32 %v573, 1e-05
        %v582 = vadd.f32 %v574, 1e-05
        %v583 = vrsqrt.pop %v575
        %v584 = vrsqrt.pop %v576
        %v585 = vrsqrt.pop %v577
        %v586 = vrsqrt.pop %v578
        %v587 = vrsqrt.pop %v579
        %v588 = vrsqrt.pop %v580
        %v589 = vrsqrt.pop %v581
        %v590 = vrsqrt.pop %v582
        %v591 = vmul.f32 %v527, %v583
        %v592 = vmul.f32 %v528, %v584
        %v593 = vmul.f32 %v529, %v585
        %v594 = vmul.f32 %v530, %v586
        %v595 = vmul.f32 %v531, %v587
        %v596 = vmul.f32 %v532, %v588
        %v597 = vmul.f32 %v533, %v589
        %v598 = vmul.f32 %v534, %v590
        %v599 = vlaneseq
        %v600 = vshrl.u32 %v599, 7
        %v601 = vsub.s32 0, %v600
        %v602 = vrot.slane %v447, %v601
        %v603 = vmul.f32 %v591, %v602
        %v604 = vmul.f32 %v592, %v602
        %v605 = vmul.f32 %v593, %v602
        %v606 = vmul.f32 %v594, %v602
        %v607 = vmul.f32 %v595, %v602
        %v608 = vmul.f32 %v596, %v602
        %v609 = vmul.f32 %v597, %v602
        %v610 = vmul.f32 %v598, %v602
        %v611 = vlaneseq
        %v612 = vshrl.u32 %v611, 7
        %v613 = vsub.s32 1, %v612
        %v614 = vrot.slane %v447, %v613
        %v615 = vadd.f32 %v603, %v614
        %v616 = vadd.f32 %v604, %v614
        %v617 = vadd.f32 %v605, %v614
        %v618 = vadd.f32 %v606, %v614
        %v619 = vadd.f32 %v607, %v614
        %v620 = vadd.f32 %v608, %v614
        %v621 = vadd.f32 %v609, %v614
        %v622 = vadd.f32 %v610, %v614
        %v623 = vld [vmem:[#allocation5] sm:$0xff]
        %v624 = vld [vmem:[#allocation5 + $0x8] sm:$0xff]
        %v625 = vld [vmem:[#allocation5 + $0x10] sm:$0xff]
        %v626 = vld [vmem:[#allocation5 + $0x18] sm:$0xff]
        %v627 = vlaneseq
        %v628 = vshrl.u32 %v627, 7
        %v629 = vsub.s32 6, %v628
        %v630 = vrot.slane %v447, %v629
        %v632 = vsel %vm493, %v615, 0
        %v635 = vsel %vm493, %v616, 0
        %v638 = vsel %vm493, %v617, 0
        %v641 = vsel %vm493, %v618, 0
        %v644 = vsel %vm493, %v619, 0
        %v647 = vsel %vm493, %v620, 0
        %v650 = vsel %vm493, %v621, 0
        %v653 = vsel %vm493, %v622, 0
        %655 = vmatprep.subr.mxu0 0.0
        %656 = vmatpush1.msra.mxu0 %v623
        %657 = vmatprep.subr.mxu0 0.0
        %658 = vmatpush1.msra.mxu0 %v624
        %659 = vmatprep.subr.mxu0 0.0
        %660 = vmatpush1.msra.mxu0 %v625
        %661 = vmatprep.subr.mxu0 0.0
        %662 = vmatpush1.msra.mxu0 %v626
        %663 = vmatprep.subr.mxu0 0.0
        %664 = vmatpush1.msra.mxu0 0.0
        %665 = vmatprep.subr.mxu0 0.0
        %666 = vmatpush1.msra.mxu0 0.0
        %667 = vmatprep.subr.mxu0 0.0
        %668 = vmatpush1.msra.mxu0 0.0
        %669 = vmatprep.subr.mxu0 0.0
        %670 = vmatpush1.msra.mxu0 0.0
        %671 = vmatprep.subr.mxu0 0.0
        %672 = vmatpush1.msra.mxu0 0.0
        %673 = vmatprep.subr.mxu0 0.0
        %674 = vmatpush1.msra.mxu0 0.0
        %675 = vmatprep.subr.mxu0 0.0
        %676 = vmatpush1.msra.mxu0 0.0
        %677 = vmatprep.subr.mxu0 0.0
        %678 = vmatpush1.msra.mxu0 0.0
        %679 = vmatprep.subr.mxu0 0.0
        %680 = vmatpush1.msra.mxu0 0.0
        %681 = vmatprep.subr.mxu0 0.0
        %682 = vmatpush1.msra.mxu0 0.0
        %683 = vmatprep.subr.mxu0 0.0
        %684 = vmatpush1.msra.mxu0 0.0
        %685 = vmatprep.subr.mxu0 0.0
        %686 = vmatpush1.msra.mxu0 0.0
        %687 = vmatprep.subr.mxu0 0.0
        %688 = vmatpush1.msra.mxu0 0.0
        %689 = vmatprep.subr.mxu0 0.0
        %690 = vmatpush1.msra.mxu0 0.0
        %691 = vmatprep.subr.mxu0 0.0
        %692 = vmatpush1.msra.mxu0 0.0
        %693 = vmatprep.subr.mxu0 0.0
        %694 = vmatpush1.msra.mxu0 0.0
        %695 = vmatprep.subr.mxu0 0.0
        %696 = vmatpush1.msra.mxu0 0.0
        %697 = vmatprep.subr.mxu0 0.0
        %698 = vmatpush1.msra.mxu0 0.0
        %699 = vmatprep.subr.mxu0 0.0
        %700 = vmatpush1.msra.mxu0 0.0
        %701 = vmatprep.subr.mxu0 0.0
        %702 = vmatpush1.msra.mxu0 0.0
        %703 = vmatprep.subr.mxu0 0.0
        %704 = vmatpush1.msra.mxu0 0.0
        %705 = vmatprep.subr.mxu0 0.0
        %706 = vmatpush1.msra.mxu0 0.0
        %707 = vmatprep.subr.mxu0 0.0
        %708 = vmatpush1.msra.mxu0 0.0
        %709 = vmatprep.subr.mxu0 0.0
        %710 = vmatpush1.msra.mxu0 0.0
        %711 = vmatprep.subr.mxu0 0.0
        %712 = vmatpush1.msra.mxu0 0.0
        %713 = vmatprep.subr.mxu0 0.0
        %714 = vmatpush1.msra.mxu0 0.0
        %715 = vmatprep.subr.mxu0 0.0
        %716 = vmatpush1.msra.mxu0 0.0
        %717 = vmatprep.subr.mxu0 0.0
        %718 = vmatpush1.msra.mxu0 0.0
        %719 = vmatprep.mubr.f32.mxu0 0.0
        %720 = vmatmul.mubr.f32.gmra.mrb[0].mxu0 %v632
        %v721 = vpop.f32.mrb[0].mxu0
        %v722 = vadd.f32 %v630, %v721
        %v723 = vpop.f32.mrb[0].mxu0
        %724 = vmatprep.mubr.f32.mxu0 0.0
        %725 = vmatmul.mubr.f32.gmra.mrb[0].mxu0 %v635
        %v726 = vpop.f32.mrb[0].mxu0
        %v727 = vadd.f32 %v630, %v726
        %v728 = vpop.f32.mrb[0].mxu0
        %729 = vmatprep.mubr.f32.mxu0 0.0
        %730 = vmatmul.mubr.f32.gmra.mrb[0].mxu0 %v638
        %v731 = vpop.f32.mrb[0].mxu0
        %v732 = vadd.f32 %v630, %v731
        %v733 = vpop.f32.mrb[0].mxu0
        %734 = vmatprep.mubr.f32.mxu0 0.0
        %735 = vmatmul.mubr.f32.gmra.mrb[0].mxu0 %v641
        %v736 = vpop.f32.mrb[0].mxu0
        %v737 = vadd.f32 %v630, %v736
        %v738 = vpop.f32.mrb[0].mxu0
        %739 = vmatprep.mubr.f32.mxu0 0.0
        %740 = vmatmul.mubr.f32.gmra.mrb[0].mxu0 %v644
        %v741 = vpop.f32.mrb[0].mxu0
        %v742 = vadd.f32 %v630, %v741
        %v743 = vpop.f32.mrb[0].mxu0
        %744 = vmatprep.mubr.f32.mxu0 0.0
        %745 = vmatmul.mubr.f32.gmra.mrb[0].mxu0 %v647
        %v746 = vpop.f32.mrb[0].mxu0
        %v747 = vadd.f32 %v630, %v746
        %v748 = vpop.f32.mrb[0].mxu0
        %749 = vmatprep.mubr.f32.mxu0 0.0
        %750 = vmatmul.mubr.f32.gmra.mrb[0].mxu0 %v650
        %v751 = vpop.f32.mrb[0].mxu0
        %v752 = vadd.f32 %v630, %v751
        %v753 = vpop.f32.mrb[0].mxu0
        %754 = vmatprep.mubr.f32.mxu0 0.0
        %755 = vmatmul.mubr.f32.gmra.mrb[0].mxu0 %v653
        %v756 = vpop.f32.mrb[0].mxu0
        %v757 = vadd.f32 %v630, %v756
        %v758 = vpop.f32.mrb[0].mxu0
        %759 = vdwg.mxu0
        %v760 = vld [vmem:[%s444] sm:$0xf]
        %v761 = vld [vmem:[%s444 + $0x4] sm:$0xf]
        %v762 = vld [vmem:[%s444 + $0x8] sm:$0xf]
        %v763 = vld [vmem:[%s444 + $0xc] sm:$0xf]
        %v768 = vcombine.low %v760, %v761
        %v769 = vcombine.low %v762, %v763
        %v772 = vsel %vm493, %v768, 0.0
        %773 = vadd.xlane.f32.xlu0 %v772
        %v774 = vpop.xlane.xlu0 %773
        %v775 = vsel %vm493, %v769, 0.0
        %776 = vadd.xlane.f32.xlu0 %v775
        %v777 = vpop.xlane.xlu0 %776
        %v778 = vmul.f32 %v774, %v518
        %v779 = vmul.f32 %v777, %v518
        %v783 = vunpack.c.l.s4 839922192
        %v784 = vunpack.c.0.s8 %v783
        %v785 = vlaneseq
        %v786 = vshrl.u32 %v785, 7
        %v787 = vsub.s32 %v784, %v786
        %v788 = vrot.slane %v778, %v787
        %v790 = vunpack.c.l.s4 1985246804
        %v791 = vunpack.c.0.s8 %v790
        %v792 = vlaneseq
        %v793 = vshrl.u32 %v792, 7
        %v794 = vsub.s32 %v791, %v793
        %v795 = vrot.slane %v778, %v794
        %v797 = vunpack.c.l.s4 839922192
        %v798 = vunpack.c.0.s8 %v797
        %v799 = vlaneseq
        %v800 = vshrl.u32 %v799, 7
        %v801 = vsub.s32 %v798, %v800
        %v802 = vrot.slane %v779, %v801
        %v804 = vunpack.c.l.s4 1985246804
        %v805 = vunpack.c.0.s8 %v804
        %v806 = vlaneseq
        %v807 = vshrl.u32 %v806, 7
        %v808 = vsub.s32 %v805, %v807
        %v809 = vrot.slane %v779, %v808
        %v814 = vsub.f32 %v760, %v788
        %v815 = vsub.f32 %v761, %v795
        %v816 = vsub.f32 %v762, %v802
        %v817 = vsub.f32 %v763, %v809
        %v818 = vmul.f32 %v814, %v814
        %v819 = vmul.f32 %v815, %v815
        %v820 = vmul.f32 %v816, %v816
        %v821 = vmul.f32 %v817, %v817
        %v826 = vcombine.low %v818, %v819
        %v827 = vcombine.low %v820, %v821
        %v830 = vsel %vm493, %v826, 0.0
        %831 = vadd.xlane.f32.xlu0 %v830
        %v832 = vpop.xlane.xlu0 %831
        %v833 = vsel %vm493, %v827, 0.0
        %834 = vadd.xlane.f32.xlu0 %v833
        %v835 = vpop.xlane.xlu0 %834
        %v836 = vmul.f32 %v832, %v518
        %v837 = vmul.f32 %v835, %v518
        %v838 = vadd.f32 %v836, 1e-05
        %v839 = vadd.f32 %v837, 1e-05
        %v840 = vrsqrt.pop %v838
        %v841 = vrsqrt.pop %v839
        %v845 = vunpack.c.l.s4 839922192
        %v846 = vunpack.c.0.s8 %v845
        %v847 = vlaneseq
        %v848 = vshrl.u32 %v847, 7
        %v849 = vsub.s32 %v846, %v848
        %v850 = vrot.slane %v840, %v849
        %v852 = vunpack.c.l.s4 1985246804
        %v853 = vunpack.c.0.s8 %v852
        %v854 = vlaneseq
        %v855 = vshrl.u32 %v854, 7
        %v856 = vsub.s32 %v853, %v855
        %v857 = vrot.slane %v840, %v856
        %v859 = vunpack.c.l.s4 839922192
        %v860 = vunpack.c.0.s8 %v859
        %v861 = vlaneseq
        %v862 = vshrl.u32 %v861, 7
        %v863 = vsub.s32 %v860, %v862
        %v864 = vrot.slane %v841, %v863
        %v866 = vunpack.c.l.s4 1985246804
        %v867 = vunpack.c.0.s8 %v866
        %v868 = vlaneseq
        %v869 = vshrl.u32 %v868, 7
        %v870 = vsub.s32 %v867, %v869
        %v871 = vrot.slane %v841, %v870
        %v876 = vmul.f32 %v814, %v850
        %v877 = vmul.f32 %v815, %v857
        %v878 = vmul.f32 %v816, %v864
        %v879 = vmul.f32 %v817, %v871
        %v881 = vcombine.high %v452, %v452
        %v883 = vmul.f32 %v876, %v452
        %v884 = vmul.f32 %v877, %v881
        %v885 = vmul.f32 %v878, %v452
        %v886 = vmul.f32 %v879, %v881
        %v888 = vcombine.high %v456, %v456
        %v890 = vadd.f32 %v883, %v456
        %v891 = vadd.f32 %v884, %v888
        %v892 = vadd.f32 %v885, %v456
        %v893 = vadd.f32 %v886, %v888
        %v894 = vld [vmem:[#allocation7] sm:$0xff]
        %v895 = vld [vmem:[#allocation7 + $0x8] sm:$0xff]
        %v896 = vld [vmem:[#allocation7 + $0x10] sm:$0xff]
        %v897 = vld [vmem:[#allocation7 + $0x18] sm:$0xff]
        %v902 = vcombine.low %v890, %v891
        %v903 = vcombine.low %v892, %v893
        %v904 = vsel %vm493, %v902, 0
        %v906 = vsel %vm493, %v903, 0
        %908 = vmatprep.subr.mxu0 0.0
        %909 = vmatpush1.msra.mxu0 %v894
        %910 = vmatprep.subr.mxu0 0.0
        %911 = vmatpush1.msra.mxu0 %v895
        %912 = vmatprep.subr.mxu0 0.0
        %913 = vmatpush1.msra.mxu0 %v896
        %914 = vmatprep.subr.mxu0 0.0
        %915 = vmatpush1.msra.mxu0 %v897
        %916 = vmatprep.subr.mxu0 0.0
        %917 = vmatpush1.msra.mxu0 0.0
        %918 = vmatprep.subr.mxu0 0.0
        %919 = vmatpush1.msra.mxu0 0.0
        %920 = vmatprep.subr.mxu0 0.0
        %921 = vmatpush1.msra.mxu0 0.0
        %922 = vmatprep.subr.mxu0 0.0
        %923 = vmatpush1.msra.mxu0 0.0
        %924 = vmatprep.subr.mxu0 0.0
        %925 = vmatpush1.msra.mxu0 0.0
        %926 = vmatprep.subr.mxu0 0.0
        %927 = vmatpush1.msra.mxu0 0.0
        %928 = vmatprep.subr.mxu0 0.0
        %929 = vmatpush1.msra.mxu0 0.0
        %930 = vmatprep.subr.mxu0 0.0
        %931 = vmatpush1.msra.mxu0 0.0
        %932 = vmatprep.subr.mxu0 0.0
        %933 = vmatpush1.msra.mxu0 0.0
        %934 = vmatprep.subr.mxu0 0.0
        %935 = vmatpush1.msra.mxu0 0.0
        %936 = vmatprep.subr.mxu0 0.0
        %937 = vmatpush1.msra.mxu0 0.0
        %938 = vmatprep.subr.mxu0 0.0
        %939 = vmatpush1.msra.mxu0 0.0
        %940 = vmatprep.subr.mxu0 0.0
        %941 = vmatpush1.msra.mxu0 0.0
        %942 = vmatprep.subr.mxu0 0.0
        %943 = vmatpush1.msra.mxu0 0.0
        %944 = vmatprep.subr.mxu0 0.0
        %945 = vmatpush1.msra.mxu0 0.0
        %946 = vmatprep.subr.mxu0 0.0
        %947 = vmatpush1.msra.mxu0 0.0
        %948 = vmatprep.subr.mxu0 0.0
        %949 = vmatpush1.msra.mxu0 0.0
        %950 = vmatprep.subr.mxu0 0.0
        %951 = vmatpush1.msra.mxu0 0.0
        %952 = vmatprep.subr.mxu0 0.0
        %953 = vmatpush1.msra.mxu0 0.0
        %954 = vmatprep.subr.mxu0 0.0
        %955 = vmatpush1.msra.mxu0 0.0
        %956 = vmatprep.subr.mxu0 0.0
        %957 = vmatpush1.msra.mxu0 0.0
        %958 = vmatprep.subr.mxu0 0.0
        %959 = vmatpush1.msra.mxu0 0.0
        %960 = vmatprep.subr.mxu0 0.0
        %961 = vmatpush1.msra.mxu0 0.0
        %962 = vmatprep.subr.mxu0 0.0
        %963 = vmatpush1.msra.mxu0 0.0
        %964 = vmatprep.subr.mxu0 0.0
        %965 = vmatpush1.msra.mxu0 0.0
        %966 = vmatprep.subr.mxu0 0.0
        %967 = vmatpush1.msra.mxu0 0.0
        %968 = vmatprep.subr.mxu0 0.0
        %969 = vmatpush1.msra.mxu0 0.0
        %970 = vmatprep.subr.mxu0 0.0
        %971 = vmatpush1.msra.mxu0 0.0
        %972 = vmatprep.mubr.f32.mxu0 0.0
        %973 = vmatmul.mubr.f32.gmra.mrb[0].mxu0 %v904
        %v974 = vpop.f32.mrb[0].mxu0
        %v975 = vadd.f32 %v468, %v974
        %v976 = vpop.f32.mrb[0].mxu0
        %977 = vmatprep.mubr.f32.mxu0 0.0
        %978 = vmatmul.mubr.f32.gmra.mrb[0].mxu0 %v906
        %v979 = vpop.f32.mrb[0].mxu0
        %v980 = vadd.f32 %v468, %v979
        %v981 = vpop.f32.mrb[0].mxu0
        %982 = vdwg.mxu0
        %v985 = vcombine.high %v975, %v975
        %v986 = vcombine.high %v980, %v980
        %v987 = vsel %vm493, %v975, 0
        %v990 = vsel %vm493, %v722, 0
        %v993 = vsel %vm493, %v727, 0
        %995 = vmatprep.subr.mxu0 0.0
        %996 = vmatpush1.xpose.msra.mxu0 %v990
        %997 = vmatprep.subr.mxu0 0.0
        %998 = vmatpush1.xpose.msra.mxu0 %v993
        %999 = vmatprep.subr.mxu0 0.0
        %1000 = vmatpush1.xpose.msra.mxu0 0.0
        %1001 = vmatprep.subr.mxu0 0.0
        %1002 = vmatpush1.xpose.msra.mxu0 0.0
        %1003 = vmatprep.subr.mxu0 0.0
        %1004 = vmatpush1.xpose.msra.mxu0 0.0
        %1005 = vmatprep.subr.mxu0 0.0
        %1006 = vmatpush1.xpose.msra.mxu0 0.0
        %1007 = vmatprep.subr.mxu0 0.0
        %1008 = vmatpush1.xpose.msra.mxu0 0.0
        %1009 = vmatprep.subr.mxu0 0.0
        %1010 = vmatpush1.xpose.msra.mxu0 0.0
        %1011 = vmatprep.subr.mxu0 0.0
        %1012 = vmatpush1.xpose.msra.mxu0 0.0
        %1013 = vmatprep.subr.mxu0 0.0
        %1014 = vmatpush1.xpose.msra.mxu0 0.0
        %1015 = vmatprep.subr.mxu0 0.0
        %1016 = vmatpush1.xpose.msra.mxu0 0.0
        %1017 = vmatprep.subr.mxu0 0.0
        %1018 = vmatpush1.xpose.msra.mxu0 0.0
        %1019 = vmatprep.subr.mxu0 0.0
        %1020 = vmatpush1.xpose.msra.mxu0 0.0
        %1021 = vmatprep.subr.mxu0 0.0
        %1022 = vmatpush1.xpose.msra.mxu0 0.0
        %1023 = vmatprep.subr.mxu0 0.0
        %1024 = vmatpush1.xpose.msra.mxu0 0.0
        %1025 = vmatprep.subr.mxu0 0.0
        %1026 = vmatpush1.xpose.msra.mxu0 0.0
        %1027 = vmatprep.subr.mxu0 0.0
        %1028 = vmatpush1.xpose.msra.mxu0 0.0
        %1029 = vmatprep.subr.mxu0 0.0
        %1030 = vmatpush1.xpose.msra.mxu0 0.0
        %1031 = vmatprep.subr.mxu0 0.0
        %1032 = vmatpush1.xpose.msra.mxu0 0.0
        %1033 = vmatprep.subr.mxu0 0.0
        %1034 = vmatpush1.xpose.msra.mxu0 0.0
        %1035 = vmatprep.subr.mxu0 0.0
        %1036 = vmatpush1.xpose.msra.mxu0 0.0
        %1037 = vmatprep.subr.mxu0 0.0
        %1038 = vmatpush1.xpose.msra.mxu0 0.0
        %1039 = vmatprep.subr.mxu0 0.0
        %1040 = vmatpush1.xpose.msra.mxu0 0.0
        %1041 = vmatprep.subr.mxu0 0.0
        %1042 = vmatpush1.xpose.msra.mxu0 0.0
        %1043 = vmatprep.subr.mxu0 0.0
        %1044 = vmatpush1.xpose.msra.mxu0 0.0
        %1045 = vmatprep.subr.mxu0 0.0
        %1046 = vmatpush1.xpose.msra.mxu0 0.0
        %1047 = vmatprep.subr.mxu0 0.0
        %1048 = vmatpush1.xpose.msra.mxu0 0.0
        %1049 = vmatprep.subr.mxu0 0.0
        %1050 = vmatpush1.xpose.msra.mxu0 0.0
        %1051 = vmatprep.subr.mxu0 0.0
        %1052 = vmatpush1.xpose.msra.mxu0 0.0
        %1053 = vmatprep.subr.mxu0 0.0
        %1054 = vmatpush1.xpose.msra.mxu0 0.0
        %1055 = vmatprep.subr.mxu0 0.0
        %1056 = vmatpush1.xpose.msra.mxu0 0.0
        %1057 = vmatprep.subr.mxu0 0.0
        %1058 = vmatpush1.xpose.msra.mxu0 0.0
        %1059 = vmatprep.mubr.f32.mxu0 0.0
        %1060 = vmatmul.mubr.f32.gmra.mrb[0].mxu0 %v987
        %v1061 = vpop.f32.mrb[0].mxu0
        %v1062 = vadd.f32 0.0, %v1061
        %v1063 = vpop.f32.mrb[0].mxu0
        %1064 = vdwg.mxu0
        %v1065 = vsel %vm493, %v985, 0
        %v1068 = vsel %vm493, %v732, 0
        %v1071 = vsel %vm493, %v737, 0
        %1073 = vmatprep.subr.mxu0 0.0
        %1074 = vmatpush1.xpose.msra.mxu0 %v1068
        %1075 = vmatprep.subr.mxu0 0.0
        %1076 = vmatpush1.xpose.msra.mxu0 %v1071
        %1077 = vmatprep.subr.mxu0 0.0
        %1078 = vmatpush1.xpose.msra.mxu0 0.0
        %1079 = vmatprep.subr.mxu0 0.0
        %1080 = vmatpush1.xpose.msra.mxu0 0.0
        %1081 = vmatprep.subr.mxu0 0.0
        %1082 = vmatpush1.xpose.msra.mxu0 0.0
        %1083 = vmatprep.subr.mxu0 0.0
        %1084 = vmatpush1.xpose.msra.mxu0 0.0
        %1085 = vmatprep.subr.mxu0 0.0
        %1086 = vmatpush1.xpose.msra.mxu0 0.0
        %1087 = vmatprep.subr.mxu0 0.0
        %1088 = vmatpush1.xpose.msra.mxu0 0.0
        %1089 = vmatprep.subr.mxu0 0.0
        %1090 = vmatpush1.xpose.msra.mxu0 0.0
        %1091 = vmatprep.subr.mxu0 0.0
        %1092 = vmatpush1.xpose.msra.mxu0 0.0
        %1093 = vmatprep.subr.mxu0 0.0
        %1094 = vmatpush1.xpose.msra.mxu0 0.0
        %1095 = vmatprep.subr.mxu0 0.0
        %1096 = vmatpush1.xpose.msra.mxu0 0.0
        %1097 = vmatprep.subr.mxu0 0.0
        %1098 = vmatpush1.xpose.msra.mxu0 0.0
        %1099 = vmatprep.subr.mxu0 0.0
        %1100 = vmatpush1.xpose.msra.mxu0 0.0
        %1101 = vmatprep.subr.mxu0 0.0
        %1102 = vmatpush1.xpose.msra.mxu0 0.0
        %1103 = vmatprep.subr.mxu0 0.0
        %1104 = vmatpush1.xpose.msra.mxu0 0.0
        %1105 = vmatprep.subr.mxu0 0.0
        %1106 = vmatpush1.xpose.msra.mxu0 0.0
        %1107 = vmatprep.subr.mxu0 0.0
        %1108 = vmatpush1.xpose.msra.mxu0 0.0
        %1109 = vmatprep.subr.mxu0 0.0
        %1110 = vmatpush1.xpose.msra.mxu0 0.0
        %1111 = vmatprep.subr.mxu0 0.0
        %1112 = vmatpush1.xpose.msra.mxu0 0.0
        %1113 = vmatprep.subr.mxu0 0.0
        %1114 = vmatpush1.xpose.msra.mxu0 0.0
        %1115 = vmatprep.subr.mxu0 0.0
        %1116 = vmatpush1.xpose.msra.mxu0 0.0
        %1117 = vmatprep.subr.mxu0 0.0
        %1118 = vmatpush1.xpose.msra.mxu0 0.0
        %1119 = vmatprep.subr.mxu0 0.0
        %1120 = vmatpush1.xpose.msra.mxu0 0.0
        %1121 = vmatprep.subr.mxu0 0.0
        %1122 = vmatpush1.xpose.msra.mxu0 0.0
        %1123 = vmatprep.subr.mxu0 0.0
        %1124 = vmatpush1.xpose.msra.mxu0 0.0
        %1125 = vmatprep.subr.mxu0 0.0
        %1126 = vmatpush1.xpose.msra.mxu0 0.0
        %1127 = vmatprep.subr.mxu0 0.0
        %1128 = vmatpush1.xpose.msra.mxu0 0.0
        %1129 = vmatprep.subr.mxu0 0.0
        %1130 = vmatpush1.xpose.msra.mxu0 0.0
        %1131 = vmatprep.subr.mxu0 0.0
        %1132 = vmatpush1.xpose.msra.mxu0 0.0
        %1133 = vmatprep.subr.mxu0 0.0
        %1134 = vmatpush1.xpose.msra.mxu0 0.0
        %1135 = vmatprep.subr.mxu0 0.0
        %1136 = vmatpush1.xpose.msra.mxu0 0.0
        %1137 = vmatprep.mubr.f32.mxu0 0.0
        %1138 = vmatmul.mubr.f32.gmra.mrb[0].mxu0 %v1065
        %v1139 = vpop.f32.mrb[0].mxu0
        %v1140 = vadd.f32 0.0, %v1139
        %v1141 = vpop.f32.mrb[0].mxu0
        %1142 = vdwg.mxu0
        %v1143 = vsel %vm493, %v980, 0
        %v1146 = vsel %vm493, %v742, 0
        %v1149 = vsel %vm493, %v747, 0
        %1151 = vmatprep.subr.mxu0 0.0
        %1152 = vmatpush1.xpose.msra.mxu0 %v1146
        %1153 = vmatprep.subr.mxu0 0.0
        %1154 = vmatpush1.xpose.msra.mxu0 %v1149
        %1155 = vmatprep.subr.mxu0 0.0
        %1156 = vmatpush1.xpose.msra.mxu0 0.0
        %1157 = vmatprep.subr.mxu0 0.0
        %1158 = vmatpush1.xpose.msra.mxu0 0.0
        %1159 = vmatprep.subr.mxu0 0.0
        %1160 = vmatpush1.xpose.msra.mxu0 0.0
        %1161 = vmatprep.subr.mxu0 0.0
        %1162 = vmatpush1.xpose.msra.mxu0 0.0
        %1163 = vmatprep.subr.mxu0 0.0
        %1164 = vmatpush1.xpose.msra.mxu0 0.0
        %1165 = vmatprep.subr.mxu0 0.0
        %1166 = vmatpush1.xpose.msra.mxu0 0.0
        %1167 = vmatprep.subr.mxu0 0.0
        %1168 = vmatpush1.xpose.msra.mxu0 0.0
        %1169 = vmatprep.subr.mxu0 0.0
        %1170 = vmatpush1.xpose.msra.mxu0 0.0
        %1171 = vmatprep.subr.mxu0 0.0
        %1172 = vmatpush1.xpose.msra.mxu0 0.0
        %1173 = vmatprep.subr.mxu0 0.0
        %1174 = vmatpush1.xpose.msra.mxu0 0.0
        %1175 = vmatprep.subr.mxu0 0.0
        %1176 = vmatpush1.xpose.msra.mxu0 0.0
        %1177 = vmatprep.subr.mxu0 0.0
        %1178 = vmatpush1.xpose.msra.mxu0 0.0
        %1179 = vmatprep.subr.mxu0 0.0
        %1180 = vmatpush1.xpose.msra.mxu0 0.0
        %1181 = vmatprep.subr.mxu0 0.0
        %1182 = vmatpush1.xpose.msra.mxu0 0.0
        %1183 = vmatprep.subr.mxu0 0.0
        %1184 = vmatpush1.xpose.msra.mxu0 0.0
        %1185 = vmatprep.subr.mxu0 0.0
        %1186 = vmatpush1.xpose.msra.mxu0 0.0
        %1187 = vmatprep.subr.mxu0 0.0
        %1188 = vmatpush1.xpose.msra.mxu0 0.0
        %1189 = vmatprep.subr.mxu0 0.0
        %1190 = vmatpush1.xpose.msra.mxu0 0.0
        %1191 = vmatprep.subr.mxu0 0.0
        %1192 = vmatpush1.xpose.msra.mxu0 0.0
        %1193 = vmatprep.subr.mxu0 0.0
        %1194 = vmatpush1.xpose.msra.mxu0 0.0
        %1195 = vmatprep.subr.mxu0 0.0
        %1196 = vmatpush1.xpose.msra.mxu0 0.0
        %1197 = vmatprep.subr.mxu0 0.0
        %1198 = vmatpush1.xpose.msra.mxu0 0.0
        %1199 = vmatprep.subr.mxu0 0.0
        %1200 = vmatpush1.xpose.msra.mxu0 0.0
        %1201 = vmatprep.subr.mxu0 0.0
        %1202 = vmatpush1.xpose.msra.mxu0 0.0
        %1203 = vmatprep.subr.mxu0 0.0
        %1204 = vmatpush1.xpose.msra.mxu0 0.0
        %1205 = vmatprep.subr.mxu0 0.0
        %1206 = vmatpush1.xpose.msra.mxu0 0.0
        %1207 = vmatprep.subr.mxu0 0.0
        %1208 = vmatpush1.xpose.msra.mxu0 0.0
        %1209 = vmatprep.subr.mxu0 0.0
        %1210 = vmatpush1.xpose.msra.mxu0 0.0
        %1211 = vmatprep.subr.mxu0 0.0
        %1212 = vmatpush1.xpose.msra.mxu0 0.0
        %1213 = vmatprep.subr.mxu0 0.0
        %1214 = vmatpush1.xpose.msra.mxu0 0.0
        %1215 = vmatprep.mubr.f32.mxu0 0.0
        %1216 = vmatmul.mubr.f32.gmra.mrb[0].mxu0 %v1143
        %v1217 = vpop.f32.mrb[0].mxu0
        %v1218 = vadd.f32 0.0, %v1217
        %v1219 = vpop.f32.mrb[0].mxu0
        %1220 = vdwg.mxu0
        %v1221 = vsel %vm493, %v986, 0
        %v1224 = vsel %vm493, %v752, 0
        %v1227 = vsel %vm493, %v757, 0
        %1229 = vmatprep.subr.mxu0 0.0
        %1230 = vmatpush1.xpose.msra.mxu0 %v1224
        %1231 = vmatprep.subr.mxu0 0.0
        %1232 = vmatpush1.xpose.msra.mxu0 %v1227
        %1233 = vmatprep.subr.mxu0 0.0
        %1234 = vmatpush1.xpose.msra.mxu0 0.0
        %1235 = vmatprep.subr.mxu0 0.0
        %1236 = vmatpush1.xpose.msra.mxu0 0.0
        %1237 = vmatprep.subr.mxu0 0.0
        %1238 = vmatpush1.xpose.msra.mxu0 0.0
        %1239 = vmatprep.subr.mxu0 0.0
        %1240 = vmatpush1.xpose.msra.mxu0 0.0
        %1241 = vmatprep.subr.mxu0 0.0
        %1242 = vmatpush1.xpose.msra.mxu0 0.0
        %1243 = vmatprep.subr.mxu0 0.0
        %1244 = vmatpush1.xpose.msra.mxu0 0.0
        %1245 = vmatprep.subr.mxu0 0.0
        %1246 = vmatpush1.xpose.msra.mxu0 0.0
        %1247 = vmatprep.subr.mxu0 0.0
        %1248 = vmatpush1.xpose.msra.mxu0 0.0
        %1249 = vmatprep.subr.mxu0 0.0
        %1250 = vmatpush1.xpose.msra.mxu0 0.0
        %1251 = vmatprep.subr.mxu0 0.0
        %1252 = vmatpush1.xpose.msra.mxu0 0.0
        %1253 = vmatprep.subr.mxu0 0.0
        %1254 = vmatpush1.xpose.msra.mxu0 0.0
        %1255 = vmatprep.subr.mxu0 0.0
        %1256 = vmatpush1.xpose.msra.mxu0 0.0
        %1257 = vmatprep.subr.mxu0 0.0
        %1258 = vmatpush1.xpose.msra.mxu0 0.0
        %1259 = vmatprep.subr.mxu0 0.0
        %1260 = vmatpush1.xpose.msra.mxu0 0.0
        %1261 = vmatprep.subr.mxu0 0.0
        %1262 = vmatpush1.xpose.msra.mxu0 0.0
        %1263 = vmatprep.subr.mxu0 0.0
        %1264 = vmatpush1.xpose.msra.mxu0 0.0
        %1265 = vmatprep.subr.mxu0 0.0
        %1266 = vmatpush1.xpose.msra.mxu0 0.0
        %1267 = vmatprep.subr.mxu0 0.0
        %1268 = vmatpush1.xpose.msra.mxu0 0.0
        %1269 = vmatprep.subr.mxu0 0.0
        %1270 = vmatpush1.xpose.msra.mxu0 0.0
        %1271 = vmatprep.subr.mxu0 0.0
        %1272 = vmatpush1.xpose.msra.mxu0 0.0
        %1273 = vmatprep.subr.mxu0 0.0
        %1274 = vmatpush1.xpose.msra.mxu0 0.0
        %1275 = vmatprep.subr.mxu0 0.0
        %1276 = vmatpush1.xpose.msra.mxu0 0.0
        %1277 = vmatprep.subr.mxu0 0.0
        %1278 = vmatpush1.xpose.msra.mxu0 0.0
        %1279 = vmatprep.subr.mxu0 0.0
        %1280 = vmatpush1.xpose.msra.mxu0 0.0
        %1281 = vmatprep.subr.mxu0 0.0
        %1282 = vmatpush1.xpose.msra.mxu0 0.0
        %1283 = vmatprep.subr.mxu0 0.0
        %1284 = vmatpush1.xpose.msra.mxu0 0.0
        %1285 = vmatprep.subr.mxu0 0.0
        %1286 = vmatpush1.xpose.msra.mxu0 0.0
        %1287 = vmatprep.subr.mxu0 0.0
        %1288 = vmatpush1.xpose.msra.mxu0 0.0
        %1289 = vmatprep.subr.mxu0 0.0
        %1290 = vmatpush1.xpose.msra.mxu0 0.0
        %1291 = vmatprep.subr.mxu0 0.0
        %1292 = vmatpush1.xpose.msra.mxu0 0.0
        %1293 = vmatprep.mubr.f32.mxu0 0.0
        %1294 = vmatmul.mubr.f32.gmra.mrb[0].mxu0 %v1221
        %v1295 = vpop.f32.mrb[0].mxu0
        %v1296 = vadd.f32 0.0, %v1295
        %v1297 = vpop.f32.mrb[0].mxu0
        %1298 = vdwg.mxu0
        %v1299 = vmul.f32 %v1062, 0.17677669
        %v1300 = vmul.f32 %v1140, 0.17677669
        %v1301 = vmul.f32 %v1218, 0.17677669
        %v1302 = vmul.f32 %v1296, 0.17677669
        %vm1303 = vcmask 125952
        %v1304 = vsel %vm1303, %v1299, -inf
        %v1305 = vrot.slane %v1304, 4
        %v1306 = vmax.f32 %v1304, %v1305
        %v1307 = vrot.slane %v1306, 2
        %v1308 = vmax.f32 %v1306, %v1307
        %v1309 = vrot.slane %v1308, 1
        %v1310 = vmax.f32 %v1308, %v1309
        %v1311 = vsel %vm1303, %v1300, -inf
        %v1312 = vrot.slane %v1311, 4
        %v1313 = vmax.f32 %v1311, %v1312
        %v1314 = vrot.slane %v1313, 2
        %v1315 = vmax.f32 %v1313, %v1314
        %v1316 = vrot.slane %v1315, 1
        %v1317 = vmax.f32 %v1315, %v1316
        %v1318 = vsel %vm1303, %v1301, -inf
        %v1319 = vrot.slane %v1318, 4
        %v1320 = vmax.f32 %v1318, %v1319
        %v1321 = vrot.slane %v1320, 2
        %v1322 = vmax.f32 %v1320, %v1321
        %v1323 = vrot.slane %v1322, 1
        %v1324 = vmax.f32 %v1322, %v1323
        %v1325 = vsel %vm1303, %v1302, -inf
        %v1326 = vrot.slane %v1325, 4
        %v1327 = vmax.f32 %v1325, %v1326
        %v1328 = vrot.slane %v1327, 2
        %v1329 = vmax.f32 %v1327, %v1328
        %v1330 = vrot.slane %v1329, 1
        %v1331 = vmax.f32 %v1329, %v1330
        %v1332 = vsub.f32 %v1299, %v1310
        %v1333 = vsub.f32 %v1300, %v1317
        %v1334 = vsub.f32 %v1301, %v1324
        %v1335 = vsub.f32 %v1302, %v1331
        %v1336 = vmul.f32 %v1332, 1.442695
        %v1337 = vpow.pop %v1336
        %v1338 = vmul.f32 %v1333, 1.442695
        %v1339 = vpow.pop %v1338
        %v1340 = vmul.f32 %v1334, 1.442695
        %v1341 = vpow.pop %v1340
        %v1342 = vmul.f32 %v1335, 1.442695
        %v1343 = vpow.pop %v1342
        %v1344 = vsel %vm1303, %v1337, 0.0
        %v1345 = vrot.slane %v1344, 4
        %v1346 = vadd.f32 %v1344, %v1345
        %v1347 = vrot.slane %v1346, 2
        %v1348 = vadd.f32 %v1346, %v1347
        %v1349 = vrot.slane %v1348, 1
        %v1350 = vadd.f32 %v1348, %v1349
        %v1351 = vsel %vm1303, %v1339, 0.0
        %v1352 = vrot.slane %v1351, 4
        %v1353 = vadd.f32 %v1351, %v1352
        %v1354 = vrot.slane %v1353, 2
        %v1355 = vadd.f32 %v1353, %v1354
        %v1356 = vrot.slane %v1355, 1
        %v1357 = vadd.f32 %v1355, %v1356
        %v1358 = vsel %vm1303, %v1341, 0.0
        %v1359 = vrot.slane %v1358, 4
        %v1360 = vadd.f32 %v1358, %v1359
        %v1361 = vrot.slane %v1360, 2
        %v1362 = vadd.f32 %v1360, %v1361
        %v1363 = vrot.slane %v1362, 1
        %v1364 = vadd.f32 %v1362, %v1363
        %v1365 = vsel %vm1303, %v1343, 0.0
        %v1366 = vrot.slane %v1365, 4
        %v1367 = vadd.f32 %v1365, %v1366
        %v1368 = vrot.slane %v1367, 2
        %v1369 = vadd.f32 %v1367, %v1368
        %v1370 = vrot.slane %v1369, 1
        %v1371 = vadd.f32 %v1369, %v1370
        %v1372 = vrcp.pop %v1350
        %v1373 = vrcp.pop %v1357
        %v1374 = vrcp.pop %v1364
        %v1375 = vrcp.pop %v1371
        %v1376 = vmul.f32 %v1337, %v1372
        %v1377 = vmul.f32 %v1339, %v1373
        %v1378 = vmul.f32 %v1341, %v1374
        %v1379 = vmul.f32 %v1343, %v1375
        %v1380 = vadd.f32 %v1376, 1e-08
        %v1381 = vadd.f32 %v1377, 1e-08
        %v1382 = vadd.f32 %v1378, 1e-08
        %v1383 = vadd.f32 %v1379, 1e-08
        %v1384 = vsel %vm1303, %v1380, 0.0
        %1385 = vadd.xlane.f32.xlu0 %v1384
        %v1386 = vpop.xlane.xlu0 %1385
        %v1387 = vsel %vm1303, %v1381, 0.0
        %1388 = vadd.xlane.f32.xlu0 %v1387
        %v1389 = vpop.xlane.xlu0 %1388
        %v1390 = vsel %vm1303, %v1382, 0.0
        %1391 = vadd.xlane.f32.xlu0 %v1390
        %v1392 = vpop.xlane.xlu0 %1391
        %v1393 = vsel %vm1303, %v1383, 0.0
        %1394 = vadd.xlane.f32.xlu0 %v1393
        %v1395 = vpop.xlane.xlu0 %1394
        %v1396 = vrcp.pop %v1386
        %v1397 = vrcp.pop %v1389
        %v1398 = vrcp.pop %v1392
        %v1399 = vrcp.pop %v1395
        %v1400 = vmul.f32 %v1380, %v1396
        %v1401 = vmul.f32 %v1381, %v1397
        %v1402 = vmul.f32 %v1382, %v1398
        %v1403 = vmul.f32 %v1383, %v1399
        %1404 = vrot.lane.b32.xlu0 %v722, 96
        %v1405 = vpop.permute.xlu0 %1404
        %1406 = vrot.lane.b32.xlu0 %v727, 96
        %v1407 = vpop.permute.xlu0 %1406
        %vm1410 = vcmask 130048
        %v1412 = vsel %vm1410, %v1400, 0
        %1414 = vmatprep.subr.mxu0 0.0
        %1415 = vmatpush1.msra.mxu0 %v1405
        %1416 = vmatprep.subr.mxu0 0.0
        %1417 = vmatpush1.msra.mxu0 %v1407
        %1418 = vmatprep.subr.mxu0 0.0
        %1419 = vmatpush1.msra.mxu0 0.0
        %1420 = vmatprep.subr.mxu0 0.0
        %1421 = vmatpush1.msra.mxu0 0.0
        %1422 = vmatprep.subr.mxu0 0.0
        %1423 = vmatpush1.msra.mxu0 0.0
        %1424 = vmatprep.subr.mxu0 0.0
        %1425 = vmatpush1.msra.mxu0 0.0
        %1426 = vmatprep.subr.mxu0 0.0
        %1427 = vmatpush1.msra.mxu0 0.0
        %1428 = vmatprep.subr.mxu0 0.0
        %1429 = vmatpush1.msra.mxu0 0.0
        %1430 = vmatprep.subr.mxu0 0.0
        %1431 = vmatpush1.msra.mxu0 0.0
        %1432 = vmatprep.subr.mxu0 0.0
        %1433 = vmatpush1.msra.mxu0 0.0
        %1434 = vmatprep.subr.mxu0 0.0
        %1435 = vmatpush1.msra.mxu0 0.0
        %1436 = vmatprep.subr.mxu0 0.0
        %1437 = vmatpush1.msra.mxu0 0.0
        %1438 = vmatprep.subr.mxu0 0.0
        %1439 = vmatpush1.msra.mxu0 0.0
        %1440 = vmatprep.subr.mxu0 0.0
        %1441 = vmatpush1.msra.mxu0 0.0
        %1442 = vmatprep.subr.mxu0 0.0
        %1443 = vmatpush1.msra.mxu0 0.0
        %1444 = vmatprep.subr.mxu0 0.0
        %1445 = vmatpush1.msra.mxu0 0.0
        %1446 = vmatprep.subr.mxu0 0.0
        %1447 = vmatpush1.msra.mxu0 0.0
        %1448 = vmatprep.subr.mxu0 0.0
        %1449 = vmatpush1.msra.mxu0 0.0
        %1450 = vmatprep.subr.mxu0 0.0
        %1451 = vmatpush1.msra.mxu0 0.0
        %1452 = vmatprep.subr.mxu0 0.0
        %1453 = vmatpush1.msra.mxu0 0.0
        %1454 = vmatprep.subr.mxu0 0.0
        %1455 = vmatpush1.msra.mxu0 0.0
        %1456 = vmatprep.subr.mxu0 0.0
        %1457 = vmatpush1.msra.mxu0 0.0
        %1458 = vmatprep.subr.mxu0 0.0
        %1459 = vmatpush1.msra.mxu0 0.0
        %1460 = vmatprep.subr.mxu0 0.0
        %1461 = vmatpush1.msra.mxu0 0.0
        %1462 = vmatprep.subr.mxu0 0.0
        %1463 = vmatpush1.msra.mxu0 0.0
        %1464 = vmatprep.subr.mxu0 0.0
        %1465 = vmatpush1.msra.mxu0 0.0
        %1466 = vmatprep.subr.mxu0 0.0
        %1467 = vmatpush1.msra.mxu0 0.0
        %1468 = vmatprep.subr.mxu0 0.0
        %1469 = vmatpush1.msra.mxu0 0.0
        %1470 = vmatprep.subr.mxu0 0.0
        %1471 = vmatpush1.msra.mxu0 0.0
        %1472 = vmatprep.subr.mxu0 0.0
        %1473 = vmatpush1.msra.mxu0 0.0
        %1474 = vmatprep.subr.mxu0 0.0
        %1475 = vmatpush1.msra.mxu0 0.0
        %1476 = vmatprep.subr.mxu0 0.0
        %1477 = vmatpush1.msra.mxu0 0.0
        %1478 = vmatprep.mubr.f32.mxu0 0.0
        %1479 = vmatmul.mubr.f32.gmra.mrb[0].mxu0 %v1412
        %v1480 = vpop.f32.mrb[0].mxu0
        %v1481 = vadd.f32 0.0, %v1480
        %v1482 = vpop.f32.mrb[0].mxu0
        %1483 = vdwg.mxu0
        %1484 = vrot.lane.b32.xlu0 %v732, 96
        %v1485 = vpop.permute.xlu0 %1484
        %1486 = vrot.lane.b32.xlu0 %v737, 96
        %v1487 = vpop.permute.xlu0 %1486
        %v1491 = vsel %vm1410, %v1401, 0
        %1493 = vmatprep.subr.mxu0 0.0
        %1494 = vmatpush1.msra.mxu0 %v1485
        %1495 = vmatprep.subr.mxu0 0.0
        %1496 = vmatpush1.msra.mxu0 %v1487
        %1497 = vmatprep.subr.mxu0 0.0
        %1498 = vmatpush1.msra.mxu0 0.0
        %1499 = vmatprep.subr.mxu0 0.0
        %1500 = vmatpush1.msra.mxu0 0.0
        %1501 = vmatprep.subr.mxu0 0.0
        %1502 = vmatpush1.msra.mxu0 0.0
        %1503 = vmatprep.subr.mxu0 0.0
        %1504 = vmatpush1.msra.mxu0 0.0
        %1505 = vmatprep.subr.mxu0 0.0
        %1506 = vmatpush1.msra.mxu0 0.0
        %1507 = vmatprep.subr.mxu0 0.0
        %1508 = vmatpush1.msra.mxu0 0.0
        %1509 = vmatprep.subr.mxu0 0.0
        %1510 = vmatpush1.msra.mxu0 0.0
        %1511 = vmatprep.subr.mxu0 0.0
        %1512 = vmatpush1.msra.mxu0 0.0
        %1513 = vmatprep.subr.mxu0 0.0
        %1514 = vmatpush1.msra.mxu0 0.0
        %1515 = vmatprep.subr.mxu0 0.0
        %1516 = vmatpush1.msra.mxu0 0.0
        %1517 = vmatprep.subr.mxu0 0.0
        %1518 = vmatpush1.msra.mxu0 0.0
        %1519 = vmatprep.subr.mxu0 0.0
        %1520 = vmatpush1.msra.mxu0 0.0
        %1521 = vmatprep.subr.mxu0 0.0
        %1522 = vmatpush1.msra.mxu0 0.0
        %1523 = vmatprep.subr.mxu0 0.0
        %1524 = vmatpush1.msra.mxu0 0.0
        %1525 = vmatprep.subr.mxu0 0.0
        %1526 = vmatpush1.msra.mxu0 0.0
        %1527 = vmatprep.subr.mxu0 0.0
        %1528 = vmatpush1.msra.mxu0 0.0
        %1529 = vmatprep.subr.mxu0 0.0
        %1530 = vmatpush1.msra.mxu0 0.0
        %1531 = vmatprep.subr.mxu0 0.0
        %1532 = vmatpush1.msra.mxu0 0.0
        %1533 = vmatprep.subr.mxu0 0.0
        %1534 = vmatpush1.msra.mxu0 0.0
        %1535 = vmatprep.subr.mxu0 0.0
        %1536 = vmatpush1.msra.mxu0 0.0
        %1537 = vmatprep.subr.mxu0 0.0
        %1538 = vmatpush1.msra.mxu0 0.0
        %1539 = vmatprep.subr.mxu0 0.0
        %1540 = vmatpush1.msra.mxu0 0.0
        %1541 = vmatprep.subr.mxu0 0.0
        %1542 = vmatpush1.msra.mxu0 0.0
        %1543 = vmatprep.subr.mxu0 0.0
        %1544 = vmatpush1.msra.mxu0 0.0
        %1545 = vmatprep.subr.mxu0 0.0
        %1546 = vmatpush1.msra.mxu0 0.0
        %1547 = vmatprep.subr.mxu0 0.0
        %1548 = vmatpush1.msra.mxu0 0.0
        %1549 = vmatprep.subr.mxu0 0.0
        %1550 = vmatpush1.msra.mxu0 0.0
        %1551 = vmatprep.subr.mxu0 0.0
        %1552 = vmatpush1.msra.mxu0 0.0
        %1553 = vmatprep.subr.mxu0 0.0
        %1554 = vmatpush1.msra.mxu0 0.0
        %1555 = vmatprep.subr.mxu0 0.0
        %1556 = vmatpush1.msra.mxu0 0.0
        %1557 = vmatprep.mubr.f32.mxu0 0.0
        %1558 = vmatmul.mubr.f32.gmra.mrb[0].mxu0 %v1491
        %v1559 = vpop.f32.mrb[0].mxu0
        %v1560 = vadd.f32 0.0, %v1559
        %v1561 = vpop.f32.mrb[0].mxu0
        %1562 = vdwg.mxu0
        %1563 = vrot.lane.b32.xlu0 %v742, 96
        %v1564 = vpop.permute.xlu0 %1563
        %1565 = vrot.lane.b32.xlu0 %v747, 96
        %v1566 = vpop.permute.xlu0 %1565
        %v1570 = vsel %vm1410, %v1402, 0
        %1572 = vmatprep.subr.mxu0 0.0
        %1573 = vmatpush1.msra.mxu0 %v1564
        %1574 = vmatprep.subr.mxu0 0.0
        %1575 = vmatpush1.msra.mxu0 %v1566
        %1576 = vmatprep.subr.mxu0 0.0
        %1577 = vmatpush1.msra.mxu0 0.0
        %1578 = vmatprep.subr.mxu0 0.0
        %1579 = vmatpush1.msra.mxu0 0.0
        %1580 = vmatprep.subr.mxu0 0.0
        %1581 = vmatpush1.msra.mxu0 0.0
        %1582 = vmatprep.subr.mxu0 0.0
        %1583 = vmatpush1.msra.mxu0 0.0
        %1584 = vmatprep.subr.mxu0 0.0
        %1585 = vmatpush1.msra.mxu0 0.0
        %1586 = vmatprep.subr.mxu0 0.0
        %1587 = vmatpush1.msra.mxu0 0.0
        %1588 = vmatprep.subr.mxu0 0.0
        %1589 = vmatpush1.msra.mxu0 0.0
        %1590 = vmatprep.subr.mxu0 0.0
        %1591 = vmatpush1.msra.mxu0 0.0
        %1592 = vmatprep.subr.mxu0 0.0
        %1593 = vmatpush1.msra.mxu0 0.0
        %1594 = vmatprep.subr.mxu0 0.0
        %1595 = vmatpush1.msra.mxu0 0.0
        %1596 = vmatprep.subr.mxu0 0.0
        %1597 = vmatpush1.msra.mxu0 0.0
        %1598 = vmatprep.subr.mxu0 0.0
        %1599 = vmatpush1.msra.mxu0 0.0
        %1600 = vmatprep.subr.mxu0 0.0
        %1601 = vmatpush1.msra.mxu0 0.0
        %1602 = vmatprep.subr.mxu0 0.0
        %1603 = vmatpush1.msra.mxu0 0.0
        %1604 = vmatprep.subr.mxu0 0.0
        %1605 = vmatpush1.msra.mxu0 0.0
        %1606 = vmatprep.subr.mxu0 0.0
        %1607 = vmatpush1.msra.mxu0 0.0
        %1608 = vmatprep.subr.mxu0 0.0
        %1609 = vmatpush1.msra.mxu0 0.0
        %1610 = vmatprep.subr.mxu0 0.0
        %1611 = vmatpush1.msra.mxu0 0.0
        %1612 = vmatprep.subr.mxu0 0.0
        %1613 = vmatpush1.msra.mxu0 0.0
        %1614 = vmatprep.subr.mxu0 0.0
        %1615 = vmatpush1.msra.mxu0 0.0
        %1616 = vmatprep.subr.mxu0 0.0
        %1617 = vmatpush1.msra.mxu0 0.0
        %1618 = vmatprep.subr.mxu0 0.0
        %1619 = vmatpush1.msra.mxu0 0.0
        %1620 = vmatprep.subr.mxu0 0.0
        %1621 = vmatpush1.msra.mxu0 0.0
        %1622 = vmatprep.subr.mxu0 0.0
        %1623 = vmatpush1.msra.mxu0 0.0
        %1624 = vmatprep.subr.mxu0 0.0
        %1625 = vmatpush1.msra.mxu0 0.0
        %1626 = vmatprep.subr.mxu0 0.0
        %1627 = vmatpush1.msra.mxu0 0.0
        %1628 = vmatprep.subr.mxu0 0.0
        %1629 = vmatpush1.msra.mxu0 0.0
        %1630 = vmatprep.subr.mxu0 0.0
        %1631 = vmatpush1.msra.mxu0 0.0
        %1632 = vmatprep.subr.mxu0 0.0
        %1633 = vmatpush1.msra.mxu0 0.0
        %1634 = vmatprep.subr.mxu0 0.0
        %1635 = vmatpush1.msra.mxu0 0.0
        %1636 = vmatprep.mubr.f32.mxu0 0.0
        %1637 = vmatmul.mubr.f32.gmra.mrb[0].mxu0 %v1570
        %v1638 = vpop.f32.mrb[0].mxu0
        %v1639 = vadd.f32 0.0, %v1638
        %v1640 = vpop.f32.mrb[0].mxu0
        %1641 = vdwg.mxu0
        %1642 = vrot.lane.b32.xlu0 %v752, 96
        %v1643 = vpop.permute.xlu0 %1642
        %1644 = vrot.lane.b32.xlu0 %v757, 96
        %v1645 = vpop.permute.xlu0 %1644
        %v1649 = vsel %vm1410, %v1403, 0
        %1651 = vmatprep.subr.mxu0 0.0
        %1652 = vmatpush1.msra.mxu0 %v1643
        %1653 = vmatprep.subr.mxu0 0.0
        %1654 = vmatpush1.msra.mxu0 %v1645
        %1655 = vmatprep.subr.mxu0 0.0
        %1656 = vmatpush1.msra.mxu0 0.0
        %1657 = vmatprep.subr.mxu0 0.0
        %1658 = vmatpush1.msra.mxu0 0.0
        %1659 = vmatprep.subr.mxu0 0.0
        %1660 = vmatpush1.msra.mxu0 0.0
        %1661 = vmatprep.subr.mxu0 0.0
        %1662 = vmatpush1.msra.mxu0 0.0
        %1663 = vmatprep.subr.mxu0 0.0
        %1664 = vmatpush1.msra.mxu0 0.0
        %1665 = vmatprep.subr.mxu0 0.0
        %1666 = vmatpush1.msra.mxu0 0.0
        %1667 = vmatprep.subr.mxu0 0.0
        %1668 = vmatpush1.msra.mxu0 0.0
        %1669 = vmatprep.subr.mxu0 0.0
        %1670 = vmatpush1.msra.mxu0 0.0
        %1671 = vmatprep.subr.mxu0 0.0
        %1672 = vmatpush1.msra.mxu0 0.0
        %1673 = vmatprep.subr.mxu0 0.0
        %1674 = vmatpush1.msra.mxu0 0.0
        %1675 = vmatprep.subr.mxu0 0.0
        %1676 = vmatpush1.msra.mxu0 0.0
        %1677 = vmatprep.subr.mxu0 0.0
        %1678 = vmatpush1.msra.mxu0 0.0
        %1679 = vmatprep.subr.mxu0 0.0
        %1680 = vmatpush1.msra.mxu0 0.0
        %1681 = vmatprep.subr.mxu0 0.0
        %1682 = vmatpush1.msra.mxu0 0.0
        %1683 = vmatprep.subr.mxu0 0.0
        %1684 = vmatpush1.msra.mxu0 0.0
        %1685 = vmatprep.subr.mxu0 0.0
        %1686 = vmatpush1.msra.mxu0 0.0
        %1687 = vmatprep.subr.mxu0 0.0
        %1688 = vmatpush1.msra.mxu0 0.0
        %1689 = vmatprep.subr.mxu0 0.0
        %1690 = vmatpush1.msra.mxu0 0.0
        %1691 = vmatprep.subr.mxu0 0.0
        %1692 = vmatpush1.msra.mxu0 0.0
        %1693 = vmatprep.subr.mxu0 0.0
        %1694 = vmatpush1.msra.mxu0 0.0
        %1695 = vmatprep.subr.mxu0 0.0
        %1696 = vmatpush1.msra.mxu0 0.0
        %1697 = vmatprep.subr.mxu0 0.0
        %1698 = vmatpush1.msra.mxu0 0.0
        %1699 = vmatprep.subr.mxu0 0.0
        %1700 = vmatpush1.msra.mxu0 0.0
        %1701 = vmatprep.subr.mxu0 0.0
        %1702 = vmatpush1.msra.mxu0 0.0
        %1703 = vmatprep.subr.mxu0 0.0
        %1704 = vmatpush1.msra.mxu0 0.0
        %1705 = vmatprep.subr.mxu0 0.0
        %1706 = vmatpush1.msra.mxu0 0.0
        %1707 = vmatprep.subr.mxu0 0.0
        %1708 = vmatpush1.msra.mxu0 0.0
        %1709 = vmatprep.subr.mxu0 0.0
        %1710 = vmatpush1.msra.mxu0 0.0
        %1711 = vmatprep.subr.mxu0 0.0
        %1712 = vmatpush1.msra.mxu0 0.0
        %1713 = vmatprep.subr.mxu0 0.0
        %1714 = vmatpush1.msra.mxu0 0.0
        %1715 = vmatprep.mubr.f32.mxu0 0.0
        %1716 = vmatmul.mubr.f32.gmra.mrb[0].mxu0 %v1649
        %v1717 = vpop.f32.mrb[0].mxu0
        %v1718 = vadd.f32 0.0, %v1717
        %v1719 = vpop.f32.mrb[0].mxu0
        %1720 = vdwg.mxu0
        %v1721 = vld [vmem:[#allocation8] sm:$0xff]
        %v1722 = vld [vmem:[#allocation8 + $0x8] sm:$0xff]
        %v1723 = vld [vmem:[#allocation8 + $0x10] sm:$0xff]
        %v1724 = vld [vmem:[#allocation8 + $0x18] sm:$0xff]
        %v1729 = vcombine.low %v1481, %v1560
        %v1730 = vcombine.low %v1639, %v1718
        %v1731 = vsel %vm493, %v1729, 0
        %v1733 = vsel %vm493, %v1730, 0
        %1735 = vmatprep.subr.mxu0 0.0
        %1736 = vmatpush1.msra.mxu0 %v1721
        %1737 = vmatprep.subr.mxu0 0.0
        %1738 = vmatpush1.msra.mxu0 %v1722
        %1739 = vmatprep.subr.mxu0 0.0
        %1740 = vmatpush1.msra.mxu0 %v1723
        %1741 = vmatprep.subr.mxu0 0.0
        %1742 = vmatpush1.msra.mxu0 %v1724
        %1743 = vmatprep.subr.mxu0 0.0
        %1744 = vmatpush1.msra.mxu0 0.0
        %1745 = vmatprep.subr.mxu0 0.0
        %1746 = vmatpush1.msra.mxu0 0.0
        %1747 = vmatprep.subr.mxu0 0.0
        %1748 = vmatpush1.msra.mxu0 0.0
        %1749 = vmatprep.subr.mxu0 0.0
        %1750 = vmatpush1.msra.mxu0 0.0
        %1751 = vmatprep.subr.mxu0 0.0
        %1752 = vmatpush1.msra.mxu0 0.0
        %1753 = vmatprep.subr.mxu0 0.0
        %1754 = vmatpush1.msra.mxu0 0.0
        %1755 = vmatprep.subr.mxu0 0.0
        %1756 = vmatpush1.msra.mxu0 0.0
        %1757 = vmatprep.subr.mxu0 0.0
        %1758 = vmatpush1.msra.mxu0 0.0
        %1759 = vmatprep.subr.mxu0 0.0
        %1760 = vmatpush1.msra.mxu0 0.0
        %1761 = vmatprep.subr.mxu0 0.0
        %1762 = vmatpush1.msra.mxu0 0.0
        %1763 = vmatprep.subr.mxu0 0.0
        %1764 = vmatpush1.msra.mxu0 0.0
        %1765 = vmatprep.subr.mxu0 0.0
        %1766 = vmatpush1.msra.mxu0 0.0
        %1767 = vmatprep.subr.mxu0 0.0
        %1768 = vmatpush1.msra.mxu0 0.0
        %1769 = vmatprep.subr.mxu0 0.0
        %1770 = vmatpush1.msra.mxu0 0.0
        %1771 = vmatprep.subr.mxu0 0.0
        %1772 = vmatpush1.msra.mxu0 0.0
        %1773 = vmatprep.subr.mxu0 0.0
        %1774 = vmatpush1.msra.mxu0 0.0
        %1775 = vmatprep.subr.mxu0 0.0
        %1776 = vmatpush1.msra.mxu0 0.0
        %1777 = vmatprep.subr.mxu0 0.0
        %1778 = vmatpush1.msra.mxu0 0.0
        %1779 = vmatprep.subr.mxu0 0.0
        %1780 = vmatpush1.msra.mxu0 0.0
        %1781 = vmatprep.subr.mxu0 0.0
        %1782 = vmatpush1.msra.mxu0 0.0
        %1783 = vmatprep.subr.mxu0 0.0
        %1784 = vmatpush1.msra.mxu0 0.0
        %1785 = vmatprep.subr.mxu0 0.0
        %1786 = vmatpush1.msra.mxu0 0.0
        %1787 = vmatprep.subr.mxu0 0.0
        %1788 = vmatpush1.msra.mxu0 0.0
        %1789 = vmatprep.subr.mxu0 0.0
        %1790 = vmatpush1.msra.mxu0 0.0
        %1791 = vmatprep.subr.mxu0 0.0
        %1792 = vmatpush1.msra.mxu0 0.0
        %1793 = vmatprep.subr.mxu0 0.0
        %1794 = vmatpush1.msra.mxu0 0.0
        %1795 = vmatprep.subr.mxu0 0.0
        %1796 = vmatpush1.msra.mxu0 0.0
        %1797 = vmatprep.subr.mxu0 0.0
        %1798 = vmatpush1.msra.mxu0 0.0
        %1799 = vmatprep.mubr.f32.mxu0 0.0
        %1800 = vmatmul.mubr.f32.gmra.mrb[0].mxu0 %v1731
        %v1801 = vpop.f32.mrb[0].mxu0
        %v1802 = vadd.f32 %v472, %v1801
        %v1803 = vpop.f32.mrb[0].mxu0
        %1804 = vmatprep.mubr.f32.mxu0 0.0
        %1805 = vmatmul.mubr.f32.gmra.mrb[0].mxu0 %v1733
        %v1806 = vpop.f32.mrb[0].mxu0
        %v1807 = vadd.f32 %v472, %v1806
        %v1808 = vpop.f32.mrb[0].mxu0
        %1809 = vdwg.mxu0
        %v1810 = vld [vmem:[#allocation10] sm:$0xff]
        %v1811 = vld [vmem:[#allocation10 + $0x8] sm:$0xff]
        %v1812 = vld [vmem:[#allocation10 + $0x10] sm:$0xff]
        %v1813 = vld [vmem:[#allocation10 + $0x18] sm:$0xff]
        %v1814 = vsel %vm493, %v768, 0
        %v1816 = vsel %vm493, %v769, 0
        %1818 = vmatprep.subr.mxu0 0.0
        %1819 = vmatpush1.msra.mxu0 %v1810
        %1820 = vmatprep.subr.mxu0 0.0
        %1821 = vmatpush1.msra.mxu0 %v1811
        %1822 = vmatprep.subr.mxu0 0.0
        %1823 = vmatpush1.msra.mxu0 %v1812
        %1824 = vmatprep.subr.mxu0 0.0
        %1825 = vmatpush1.msra.mxu0 %v1813
        %1826 = vmatprep.subr.mxu0 0.0
        %1827 = vmatpush1.msra.mxu0 0.0
        %1828 = vmatprep.subr.mxu0 0.0
        %1829 = vmatpush1.msra.mxu0 0.0
        %1830 = vmatprep.subr.mxu0 0.0
        %1831 = vmatpush1.msra.mxu0 0.0
        %1832 = vmatprep.subr.mxu0 0.0
        %1833 = vmatpush1.msra.mxu0 0.0
        %1834 = vmatprep.subr.mxu0 0.0
        %1835 = vmatpush1.msra.mxu0 0.0
        %1836 = vmatprep.subr.mxu0 0.0
        %1837 = vmatpush1.msra.mxu0 0.0
        %1838 = vmatprep.subr.mxu0 0.0
        %1839 = vmatpush1.msra.mxu0 0.0
        %1840 = vmatprep.subr.mxu0 0.0
        %1841 = vmatpush1.msra.mxu0 0.0
        %1842 = vmatprep.subr.mxu0 0.0
        %1843 = vmatpush1.msra.mxu0 0.0
        %1844 = vmatprep.subr.mxu0 0.0
        %1845 = vmatpush1.msra.mxu0 0.0
        %1846 = vmatprep.subr.mxu0 0.0
        %1847 = vmatpush1.msra.mxu0 0.0
        %1848 = vmatprep.subr.mxu0 0.0
        %1849 = vmatpush1.msra.mxu0 0.0
        %1850 = vmatprep.subr.mxu0 0.0
        %1851 = vmatpush1.msra.mxu0 0.0
        %1852 = vmatprep.subr.mxu0 0.0
        %1853 = vmatpush1.msra.mxu0 0.0
        %1854 = vmatprep.subr.mxu0 0.0
        %1855 = vmatpush1.msra.mxu0 0.0
        %1856 = vmatprep.subr.mxu0 0.0
        %1857 = vmatpush1.msra.mxu0 0.0
        %1858 = vmatprep.subr.mxu0 0.0
        %1859 = vmatpush1.msra.mxu0 0.0
        %1860 = vmatprep.subr.mxu0 0.0
        %1861 = vmatpush1.msra.mxu0 0.0
        %1862 = vmatprep.subr.mxu0 0.0
        %1863 = vmatpush1.msra.mxu0 0.0
        %1864 = vmatprep.subr.mxu0 0.0
        %1865 = vmatpush1.msra.mxu0 0.0
        %1866 = vmatprep.subr.mxu0 0.0
        %1867 = vmatpush1.msra.mxu0 0.0
        %1868 = vmatprep.subr.mxu0 0.0
        %1869 = vmatpush1.msra.mxu0 0.0
        %1870 = vmatprep.subr.mxu0 0.0
        %1871 = vmatpush1.msra.mxu0 0.0
        %1872 = vmatprep.subr.mxu0 0.0
        %1873 = vmatpush1.msra.mxu0 0.0
        %1874 = vmatprep.subr.mxu0 0.0
        %1875 = vmatpush1.msra.mxu0 0.0
        %1876 = vmatprep.subr.mxu0 0.0
        %1877 = vmatpush1.msra.mxu0 0.0
        %1878 = vmatprep.subr.mxu0 0.0
        %1879 = vmatpush1.msra.mxu0 0.0
        %1880 = vmatprep.subr.mxu0 0.0
        %1881 = vmatpush1.msra.mxu0 0.0
        %1882 = vmatprep.mubr.f32.mxu0 0.0
        %1883 = vmatmul.mubr.f32.gmra.mrb[0].mxu0 %v1814
        %v1884 = vpop.f32.mrb[0].mxu0
        %v1885 = vadd.f32 %v476, %v1884
        %v1886 = vpop.f32.mrb[0].mxu0
        %1887 = vmatprep.mubr.f32.mxu0 0.0
        %1888 = vmatmul.mubr.f32.gmra.mrb[0].mxu0 %v1816
        %v1889 = vpop.f32.mrb[0].mxu0
        %v1890 = vadd.f32 %v476, %v1889
        %v1891 = vpop.f32.mrb[0].mxu0
        %1892 = vdwg.mxu0
        %v1893 = vadd.f32 %v1802, %v1885
        %v1894 = vadd.f32 %v1807, %v1890
        %v1895 = vxor.u32 %v1893, 2147483648
        %v1896 = vxor.u32 %v1894, 2147483648
        %v1897 = vmul.f32 %v1895, 1.442695
        %v1898 = vpow.pop %v1897
        %v1899 = vmul.f32 %v1896, 1.442695
        %v1900 = vpow.pop %v1899
        %v1901 = vadd.f32 %v1898, 1.0
        %v1902 = vadd.f32 %v1900, 1.0
        %v1903 = vrcp.pop %v1901
        %v1904 = vmul.f32 1.0, %v1903
        %v1905 = vrcp.pop %v1902
        %v1906 = vmul.f32 1.0, %v1905
        %1909 = vrot.lane.b32.xlu0 %v1885, 64
        %v1910 = vpop.permute.xlu0 %1909
        %1911 = vrot.lane.b32.xlu0 %v1890, 64
        %v1912 = vpop.permute.xlu0 %1911
        %v1915 = vmul.f32 %v1904, %v1910
        %v1916 = vmul.f32 %v1906, %v1912
        %1919 = vrot.lane.b32.xlu0 %v1915, 64
        %v1920 = vpop.permute.xlu0 %1919
        %1921 = vrot.lane.b32.xlu0 %v1916, 64
        %v1922 = vpop.permute.xlu0 %1921
        %v1925 = vadd.f32 %v1802, %v1920
        %v1926 = vadd.f32 %v1807, %v1922
        %v1927 = vtanh.pop %v1925
        %v1928 = vtanh.pop %v1926
        %v1929 = vsub.f32 1.0, %v1904
        %v1930 = vsub.f32 1.0, %v1906
        %1933 = vrot.lane.b32.xlu0 %v1927, 96
        %v1934 = vpop.permute.xlu0 %1933
        %1935 = vrot.lane.b32.xlu0 %v1928, 96
        %v1936 = vpop.permute.xlu0 %1935
        %v1939 = vmul.f32 %v1929, %v1934
        %v1940 = vmul.f32 %v1930, %v1936
        %1941 = vrot.lane.b32.xlu0 %v768, 32
        %v1942 = vpop.permute.xlu0 %1941
        %1943 = vrot.lane.b32.xlu0 %v769, 32
        %v1944 = vpop.permute.xlu0 %1943
        %v1947 = vmul.f32 %v1904, %v1942
        %v1948 = vmul.f32 %v1906, %v1944
        %v1949 = vadd.f32 %v1939, %v1947
        %v1950 = vadd.f32 %v1940, %v1948
        %1953 = vrot.lane.b32.xlu0 %v1949, 96
        %v1954 = vpop.permute.xlu0 %1953
        %1955 = vrot.lane.b32.xlu0 %v1950, 96
        %v1956 = vpop.permute.xlu0 %1955
        %v1959 = vsel %vm493, %v1954, 0.0
        %1960 = vadd.xlane.f32.xlu0 %v1959
        %v1961 = vpop.xlane.xlu0 %1960
        %v1962 = vsel %vm493, %v1956, 0.0
        %1963 = vadd.xlane.f32.xlu0 %v1962
        %v1964 = vpop.xlane.xlu0 %1963
        %v1965 = vmul.f32 %v1961, %v518
        %v1966 = vmul.f32 %v1964, %v518
        %v1967 = vsub.f32 %v1949, %v1965
        %v1968 = vsub.f32 %v1950, %v1966
        %v1969 = vmul.f32 %v1967, %v1967
        %v1970 = vmul.f32 %v1968, %v1968
        %1973 = vrot.lane.b32.xlu0 %v1969, 96
        %v1974 = vpop.permute.xlu0 %1973
        %1975 = vrot.lane.b32.xlu0 %v1970, 96
        %v1976 = vpop.permute.xlu0 %1975
        %v1979 = vsel %vm493, %v1974, 0.0
        %1980 = vadd.xlane.f32.xlu0 %v1979
        %v1981 = vpop.xlane.xlu0 %1980
        %v1982 = vsel %vm493, %v1976, 0.0
        %1983 = vadd.xlane.f32.xlu0 %v1982
        %v1984 = vpop.xlane.xlu0 %1983
        %v1985 = vmul.f32 %v1981, %v518
        %v1986 = vmul.f32 %v1984, %v518
        %v1987 = vadd.f32 %v1985, 1e-05
        %v1988 = vadd.f32 %v1986, 1e-05
        %v1989 = vrsqrt.pop %v1987
        %v1990 = vrsqrt.pop %v1988
        %v1991 = vmul.f32 %v1967, %v1989
        %v1992 = vmul.f32 %v1968, %v1990
        %1994 = vrot.lane.b32.xlu0 %v460, 32
        %v1995 = vpop.permute.xlu0 %1994
        %v1997 = vmul.f32 %v1991, %v1995
        %v1998 = vmul.f32 %v1992, %v1995
        %2000 = vrot.lane.b32.xlu0 %v464, 32
        %v2001 = vpop.permute.xlu0 %2000
        %v2003 = vadd.f32 %v1997, %v2001
        %v2004 = vadd.f32 %v1998, %v2001
        %v2005 = vld [vmem:[#allocation11] sm:$0xff]
        %v2006 = vld [vmem:[#allocation11 + $0x8] sm:$0xff]
        %v2007 = vld [vmem:[#allocation11 + $0x10] sm:$0xff]
        %v2008 = vld [vmem:[#allocation11 + $0x18] sm:$0xff]
        %2011 = vrot.lane.b32.xlu0 %v2003, 96
        %v2012 = vpop.permute.xlu0 %2011
        %2013 = vrot.lane.b32.xlu0 %v2004, 96
        %v2014 = vpop.permute.xlu0 %2013
        %v2015 = vsel %vm493, %v2012, 0
        %v2017 = vsel %vm493, %v2014, 0
        %2019 = vmatprep.subr.mxu0 0.0
        %2020 = vmatpush1.msra.mxu0 %v2005
        %2021 = vmatprep.subr.mxu0 0.0
        %2022 = vmatpush1.msra.mxu0 %v2006
        %2023 = vmatprep.subr.mxu0 0.0
        %2024 = vmatpush1.msra.mxu0 %v2007
        %2025 = vmatprep.subr.mxu0 0.0
        %2026 = vmatpush1.msra.mxu0 %v2008
        %2027 = vmatprep.subr.mxu0 0.0
        %2028 = vmatpush1.msra.mxu0 0.0
        %2029 = vmatprep.subr.mxu0 0.0
        %2030 = vmatpush1.msra.mxu0 0.0
        %2031 = vmatprep.subr.mxu0 0.0
        %2032 = vmatpush1.msra.mxu0 0.0
        %2033 = vmatprep.subr.mxu0 0.0
        %2034 = vmatpush1.msra.mxu0 0.0
        %2035 = vmatprep.subr.mxu0 0.0
        %2036 = vmatpush1.msra.mxu0 0.0
        %2037 = vmatprep.subr.mxu0 0.0
        %2038 = vmatpush1.msra.mxu0 0.0
        %2039 = vmatprep.subr.mxu0 0.0
        %2040 = vmatpush1.msra.mxu0 0.0
        %2041 = vmatprep.subr.mxu0 0.0
        %2042 = vmatpush1.msra.mxu0 0.0
        %2043 = vmatprep.subr.mxu0 0.0
        %2044 = vmatpush1.msra.mxu0 0.0
        %2045 = vmatprep.subr.mxu0 0.0
        %2046 = vmatpush1.msra.mxu0 0.0
        %2047 = vmatprep.subr.mxu0 0.0
        %2048 = vmatpush1.msra.mxu0 0.0
        %2049 = vmatprep.subr.mxu0 0.0
        %2050 = vmatpush1.msra.mxu0 0.0
        %2051 = vmatprep.subr.mxu0 0.0
        %2052 = vmatpush1.msra.mxu0 0.0
        %2053 = vmatprep.subr.mxu0 0.0
        %2054 = vmatpush1.msra.mxu0 0.0
        %2055 = vmatprep.subr.mxu0 0.0
        %2056 = vmatpush1.msra.mxu0 0.0
        %2057 = vmatprep.subr.mxu0 0.0
        %2058 = vmatpush1.msra.mxu0 0.0
        %2059 = vmatprep.subr.mxu0 0.0
        %2060 = vmatpush1.msra.mxu0 0.0
        %2061 = vmatprep.subr.mxu0 0.0
        %2062 = vmatpush1.msra.mxu0 0.0
        %2063 = vmatprep.subr.mxu0 0.0
        %2064 = vmatpush1.msra.mxu0 0.0
        %2065 = vmatprep.subr.mxu0 0.0
        %2066 = vmatpush1.msra.mxu0 0.0
        %2067 = vmatprep.subr.mxu0 0.0
        %2068 = vmatpush1.msra.mxu0 0.0
        %2069 = vmatprep.subr.mxu0 0.0
        %2070 = vmatpush1.msra.mxu0 0.0
        %2071 = vmatprep.subr.mxu0 0.0
        %2072 = vmatpush1.msra.mxu0 0.0
        %2073 = vmatprep.subr.mxu0 0.0
        %2074 = vmatpush1.msra.mxu0 0.0
        %2075 = vmatprep.subr.mxu0 0.0
        %2076 = vmatpush1.msra.mxu0 0.0
        %2077 = vmatprep.subr.mxu0 0.0
        %2078 = vmatpush1.msra.mxu0 0.0
        %2079 = vmatprep.subr.mxu0 0.0
        %2080 = vmatpush1.msra.mxu0 0.0
        %2081 = vmatprep.subr.mxu0 0.0
        %2082 = vmatpush1.msra.mxu0 0.0
        %2083 = vmatprep.mubr.f32.mxu0 0.0
        %2084 = vmatmul.mubr.f32.gmra.mrb[0].mxu0 %v2015
        %v2085 = vpop.f32.mrb[0].mxu0
        %v2086 = vadd.f32 %v480, %v2085
        %v2087 = vpop.f32.mrb[0].mxu0
        %2088 = vmatprep.mubr.f32.mxu0 0.0
        %2089 = vmatmul.mubr.f32.gmra.mrb[0].mxu0 %v2017
        %v2090 = vpop.f32.mrb[0].mxu0
        %v2091 = vadd.f32 %v480, %v2090
        %v2092 = vpop.f32.mrb[0].mxu0
        %2093 = vdwg.mxu0
        %v2094 = vmax.f32 %v2086, 0.0
        %v2095 = vmax.f32 %v2091, 0.0
        %v2096 = vld [vmem:[%s8] sm:$0xff]
        %v2097 = vld [vmem:[%s8 + $0x8] sm:$0xff]
        %v2098 = vld [vmem:[%s8 + $0x10] sm:$0xff]
        %v2099 = vld [vmem:[%s8 + $0x18] sm:$0xff]
        %v2100 = vld [vmem:[%s8 + $0x20] sm:$0xff]
        %v2101 = vld [vmem:[%s8 + $0x28] sm:$0xff]
        %v2102 = vld [vmem:[%s8 + $0x30] sm:$0xff]
        %v2103 = vld [vmem:[%s8 + $0x38] sm:$0xff]
        %v2104 = vld [vmem:[%s8 + $0x40] sm:$0xff]
        %v2105 = vld [vmem:[%s8 + $0x48] sm:$0xff]
        %v2106 = vld [vmem:[%s8 + $0x50] sm:$0xff]
        %v2107 = vld [vmem:[%s8 + $0x58] sm:$0xff]
        %v2108 = vld [vmem:[%s8 + $0x60] sm:$0xff]
        %v2109 = vld [vmem:[%s8 + $0x68] sm:$0xff]
        %v2110 = vld [vmem:[%s8 + $0x70] sm:$0xff]
        %v2111 = vld [vmem:[%s8 + $0x78] sm:$0xff]
        %2112 = vmatprep.subr.mxu0 0.0
        %2113 = vmatpush1.msra.mxu0 %v2096
        %2114 = vmatprep.subr.mxu0 0.0
        %2115 = vmatpush1.msra.mxu0 %v2097
        %2116 = vmatprep.subr.mxu0 0.0
        %2117 = vmatpush1.msra.mxu0 %v2098
        %2118 = vmatprep.subr.mxu0 0.0
        %2119 = vmatpush1.msra.mxu0 %v2099
        %2120 = vmatprep.subr.mxu0 0.0
        %2121 = vmatpush1.msra.mxu0 %v2100
        %2122 = vmatprep.subr.mxu0 0.0
        %2123 = vmatpush1.msra.mxu0 %v2101
        %2124 = vmatprep.subr.mxu0 0.0
        %2125 = vmatpush1.msra.mxu0 %v2102
        %2126 = vmatprep.subr.mxu0 0.0
        %2127 = vmatpush1.msra.mxu0 %v2103
        %2128 = vmatprep.subr.mxu0 0.0
        %2129 = vmatpush1.msra.mxu0 %v2104
        %2130 = vmatprep.subr.mxu0 0.0
        %2131 = vmatpush1.msra.mxu0 %v2105
        %2132 = vmatprep.subr.mxu0 0.0
        %2133 = vmatpush1.msra.mxu0 %v2106
        %2134 = vmatprep.subr.mxu0 0.0
        %2135 = vmatpush1.msra.mxu0 %v2107
        %2136 = vmatprep.subr.mxu0 0.0
        %2137 = vmatpush1.msra.mxu0 %v2108
        %2138 = vmatprep.subr.mxu0 0.0
        %2139 = vmatpush1.msra.mxu0 %v2109
        %2140 = vmatprep.subr.mxu0 0.0
        %2141 = vmatpush1.msra.mxu0 %v2110
        %2142 = vmatprep.subr.mxu0 0.0
        %2143 = vmatpush1.msra.mxu0 %v2111
        %2144 = vmatprep.subr.mxu0 0.0
        %2145 = vmatpush1.msra.mxu0 0.0
        %2146 = vmatprep.subr.mxu0 0.0
        %2147 = vmatpush1.msra.mxu0 0.0
        %2148 = vmatprep.subr.mxu0 0.0
        %2149 = vmatpush1.msra.mxu0 0.0
        %2150 = vmatprep.subr.mxu0 0.0
        %2151 = vmatpush1.msra.mxu0 0.0
        %2152 = vmatprep.subr.mxu0 0.0
        %2153 = vmatpush1.msra.mxu0 0.0
        %2154 = vmatprep.subr.mxu0 0.0
        %2155 = vmatpush1.msra.mxu0 0.0
        %2156 = vmatprep.subr.mxu0 0.0
        %2157 = vmatpush1.msra.mxu0 0.0
        %2158 = vmatprep.subr.mxu0 0.0
        %2159 = vmatpush1.msra.mxu0 0.0
        %2160 = vmatprep.subr.mxu0 0.0
        %2161 = vmatpush1.msra.mxu0 0.0
        %2162 = vmatprep.subr.mxu0 0.0
        %2163 = vmatpush1.msra.mxu0 0.0
        %2164 = vmatprep.subr.mxu0 0.0
        %2165 = vmatpush1.msra.mxu0 0.0
        %2166 = vmatprep.subr.mxu0 0.0
        %2167 = vmatpush1.msra.mxu0 0.0
        %2168 = vmatprep.subr.mxu0 0.0
        %2169 = vmatpush1.msra.mxu0 0.0
        %2170 = vmatprep.subr.mxu0 0.0
        %2171 = vmatpush1.msra.mxu0 0.0
        %2172 = vmatprep.subr.mxu0 0.0
        %2173 = vmatpush1.msra.mxu0 0.0
        %2174 = vmatprep.subr.mxu0 0.0
        %2175 = vmatpush1.msra.mxu0 0.0
        %2176 = vmatprep.mubr.f32.mxu0 0.0
        %2177 = vmatmul.mubr.f32.gmra.mrb[0].mxu0 %v2094
        %v2178 = vpop.f32.mrb[0].mxu0
        %v2179 = vadd.f32 0.0, %v2178
        %v2180 = vpop.f32.mrb[0].mxu0
        %2181 = vmatprep.mubr.f32.mxu0 0.0
        %2182 = vmatmul.mubr.f32.gmra.mrb[0].mxu0 %v2095
        %v2183 = vpop.f32.mrb[0].mxu0
        %v2184 = vadd.f32 0.0, %v2183
        %v2185 = vpop.f32.mrb[0].mxu0
        %2186 = vdwg.mxu0
        %2189 = vrot.lane.b32.xlu0 %v2179, 32
        %v2190 = vpop.permute.xlu0 %2189
        %2191 = vrot.lane.b32.xlu0 %v2184, 32
        %v2192 = vpop.permute.xlu0 %2191
        %v2195 = vadd.f32 %v1949, %v2190
        %v2196 = vadd.f32 %v1950, %v2192
        %2198 = vrot.lane.b32.xlu0 %v484, 32
        %v2199 = vpop.permute.xlu0 %2198
        %v2201 = vadd.f32 %v2195, %v2199
        %v2202 = vadd.f32 %v2196, %v2199
        %2205 = vrot.lane.b32.xlu0 %v2201, 96
        %v2206 = vpop.permute.xlu0 %2205
        %2207 = vrot.lane.b32.xlu0 %v2202, 96
        %v2208 = vpop.permute.xlu0 %2207
        %v2211 = vsel %vm493, %v2206, 0.0
        %2212 = vadd.xlane.f32.xlu0 %v2211
        %v2213 = vpop.xlane.xlu0 %2212
        %v2214 = vsel %vm493, %v2208, 0.0
        %2215 = vadd.xlane.f32.xlu0 %v2214
        %v2216 = vpop.xlane.xlu0 %2215
        %v2217 = vmul.f32 %v2213, %v518
        %v2218 = vmul.f32 %v2216, %v518
        %v2219 = vsub.f32 %v2201, %v2217
        %v2220 = vsub.f32 %v2202, %v2218
        %v2221 = vmul.f32 %v2219, %v2219
        %v2222 = vmul.f32 %v2220, %v2220
        %2225 = vrot.lane.b32.xlu0 %v2221, 96
        %v2226 = vpop.permute.xlu0 %2225
        %2227 = vrot.lane.b32.xlu0 %v2222, 96
        %v2228 = vpop.permute.xlu0 %2227
        %v2231 = vsel %vm493, %v2226, 0.0
        %2232 = vadd.xlane.f32.xlu0 %v2231
        %v2233 = vpop.xlane.xlu0 %2232
        %v2234 = vsel %vm493, %v2228, 0.0
        %2235 = vadd.xlane.f32.xlu0 %v2234
        %v2236 = vpop.xlane.xlu0 %2235
        %v2237 = vmul.f32 %v2233, %v518
        %v2238 = vmul.f32 %v2236, %v518
        %v2239 = vadd.f32 %v2237, 1e-05
        %v2240 = vadd.f32 %v2238, 1e-05
        %v2241 = vrsqrt.pop %v2239
        %v2242 = vrsqrt.pop %v2240
        %v2243 = vmul.f32 %v2219, %v2241
        %v2244 = vmul.f32 %v2220, %v2242
        %2245 = vrot.lane.b32.xlu0 %v452, 32
        %v2246 = vpop.permute.xlu0 %2245
        %v2248 = vmul.f32 %v2243, %v2246
        %v2249 = vmul.f32 %v2244, %v2246
        %2250 = vrot.lane.b32.xlu0 %v456, 32
        %v2251 = vpop.permute.xlu0 %2250
        %v2253 = vadd.f32 %v2248, %v2251
        %v2254 = vadd.f32 %v2249, %v2251
        %v2255 = vld [vmem:[#allocation7] sm:$0xff]
        %v2256 = vld [vmem:[#allocation7 + $0x8] sm:$0xff]
        %v2257 = vld [vmem:[#allocation7 + $0x10] sm:$0xff]
        %v2258 = vld [vmem:[#allocation7 + $0x18] sm:$0xff]
        %2261 = vrot.lane.b32.xlu0 %v2253, 96
        %v2262 = vpop.permute.xlu0 %2261
        %2263 = vrot.lane.b32.xlu0 %v2254, 96
        %v2264 = vpop.permute.xlu0 %2263
        %v2265 = vsel %vm493, %v2262, 0
        %v2267 = vsel %vm493, %v2264, 0
        %2269 = vmatprep.subr.mxu0 0.0
        %2270 = vmatpush1.msra.mxu0 %v2255
        %2271 = vmatprep.subr.mxu0 0.0
        %2272 = vmatpush1.msra.mxu0 %v2256
        %2273 = vmatprep.subr.mxu0 0.0
        %2274 = vmatpush1.msra.mxu0 %v2257
        %2275 = vmatprep.subr.mxu0 0.0
        %2276 = vmatpush1.msra.mxu0 %v2258
        %2277 = vmatprep.subr.mxu0 0.0
        %2278 = vmatpush1.msra.mxu0 0.0
        %2279 = vmatprep.subr.mxu0 0.0
        %2280 = vmatpush1.msra.mxu0 0.0
        %2281 = vmatprep.subr.mxu0 0.0
        %2282 = vmatpush1.msra.mxu0 0.0
        %2283 = vmatprep.subr.mxu0 0.0
        %2284 = vmatpush1.msra.mxu0 0.0
        %2285 = vmatprep.subr.mxu0 0.0
        %2286 = vmatpush1.msra.mxu0 0.0
        %2287 = vmatprep.subr.mxu0 0.0
        %2288 = vmatpush1.msra.mxu0 0.0
        %2289 = vmatprep.subr.mxu0 0.0
        %2290 = vmatpush1.msra.mxu0 0.0
        %2291 = vmatprep.subr.mxu0 0.0
        %2292 = vmatpush1.msra.mxu0 0.0
        %2293 = vmatprep.subr.mxu0 0.0
        %2294 = vmatpush1.msra.mxu0 0.0
        %2295 = vmatprep.subr.mxu0 0.0
        %2296 = vmatpush1.msra.mxu0 0.0
        %2297 = vmatprep.subr.mxu0 0.0
        %2298 = vmatpush1.msra.mxu0 0.0
        %2299 = vmatprep.subr.mxu0 0.0
        %2300 = vmatpush1.msra.mxu0 0.0
        %2301 = vmatprep.subr.mxu0 0.0
        %2302 = vmatpush1.msra.mxu0 0.0
        %2303 = vmatprep.subr.mxu0 0.0
        %2304 = vmatpush1.msra.mxu0 0.0
        %2305 = vmatprep.subr.mxu0 0.0
        %2306 = vmatpush1.msra.mxu0 0.0
        %2307 = vmatprep.subr.mxu0 0.0
        %2308 = vmatpush1.msra.mxu0 0.0
        %2309 = vmatprep.subr.mxu0 0.0
        %2310 = vmatpush1.msra.mxu0 0.0
        %2311 = vmatprep.subr.mxu0 0.0
        %2312 = vmatpush1.msra.mxu0 0.0
        %2313 = vmatprep.subr.mxu0 0.0
        %2314 = vmatpush1.msra.mxu0 0.0
        %2315 = vmatprep.subr.mxu0 0.0
        %2316 = vmatpush1.msra.mxu0 0.0
        %2317 = vmatprep.subr.mxu0 0.0
        %2318 = vmatpush1.msra.mxu0 0.0
        %2319 = vmatprep.subr.mxu0 0.0
        %2320 = vmatpush1.msra.mxu0 0.0
        %2321 = vmatprep.subr.mxu0 0.0
        %2322 = vmatpush1.msra.mxu0 0.0
        %2323 = vmatprep.subr.mxu0 0.0
        %2324 = vmatpush1.msra.mxu0 0.0
        %2325 = vmatprep.subr.mxu0 0.0
        %2326 = vmatpush1.msra.mxu0 0.0
        %2327 = vmatprep.subr.mxu0 0.0
        %2328 = vmatpush1.msra.mxu0 0.0
        %2329 = vmatprep.subr.mxu0 0.0
        %2330 = vmatpush1.msra.mxu0 0.0
        %2331 = vmatprep.subr.mxu0 0.0
        %2332 = vmatpush1.msra.mxu0 0.0
        %2333 = vmatprep.mubr.f32.mxu0 0.0
        %2334 = vmatmul.mubr.f32.gmra.mrb[0].mxu0 %v2265
        %v2335 = vpop.f32.mrb[0].mxu0
        %v2336 = vadd.f32 %v468, %v2335
        %v2337 = vpop.f32.mrb[0].mxu0
        %2338 = vmatprep.mubr.f32.mxu0 0.0
        %2339 = vmatmul.mubr.f32.gmra.mrb[0].mxu0 %v2267
        %v2340 = vpop.f32.mrb[0].mxu0
        %v2341 = vadd.f32 %v468, %v2340
        %v2342 = vpop.f32.mrb[0].mxu0
        %2343 = vdwg.mxu0
        %v2346 = vcombine.high %v2336, %v2336
        %v2347 = vcombine.high %v2341, %v2341
        %v2348 = vsel %vm493, %v2336, 0
        %2350 = vmatprep.subr.mxu0 0.0
        %2351 = vmatpush1.xpose.msra.mxu0 %v990
        %2352 = vmatprep.subr.mxu0 0.0
        %2353 = vmatpush1.xpose.msra.mxu0 %v993
        %2354 = vmatprep.subr.mxu0 0.0
        %2355 = vmatpush1.xpose.msra.mxu0 0.0
        %2356 = vmatprep.subr.mxu0 0.0
        %2357 = vmatpush1.xpose.msra.mxu0 0.0
        %2358 = vmatprep.subr.mxu0 0.0
        %2359 = vmatpush1.xpose.msra.mxu0 0.0
        %2360 = vmatprep.subr.mxu0 0.0
        %2361 = vmatpush1.xpose.msra.mxu0 0.0
        %2362 = vmatprep.subr.mxu0 0.0
        %2363 = vmatpush1.xpose.msra.mxu0 0.0
        %2364 = vmatprep.subr.mxu0 0.0
        %2365 = vmatpush1.xpose.msra.mxu0 0.0
        %2366 = vmatprep.subr.mxu0 0.0
        %2367 = vmatpush1.xpose.msra.mxu0 0.0
        %2368 = vmatprep.subr.mxu0 0.0
        %2369 = vmatpush1.xpose.msra.mxu0 0.0
        %2370 = vmatprep.subr.mxu0 0.0
        %2371 = vmatpush1.xpose.msra.mxu0 0.0
        %2372 = vmatprep.subr.mxu0 0.0
        %2373 = vmatpush1.xpose.msra.mxu0 0.0
        %2374 = vmatprep.subr.mxu0 0.0
        %2375 = vmatpush1.xpose.msra.mxu0 0.0
        %2376 = vmatprep.subr.mxu0 0.0
        %2377 = vmatpush1.xpose.msra.mxu0 0.0
        %2378 = vmatprep.subr.mxu0 0.0
        %2379 = vmatpush1.xpose.msra.mxu0 0.0
        %2380 = vmatprep.subr.mxu0 0.0
        %2381 = vmatpush1.xpose.msra.mxu0 0.0
        %2382 = vmatprep.subr.mxu0 0.0
        %2383 = vmatpush1.xpose.msra.mxu0 0.0
        %2384 = vmatprep.subr.mxu0 0.0
        %2385 = vmatpush1.xpose.msra.mxu0 0.0
        %2386 = vmatprep.subr.mxu0 0.0
        %2387 = vmatpush1.xpose.msra.mxu0 0.0
        %2388 = vmatprep.subr.mxu0 0.0
        %2389 = vmatpush1.xpose.msra.mxu0 0.0
        %2390 = vmatprep.subr.mxu0 0.0
        %2391 = vmatpush1.xpose.msra.mxu0 0.0
        %2392 = vmatprep.subr.mxu0 0.0
        %2393 = vmatpush1.xpose.msra.mxu0 0.0
        %2394 = vmatprep.subr.mxu0 0.0
        %2395 = vmatpush1.xpose.msra.mxu0 0.0
        %2396 = vmatprep.subr.mxu0 0.0
        %2397 = vmatpush1.xpose.msra.mxu0 0.0
        %2398 = vmatprep.subr.mxu0 0.0
        %2399 = vmatpush1.xpose.msra.mxu0 0.0
        %2400 = vmatprep.subr.mxu0 0.0
        %2401 = vmatpush1.xpose.msra.mxu0 0.0
        %2402 = vmatprep.subr.mxu0 0.0
        %2403 = vmatpush1.xpose.msra.mxu0 0.0
        %2404 = vmatprep.subr.mxu0 0.0
        %2405 = vmatpush1.xpose.msra.mxu0 0.0
        %2406 = vmatprep.subr.mxu0 0.0
        %2407 = vmatpush1.xpose.msra.mxu0 0.0
        %2408 = vmatprep.subr.mxu0 0.0
        %2409 = vmatpush1.xpose.msra.mxu0 0.0
        %2410 = vmatprep.subr.mxu0 0.0
        %2411 = vmatpush1.xpose.msra.mxu0 0.0
        %2412 = vmatprep.subr.mxu0 0.0
        %2413 = vmatpush1.xpose.msra.mxu0 0.0
        %2414 = vmatprep.mubr.f32.mxu0 0.0
        %2415 = vmatmul.mubr.f32.gmra.mrb[0].mxu0 %v2348
        %v2416 = vpop.f32.mrb[0].mxu0
        %v2417 = vadd.f32 0.0, %v2416
        %v2418 = vpop.f32.mrb[0].mxu0
        %2419 = vdwg.mxu0
        %v2420 = vsel %vm493, %v2346, 0
        %2422 = vmatprep.subr.mxu0 0.0
        %2423 = vmatpush1.xpose.msra.mxu0 %v1068
        %2424 = vmatprep.subr.mxu0 0.0
        %2425 = vmatpush1.xpose.msra.mxu0 %v1071
        %2426 = vmatprep.subr.mxu0 0.0
        %2427 = vmatpush1.xpose.msra.mxu0 0.0
        %2428 = vmatprep.subr.mxu0 0.0
        %2429 = vmatpush1.xpose.msra.mxu0 0.0
        %2430 = vmatprep.subr.mxu0 0.0
        %2431 = vmatpush1.xpose.msra.mxu0 0.0
        %2432 = vmatprep.subr.mxu0 0.0
        %2433 = vmatpush1.xpose.msra.mxu0 0.0
        %2434 = vmatprep.subr.mxu0 0.0
        %2435 = vmatpush1.xpose.msra.mxu0 0.0
        %2436 = vmatprep.subr.mxu0 0.0
        %2437 = vmatpush1.xpose.msra.mxu0 0.0
        %2438 = vmatprep.subr.mxu0 0.0
        %2439 = vmatpush1.xpose.msra.mxu0 0.0
        %2440 = vmatprep.subr.mxu0 0.0
        %2441 = vmatpush1.xpose.msra.mxu0 0.0
        %2442 = vmatprep.subr.mxu0 0.0
        %2443 = vmatpush1.xpose.msra.mxu0 0.0
        %2444 = vmatprep.subr.mxu0 0.0
        %2445 = vmatpush1.xpose.msra.mxu0 0.0
        %2446 = vmatprep.subr.mxu0 0.0
        %2447 = vmatpush1.xpose.msra.mxu0 0.0
        %2448 = vmatprep.subr.mxu0 0.0
        %2449 = vmatpush1.xpose.msra.mxu0 0.0
        %2450 = vmatprep.subr.mxu0 0.0
        %2451 = vmatpush1.xpose.msra.mxu0 0.0
        %2452 = vmatprep.subr.mxu0 0.0
        %2453 = vmatpush1.xpose.msra.mxu0 0.0
        %2454 = vmatprep.subr.mxu0 0.0
        %2455 = vmatpush1.xpose.msra.mxu0 0.0
        %2456 = vmatprep.subr.mxu0 0.0
        %2457 = vmatpush1.xpose.msra.mxu0 0.0
        %2458 = vmatprep.subr.mxu0 0.0
        %2459 = vmatpush1.xpose.msra.mxu0 0.0
        %2460 = vmatprep.subr.mxu0 0.0
        %2461 = vmatpush1.xpose.msra.mxu0 0.0
        %2462 = vmatprep.subr.mxu0 0.0
        %2463 = vmatpush1.xpose.msra.mxu0 0.0
        %2464 = vmatprep.subr.mxu0 0.0
        %2465 = vmatpush1.xpose.msra.mxu0 0.0
        %2466 = vmatprep.subr.mxu0 0.0
        %2467 = vmatpush1.xpose.msra.mxu0 0.0
        %2468 = vmatprep.subr.mxu0 0.0
        %2469 = vmatpush1.xpose.msra.mxu0 0.0
        %2470 = vmatprep.subr.mxu0 0.0
        %2471 = vmatpush1.xpose.msra.mxu0 0.0
        %2472 = vmatprep.subr.mxu0 0.0
        %2473 = vmatpush1.xpose.msra.mxu0 0.0
        %2474 = vmatprep.subr.mxu0 0.0
        %2475 = vmatpush1.xpose.msra.mxu0 0.0
        %2476 = vmatprep.subr.mxu0 0.0
        %2477 = vmatpush1.xpose.msra.mxu0 0.0
        %2478 = vmatprep.subr.mxu0 0.0
        %2479 = vmatpush1.xpose.msra.mxu0 0.0
        %2480 = vmatprep.subr.mxu0 0.0
        %2481 = vmatpush1.xpose.msra.mxu0 0.0
        %2482 = vmatprep.subr.mxu0 0.0
        %2483 = vmatpush1.xpose.msra.mxu0 0.0
        %2484 = vmatprep.subr.mxu0 0.0
        %2485 = vmatpush1.xpose.msra.mxu0 0.0
        %2486 = vmatprep.mubr.f32.mxu0 0.0
        %2487 = vmatmul.mubr.f32.gmra.mrb[0].mxu0 %v2420
        %v2488 = vpop.f32.mrb[0].mxu0
        %v2489 = vadd.f32 0.0, %v2488
        %v2490 = vpop.f32.mrb[0].mxu0
        %2491 = vdwg.mxu0
        %v2492 = vsel %vm493, %v2341, 0
        %2494 = vmatprep.subr.mxu0 0.0
        %2495 = vmatpush1.xpose.msra.mxu0 %v1146
        %2496 = vmatprep.subr.mxu0 0.0
        %2497 = vmatpush1.xpose.msra.mxu0 %v1149
        %2498 = vmatprep.subr.mxu0 0.0
        %2499 = vmatpush1.xpose.msra.mxu0 0.0
        %2500 = vmatprep.subr.mxu0 0.0
        %2501 = vmatpush1.xpose.msra.mxu0 0.0
        %2502 = vmatprep.subr.mxu0 0.0
        %2503 = vmatpush1.xpose.msra.mxu0 0.0
        %2504 = vmatprep.subr.mxu0 0.0
        %2505 = vmatpush1.xpose.msra.mxu0 0.0
        %2506 = vmatprep.subr.mxu0 0.0
        %2507 = vmatpush1.xpose.msra.mxu0 0.0
        %2508 = vmatprep.subr.mxu0 0.0
        %2509 = vmatpush1.xpose.msra.mxu0 0.0
        %2510 = vmatprep.subr.mxu0 0.0
        %2511 = vmatpush1.xpose.msra.mxu0 0.0
        %2512 = vmatprep.subr.mxu0 0.0
        %2513 = vmatpush1.xpose.msra.mxu0 0.0
        %2514 = vmatprep.subr.mxu0 0.0
        %2515 = vmatpush1.xpose.msra.mxu0 0.0
        %2516 = vmatprep.subr.mxu0 0.0
        %2517 = vmatpush1.xpose.msra.mxu0 0.0
        %2518 = vmatprep.subr.mxu0 0.0
        %2519 = vmatpush1.xpose.msra.mxu0 0.0
        %2520 = vmatprep.subr.mxu0 0.0
        %2521 = vmatpush1.xpose.msra.mxu0 0.0
        %2522 = vmatprep.subr.mxu0 0.0
        %2523 = vmatpush1.xpose.msra.mxu0 0.0
        %2524 = vmatprep.subr.mxu0 0.0
        %2525 = vmatpush1.xpose.msra.mxu0 0.0
        %2526 = vmatprep.subr.mxu0 0.0
        %2527 = vmatpush1.xpose.msra.mxu0 0.0
        %2528 = vmatprep.subr.mxu0 0.0
        %2529 = vmatpush1.xpose.msra.mxu0 0.0
        %2530 = vmatprep.subr.mxu0 0.0
        %2531 = vmatpush1.xpose.msra.mxu0 0.0
        %2532 = vmatprep.subr.mxu0 0.0
        %2533 = vmatpush1.xpose.msra.mxu0 0.0
        %2534 = vmatprep.subr.mxu0 0.0
        %2535 = vmatpush1.xpose.msra.mxu0 0.0
        %2536 = vmatprep.subr.mxu0 0.0
        %2537 = vmatpush1.xpose.msra.mxu0 0.0
        %2538 = vmatprep.subr.mxu0 0.0
        %2539 = vmatpush1.xpose.msra.mxu0 0.0
        %2540 = vmatprep.subr.mxu0 0.0
        %2541 = vmatpush1.xpose.msra.mxu0 0.0
        %2542 = vmatprep.subr.mxu0 0.0
        %2543 = vmatpush1.xpose.msra.mxu0 0.0
        %2544 = vmatprep.subr.mxu0 0.0
        %2545 = vmatpush1.xpose.msra.mxu0 0.0
        %2546 = vmatprep.subr.mxu0 0.0
        %2547 = vmatpush1.xpose.msra.mxu0 0.0
        %2548 = vmatprep.subr.mxu0 0.0
        %2549 = vmatpush1.xpose.msra.mxu0 0.0
        %2550 = vmatprep.subr.mxu0 0.0
        %2551 = vmatpush1.xpose.msra.mxu0 0.0
        %2552 = vmatprep.subr.mxu0 0.0
        %2553 = vmatpush1.xpose.msra.mxu0 0.0
        %2554 = vmatprep.subr.mxu0 0.0
        %2555 = vmatpush1.xpose.msra.mxu0 0.0
        %2556 = vmatprep.subr.mxu0 0.0
        %2557 = vmatpush1.xpose.msra.mxu0 0.0
        %2558 = vmatprep.mubr.f32.mxu0 0.0
        %2559 = vmatmul.mubr.f32.gmra.mrb[0].mxu0 %v2492
        %v2560 = vpop.f32.mrb[0].mxu0
        %v2561 = vadd.f32 0.0, %v2560
        %v2562 = vpop.f32.mrb[0].mxu0
        %2563 = vdwg.mxu0
        %v2564 = vsel %vm493, %v2347, 0
        %2566 = vmatprep.subr.mxu0 0.0
        %2567 = vmatpush1.xpose.msra.mxu0 %v1224
        %2568 = vmatprep.subr.mxu0 0.0
        %2569 = vmatpush1.xpose.msra.mxu0 %v1227
        %2570 = vmatprep.subr.mxu0 0.0
        %2571 = vmatpush1.xpose.msra.mxu0 0.0
        %2572 = vmatprep.subr.mxu0 0.0
        %2573 = vmatpush1.xpose.msra.mxu0 0.0
        %2574 = vmatprep.subr.mxu0 0.0
        %2575 = vmatpush1.xpose.msra.mxu0 0.0
        %2576 = vmatprep.subr.mxu0 0.0
        %2577 = vmatpush1.xpose.msra.mxu0 0.0
        %2578 = vmatprep.subr.mxu0 0.0
        %2579 = vmatpush1.xpose.msra.mxu0 0.0
        %2580 = vmatprep.subr.mxu0 0.0
        %2581 = vmatpush1.xpose.msra.mxu0 0.0
        %2582 = vmatprep.subr.mxu0 0.0
        %2583 = vmatpush1.xpose.msra.mxu0 0.0
        %2584 = vmatprep.subr.mxu0 0.0
        %2585 = vmatpush1.xpose.msra.mxu0 0.0
        %2586 = vmatprep.subr.mxu0 0.0
        %2587 = vmatpush1.xpose.msra.mxu0 0.0
        %2588 = vmatprep.subr.mxu0 0.0
        %2589 = vmatpush1.xpose.msra.mxu0 0.0
        %2590 = vmatprep.subr.mxu0 0.0
        %2591 = vmatpush1.xpose.msra.mxu0 0.0
        %2592 = vmatprep.subr.mxu0 0.0
        %2593 = vmatpush1.xpose.msra.mxu0 0.0
        %2594 = vmatprep.subr.mxu0 0.0
        %2595 = vmatpush1.xpose.msra.mxu0 0.0
        %2596 = vmatprep.subr.mxu0 0.0
        %2597 = vmatpush1.xpose.msra.mxu0 0.0
        %2598 = vmatprep.subr.mxu0 0.0
        %2599 = vmatpush1.xpose.msra.mxu0 0.0
        %2600 = vmatprep.subr.mxu0 0.0
        %2601 = vmatpush1.xpose.msra.mxu0 0.0
        %2602 = vmatprep.subr.mxu0 0.0
        %2603 = vmatpush1.xpose.msra.mxu0 0.0
        %2604 = vmatprep.subr.mxu0 0.0
        %2605 = vmatpush1.xpose.msra.mxu0 0.0
        %2606 = vmatprep.subr.mxu0 0.0
        %2607 = vmatpush1.xpose.msra.mxu0 0.0
        %2608 = vmatprep.subr.mxu0 0.0
        %2609 = vmatpush1.xpose.msra.mxu0 0.0
        %2610 = vmatprep.subr.mxu0 0.0
        %2611 = vmatpush1.xpose.msra.mxu0 0.0
        %2612 = vmatprep.subr.mxu0 0.0
        %2613 = vmatpush1.xpose.msra.mxu0 0.0
        %2614 = vmatprep.subr.mxu0 0.0
        %2615 = vmatpush1.xpose.msra.mxu0 0.0
        %2616 = vmatprep.subr.mxu0 0.0
        %2617 = vmatpush1.xpose.msra.mxu0 0.0
        %2618 = vmatprep.subr.mxu0 0.0
        %2619 = vmatpush1.xpose.msra.mxu0 0.0
        %2620 = vmatprep.subr.mxu0 0.0
        %2621 = vmatpush1.xpose.msra.mxu0 0.0
        %2622 = vmatprep.subr.mxu0 0.0
        %2623 = vmatpush1.xpose.msra.mxu0 0.0
        %2624 = vmatprep.subr.mxu0 0.0
        %2625 = vmatpush1.xpose.msra.mxu0 0.0
        %2626 = vmatprep.subr.mxu0 0.0
        %2627 = vmatpush1.xpose.msra.mxu0 0.0
        %2628 = vmatprep.subr.mxu0 0.0
        %2629 = vmatpush1.xpose.msra.mxu0 0.0
        %2630 = vmatprep.mubr.f32.mxu0 0.0
        %2631 = vmatmul.mubr.f32.gmra.mrb[0].mxu0 %v2564
        %v2632 = vpop.f32.mrb[0].mxu0
        %v2633 = vadd.f32 0.0, %v2632
        %v2634 = vpop.f32.mrb[0].mxu0
        %2635 = vdwg.mxu0
        %v2636 = vmul.f32 %v2417, 0.17677669
        %v2637 = vmul.f32 %v2489, 0.17677669
        %v2638 = vmul.f32 %v2561, 0.17677669
        %v2639 = vmul.f32 %v2633, 0.17677669
        %v2640 = vsel %vm1303, %v2636, -inf
        %v2641 = vrot.slane %v2640, 4
        %v2642 = vmax.f32 %v2640, %v2641
        %v2643 = vrot.slane %v2642, 2
        %v2644 = vmax.f32 %v2642, %v2643
        %v2645 = vrot.slane %v2644, 1
        %v2646 = vmax.f32 %v2644, %v2645
        %v2647 = vsel %vm1303, %v2637, -inf
        %v2648 = vrot.slane %v2647, 4
        %v2649 = vmax.f32 %v2647, %v2648
        %v2650 = vrot.slane %v2649, 2
        %v2651 = vmax.f32 %v2649, %v2650
        %v2652 = vrot.slane %v2651, 1
        %v2653 = vmax.f32 %v2651, %v2652
        %v2654 = vsel %vm1303, %v2638, -inf
        %v2655 = vrot.slane %v2654, 4
        %v2656 = vmax.f32 %v2654, %v2655
        %v2657 = vrot.slane %v2656, 2
        %v2658 = vmax.f32 %v2656, %v2657
        %v2659 = vrot.slane %v2658, 1
        %v2660 = vmax.f32 %v2658, %v2659
        %v2661 = vsel %vm1303, %v2639, -inf
        %v2662 = vrot.slane %v2661, 4
        %v2663 = vmax.f32 %v2661, %v2662
        %v2664 = vrot.slane %v2663, 2
        %v2665 = vmax.f32 %v2663, %v2664
        %v2666 = vrot.slane %v2665, 1
        %v2667 = vmax.f32 %v2665, %v2666
        %v2668 = vsub.f32 %v2636, %v2646
        %v2669 = vsub.f32 %v2637, %v2653
        %v2670 = vsub.f32 %v2638, %v2660
        %v2671 = vsub.f32 %v2639, %v2667
        %v2672 = vmul.f32 %v2668, 1.442695
        %v2673 = vpow.pop %v2672
        %v2674 = vmul.f32 %v2669, 1.442695
        %v2675 = vpow.pop %v2674
        %v2676 = vmul.f32 %v2670, 1.442695
        %v2677 = vpow.pop %v2676
        %v2678 = vmul.f32 %v2671, 1.442695
        %v2679 = vpow.pop %v2678
        %v2680 = vsel %vm1303, %v2673, 0.0
        %v2681 = vrot.slane %v2680, 4
        %v2682 = vadd.f32 %v2680, %v2681
        %v2683 = vrot.slane %v2682, 2
        %v2684 = vadd.f32 %v2682, %v2683
        %v2685 = vrot.slane %v2684, 1
        %v2686 = vadd.f32 %v2684, %v2685
        %v2687 = vsel %vm1303, %v2675, 0.0
        %v2688 = vrot.slane %v2687, 4
        %v2689 = vadd.f32 %v2687, %v2688
        %v2690 = vrot.slane %v2689, 2
        %v2691 = vadd.f32 %v2689, %v2690
        %v2692 = vrot.slane %v2691, 1
        %v2693 = vadd.f32 %v2691, %v2692
        %v2694 = vsel %vm1303, %v2677, 0.0
        %v2695 = vrot.slane %v2694, 4
        %v2696 = vadd.f32 %v2694, %v2695
        %v2697 = vrot.slane %v2696, 2
        %v2698 = vadd.f32 %v2696, %v2697
        %v2699 = vrot.slane %v2698, 1
        %v2700 = vadd.f32 %v2698, %v2699
        %v2701 = vsel %vm1303, %v2679, 0.0
        %v2702 = vrot.slane %v2701, 4
        %v2703 = vadd.f32 %v2701, %v2702
        %v2704 = vrot.slane %v2703, 2
        %v2705 = vadd.f32 %v2703, %v2704
        %v2706 = vrot.slane %v2705, 1
        %v2707 = vadd.f32 %v2705, %v2706
        %v2708 = vrcp.pop %v2686
        %v2709 = vrcp.pop %v2693
        %v2710 = vrcp.pop %v2700
        %v2711 = vrcp.pop %v2707
        %v2712 = vmul.f32 %v2673, %v2708
        %v2713 = vmul.f32 %v2675, %v2709
        %v2714 = vmul.f32 %v2677, %v2710
        %v2715 = vmul.f32 %v2679, %v2711
        %v2716 = vadd.f32 %v2712, 1e-08
        %v2717 = vadd.f32 %v2713, 1e-08
        %v2718 = vadd.f32 %v2714, 1e-08
        %v2719 = vadd.f32 %v2715, 1e-08
        %v2720 = vsel %vm1303, %v2716, 0.0
        %2721 = vadd.xlane.f32.xlu0 %v2720
        %v2722 = vpop.xlane.xlu0 %2721
        %v2723 = vsel %vm1303, %v2717, 0.0
        %2724 = vadd.xlane.f32.xlu0 %v2723
        %v2725 = vpop.xlane.xlu0 %2724
        %v2726 = vsel %vm1303, %v2718, 0.0
        %2727 = vadd.xlane.f32.xlu0 %v2726
        %v2728 = vpop.xlane.xlu0 %2727
        %v2729 = vsel %vm1303, %v2719, 0.0
        %2730 = vadd.xlane.f32.xlu0 %v2729
        %v2731 = vpop.xlane.xlu0 %2730
        %v2732 = vrcp.pop %v2722
        %v2733 = vrcp.pop %v2725
        %v2734 = vrcp.pop %v2728
        %v2735 = vrcp.pop %v2731
        %v2736 = vmul.f32 %v2716, %v2732
        %v2737 = vmul.f32 %v2717, %v2733
        %v2738 = vmul.f32 %v2718, %v2734
        %v2739 = vmul.f32 %v2719, %v2735
        %v2741 = vsel %vm1410, %v2736, 0
        %2743 = vmatprep.subr.mxu0 0.0
        %2744 = vmatpush1.msra.mxu0 %v1405
        %2745 = vmatprep.subr.mxu0 0.0
        %2746 = vmatpush1.msra.mxu0 %v1407
        %2747 = vmatprep.subr.mxu0 0.0
        %2748 = vmatpush1.msra.mxu0 0.0
        %2749 = vmatprep.subr.mxu0 0.0
        %2750 = vmatpush1.msra.mxu0 0.0
        %2751 = vmatprep.subr.mxu0 0.0
        %2752 = vmatpush1.msra.mxu0 0.0
        %2753 = vmatprep.subr.mxu0 0.0
        %2754 = vmatpush1.msra.mxu0 0.0
        %2755 = vmatprep.subr.mxu0 0.0
        %2756 = vmatpush1.msra.mxu0 0.0
        %2757 = vmatprep.subr.mxu0 0.0
        %2758 = vmatpush1.msra.mxu0 0.0
        %2759 = vmatprep.subr.mxu0 0.0
        %2760 = vmatpush1.msra.mxu0 0.0
        %2761 = vmatprep.subr.mxu0 0.0
        %2762 = vmatpush1.msra.mxu0 0.0
        %2763 = vmatprep.subr.mxu0 0.0
        %2764 = vmatpush1.msra.mxu0 0.0
        %2765 = vmatprep.subr.mxu0 0.0
        %2766 = vmatpush1.msra.mxu0 0.0
        %2767 = vmatprep.subr.mxu0 0.0
        %2768 = vmatpush1.msra.mxu0 0.0
        %2769 = vmatprep.subr.mxu0 0.0
        %2770 = vmatpush1.msra.mxu0 0.0
        %2771 = vmatprep.subr.mxu0 0.0
        %2772 = vmatpush1.msra.mxu0 0.0
        %2773 = vmatprep.subr.mxu0 0.0
        %2774 = vmatpush1.msra.mxu0 0.0
        %2775 = vmatprep.subr.mxu0 0.0
        %2776 = vmatpush1.msra.mxu0 0.0
        %2777 = vmatprep.subr.mxu0 0.0
        %2778 = vmatpush1.msra.mxu0 0.0
        %2779 = vmatprep.subr.mxu0 0.0
        %2780 = vmatpush1.msra.mxu0 0.0
        %2781 = vmatprep.subr.mxu0 0.0
        %2782 = vmatpush1.msra.mxu0 0.0
        %2783 = vmatprep.subr.mxu0 0.0
        %2784 = vmatpush1.msra.mxu0 0.0
        %2785 = vmatprep.subr.mxu0 0.0
        %2786 = vmatpush1.msra.mxu0 0.0
        %2787 = vmatprep.subr.mxu0 0.0
        %2788 = vmatpush1.msra.mxu0 0.0
        %2789 = vmatprep.subr.mxu0 0.0
        %2790 = vmatpush1.msra.mxu0 0.0
        %2791 = vmatprep.subr.mxu0 0.0
        %2792 = vmatpush1.msra.mxu0 0.0
        %2793 = vmatprep.subr.mxu0 0.0
        %2794 = vmatpush1.msra.mxu0 0.0
        %2795 = vmatprep.subr.mxu0 0.0
        %2796 = vmatpush1.msra.mxu0 0.0
        %2797 = vmatprep.subr.mxu0 0.0
        %2798 = vmatpush1.msra.mxu0 0.0
        %2799 = vmatprep.subr.mxu0 0.0
        %2800 = vmatpush1.msra.mxu0 0.0
        %2801 = vmatprep.subr.mxu0 0.0
        %2802 = vmatpush1.msra.mxu0 0.0
        %2803 = vmatprep.subr.mxu0 0.0
        %2804 = vmatpush1.msra.mxu0 0.0
        %2805 = vmatprep.subr.mxu0 0.0
        %2806 = vmatpush1.msra.mxu0 0.0
        %2807 = vmatprep.mubr.f32.mxu0 0.0
        %2808 = vmatmul.mubr.f32.gmra.mrb[0].mxu0 %v2741
        %v2809 = vpop.f32.mrb[0].mxu0
        %v2810 = vadd.f32 0.0, %v2809
        %v2811 = vpop.f32.mrb[0].mxu0
        %2812 = vdwg.mxu0
        %v2814 = vsel %vm1410, %v2737, 0
        %2816 = vmatprep.subr.mxu0 0.0
        %2817 = vmatpush1.msra.mxu0 %v1485
        %2818 = vmatprep.subr.mxu0 0.0
        %2819 = vmatpush1.msra.mxu0 %v1487
        %2820 = vmatprep.subr.mxu0 0.0
        %2821 = vmatpush1.msra.mxu0 0.0
        %2822 = vmatprep.subr.mxu0 0.0
        %2823 = vmatpush1.msra.mxu0 0.0
        %2824 = vmatprep.subr.mxu0 0.0
        %2825 = vmatpush1.msra.mxu0 0.0
        %2826 = vmatprep.subr.mxu0 0.0
        %2827 = vmatpush1.msra.mxu0 0.0
        %2828 = vmatprep.subr.mxu0 0.0
        %2829 = vmatpush1.msra.mxu0 0.0
        %2830 = vmatprep.subr.mxu0 0.0
        %2831 = vmatpush1.msra.mxu0 0.0
        %2832 = vmatprep.subr.mxu0 0.0
        %2833 = vmatpush1.msra.mxu0 0.0
        %2834 = vmatprep.subr.mxu0 0.0
        %2835 = vmatpush1.msra.mxu0 0.0
        %2836 = vmatprep.subr.mxu0 0.0
        %2837 = vmatpush1.msra.mxu0 0.0
        %2838 = vmatprep.subr.mxu0 0.0
        %2839 = vmatpush1.msra.mxu0 0.0
        %2840 = vmatprep.subr.mxu0 0.0
        %2841 = vmatpush1.msra.mxu0 0.0
        %2842 = vmatprep.subr.mxu0 0.0
        %2843 = vmatpush1.msra.mxu0 0.0
        %2844 = vmatprep.subr.mxu0 0.0
        %2845 = vmatpush1.msra.mxu0 0.0
        %2846 = vmatprep.subr.mxu0 0.0
        %2847 = vmatpush1.msra.mxu0 0.0
        %2848 = vmatprep.subr.mxu0 0.0
        %2849 = vmatpush1.msra.mxu0 0.0
        %2850 = vmatprep.subr.mxu0 0.0
        %2851 = vmatpush1.msra.mxu0 0.0
        %2852 = vmatprep.subr.mxu0 0.0
        %2853 = vmatpush1.msra.mxu0 0.0
        %2854 = vmatprep.subr.mxu0 0.0
        %2855 = vmatpush1.msra.mxu0 0.0
        %2856 = vmatprep.subr.mxu0 0.0
        %2857 = vmatpush1.msra.mxu0 0.0
        %2858 = vmatprep.subr.mxu0 0.0
        %2859 = vmatpush1.msra.mxu0 0.0
        %2860 = vmatprep.subr.mxu0 0.0
        %2861 = vmatpush1.msra.mxu0 0.0
        %2862 = vmatprep.subr.mxu0 0.0
        %2863 = vmatpush1.msra.mxu0 0.0
        %2864 = vmatprep.subr.mxu0 0.0
        %2865 = vmatpush1.msra.mxu0 0.0
        %2866 = vmatprep.subr.mxu0 0.0
        %2867 = vmatpush1.msra.mxu0 0.0
        %2868 = vmatprep.subr.mxu0 0.0
        %2869 = vmatpush1.msra.mxu0 0.0
        %2870 = vmatprep.subr.mxu0 0.0
        %2871 = vmatpush1.msra.mxu0 0.0
        %2872 = vmatprep.subr.mxu0 0.0
        %2873 = vmatpush1.msra.mxu0 0.0
        %2874 = vmatprep.subr.mxu0 0.0
        %2875 = vmatpush1.msra.mxu0 0.0
        %2876 = vmatprep.subr.mxu0 0.0
        %2877 = vmatpush1.msra.mxu0 0.0
        %2878 = vmatprep.subr.mxu0 0.0
        %2879 = vmatpush1.msra.mxu0 0.0
        %2880 = vmatprep.mubr.f32.mxu0 0.0
        %2881 = vmatmul.mubr.f32.gmra.mrb[0].mxu0 %v2814
        %v2882 = vpop.f32.mrb[0].mxu0
        %v2883 = vadd.f32 0.0, %v2882
        %v2884 = vpop.f32.mrb[0].mxu0
        %2885 = vdwg.mxu0
        %v2887 = vsel %vm1410, %v2738, 0
        %2889 = vmatprep.subr.mxu0 0.0
        %2890 = vmatpush1.msra.mxu0 %v1564
        %2891 = vmatprep.subr.mxu0 0.0
        %2892 = vmatpush1.msra.mxu0 %v1566
        %2893 = vmatprep.subr.mxu0 0.0
        %2894 = vmatpush1.msra.mxu0 0.0
        %2895 = vmatprep.subr.mxu0 0.0
        %2896 = vmatpush1.msra.mxu0 0.0
        %2897 = vmatprep.subr.mxu0 0.0
        %2898 = vmatpush1.msra.mxu0 0.0
        %2899 = vmatprep.subr.mxu0 0.0
        %2900 = vmatpush1.msra.mxu0 0.0
        %2901 = vmatprep.subr.mxu0 0.0
        %2902 = vmatpush1.msra.mxu0 0.0
        %2903 = vmatprep.subr.mxu0 0.0
        %2904 = vmatpush1.msra.mxu0 0.0
        %2905 = vmatprep.subr.mxu0 0.0
        %2906 = vmatpush1.msra.mxu0 0.0
        %2907 = vmatprep.subr.mxu0 0.0
        %2908 = vmatpush1.msra.mxu0 0.0
        %2909 = vmatprep.subr.mxu0 0.0
        %2910 = vmatpush1.msra.mxu0 0.0
        %2911 = vmatprep.subr.mxu0 0.0
        %2912 = vmatpush1.msra.mxu0 0.0
        %2913 = vmatprep.subr.mxu0 0.0
        %2914 = vmatpush1.msra.mxu0 0.0
        %2915 = vmatprep.subr.mxu0 0.0
        %2916 = vmatpush1.msra.mxu0 0.0
        %2917 = vmatprep.subr.mxu0 0.0
        %2918 = vmatpush1.msra.mxu0 0.0
        %2919 = vmatprep.subr.mxu0 0.0
        %2920 = vmatpush1.msra.mxu0 0.0
        %2921 = vmatprep.subr.mxu0 0.0
        %2922 = vmatpush1.msra.mxu0 0.0
        %2923 = vmatprep.subr.mxu0 0.0
        %2924 = vmatpush1.msra.mxu0 0.0
        %2925 = vmatprep.subr.mxu0 0.0
        %2926 = vmatpush1.msra.mxu0 0.0
        %2927 = vmatprep.subr.mxu0 0.0
        %2928 = vmatpush1.msra.mxu0 0.0
        %2929 = vmatprep.subr.mxu0 0.0
        %2930 = vmatpush1.msra.mxu0 0.0
        %2931 = vmatprep.subr.mxu0 0.0
        %2932 = vmatpush1.msra.mxu0 0.0
        %2933 = vmatprep.subr.mxu0 0.0
        %2934 = vmatpush1.msra.mxu0 0.0
        %2935 = vmatprep.subr.mxu0 0.0
        %2936 = vmatpush1.msra.mxu0 0.0
        %2937 = vmatprep.subr.mxu0 0.0
        %2938 = vmatpush1.msra.mxu0 0.0
        %2939 = vmatprep.subr.mxu0 0.0
        %2940 = vmatpush1.msra.mxu0 0.0
        %2941 = vmatprep.subr.mxu0 0.0
        %2942 = vmatpush1.msra.mxu0 0.0
        %2943 = vmatprep.subr.mxu0 0.0
        %2944 = vmatpush1.msra.mxu0 0.0
        %2945 = vmatprep.subr.mxu0 0.0
        %2946 = vmatpush1.msra.mxu0 0.0
        %2947 = vmatprep.subr.mxu0 0.0
        %2948 = vmatpush1.msra.mxu0 0.0
        %2949 = vmatprep.subr.mxu0 0.0
        %2950 = vmatpush1.msra.mxu0 0.0
        %2951 = vmatprep.subr.mxu0 0.0
        %2952 = vmatpush1.msra.mxu0 0.0
        %2953 = vmatprep.mubr.f32.mxu0 0.0
        %2954 = vmatmul.mubr.f32.gmra.mrb[0].mxu0 %v2887
        %v2955 = vpop.f32.mrb[0].mxu0
        %v2956 = vadd.f32 0.0, %v2955
        %v2957 = vpop.f32.mrb[0].mxu0
        %2958 = vdwg.mxu0
        %v2960 = vsel %vm1410, %v2739, 0
        %2962 = vmatprep.subr.mxu0 0.0
        %2963 = vmatpush1.msra.mxu0 %v1643
        %2964 = vmatprep.subr.mxu0 0.0
        %2965 = vmatpush1.msra.mxu0 %v1645
        %2966 = vmatprep.subr.mxu0 0.0
        %2967 = vmatpush1.msra.mxu0 0.0
        %2968 = vmatprep.subr.mxu0 0.0
        %2969 = vmatpush1.msra.mxu0 0.0
        %2970 = vmatprep.subr.mxu0 0.0
        %2971 = vmatpush1.msra.mxu0 0.0
        %2972 = vmatprep.subr.mxu0 0.0
        %2973 = vmatpush1.msra.mxu0 0.0
        %2974 = vmatprep.subr.mxu0 0.0
        %2975 = vmatpush1.msra.mxu0 0.0
        %2976 = vmatprep.subr.mxu0 0.0
        %2977 = vmatpush1.msra.mxu0 0.0
        %2978 = vmatprep.subr.mxu0 0.0
        %2979 = vmatpush1.msra.mxu0 0.0
        %2980 = vmatprep.subr.mxu0 0.0
        %2981 = vmatpush1.msra.mxu0 0.0
        %2982 = vmatprep.subr.mxu0 0.0
        %2983 = vmatpush1.msra.mxu0 0.0
        %2984 = vmatprep.subr.mxu0 0.0
        %2985 = vmatpush1.msra.mxu0 0.0
        %2986 = vmatprep.subr.mxu0 0.0
        %2987 = vmatpush1.msra.mxu0 0.0
        %2988 = vmatprep.subr.mxu0 0.0
        %2989 = vmatpush1.msra.mxu0 0.0
        %2990 = vmatprep.subr.mxu0 0.0
        %2991 = vmatpush1.msra.mxu0 0.0
        %2992 = vmatprep.subr.mxu0 0.0
        %2993 = vmatpush1.msra.mxu0 0.0
        %2994 = vmatprep.subr.mxu0 0.0
        %2995 = vmatpush1.msra.mxu0 0.0
        %2996 = vmatprep.subr.mxu0 0.0
        %2997 = vmatpush1.msra.mxu0 0.0
        %2998 = vmatprep.subr.mxu0 0.0
        %2999 = vmatpush1.msra.mxu0 0.0
        %3000 = vmatprep.subr.mxu0 0.0
        %3001 = vmatpush1.msra.mxu0 0.0
        %3002 = vmatprep.subr.mxu0 0.0
        %3003 = vmatpush1.msra.mxu0 0.0
        %3004 = vmatprep.subr.mxu0 0.0
        %3005 = vmatpush1.msra.mxu0 0.0
        %3006 = vmatprep.subr.mxu0 0.0
        %3007 = vmatpush1.msra.mxu0 0.0
        %3008 = vmatprep.subr.mxu0 0.0
        %3009 = vmatpush1.msra.mxu0 0.0
        %3010 = vmatprep.subr.mxu0 0.0
        %3011 = vmatpush1.msra.mxu0 0.0
        %3012 = vmatprep.subr.mxu0 0.0
        %3013 = vmatpush1.msra.mxu0 0.0
        %3014 = vmatprep.subr.mxu0 0.0
        %3015 = vmatpush1.msra.mxu0 0.0
        %3016 = vmatprep.subr.mxu0 0.0
        %3017 = vmatpush1.msra.mxu0 0.0
        %3018 = vmatprep.subr.mxu0 0.0
        %3019 = vmatpush1.msra.mxu0 0.0
        %3020 = vmatprep.subr.mxu0 0.0
        %3021 = vmatpush1.msra.mxu0 0.0
        %3022 = vmatprep.subr.mxu0 0.0
        %3023 = vmatpush1.msra.mxu0 0.0
        %3024 = vmatprep.subr.mxu0 0.0
        %3025 = vmatpush1.msra.mxu0 0.0
        %3026 = vmatprep.mubr.f32.mxu0 0.0
        %3027 = vmatmul.mubr.f32.gmra.mrb[0].mxu0 %v2960
        %v3028 = vpop.f32.mrb[0].mxu0
        %v3029 = vadd.f32 0.0, %v3028
        %v3030 = vpop.f32.mrb[0].mxu0
        %3031 = vdwg.mxu0
        %v3032 = vld [vmem:[#allocation8] sm:$0xff]
        %v3033 = vld [vmem:[#allocation8 + $0x8] sm:$0xff]
        %v3034 = vld [vmem:[#allocation8 + $0x10] sm:$0xff]
        %v3035 = vld [vmem:[#allocation8 + $0x18] sm:$0xff]
        %v3040 = vcombine.low %v2810, %v2883
        %v3041 = vcombine.low %v2956, %v3029
        %v3042 = vsel %vm493, %v3040, 0
        %v3044 = vsel %vm493, %v3041, 0
        %3046 = vmatprep.subr.mxu0 0.0
        %3047 = vmatpush1.msra.mxu0 %v3032
        %3048 = vmatprep.subr.mxu0 0.0
        %3049 = vmatpush1.msra.mxu0 %v3033
        %3050 = vmatprep.subr.mxu0 0.0
        %3051 = vmatpush1.msra.mxu0 %v3034
        %3052 = vmatprep.subr.mxu0 0.0
        %3053 = vmatpush1.msra.mxu0 %v3035
        %3054 = vmatprep.subr.mxu0 0.0
        %3055 = vmatpush1.msra.mxu0 0.0
        %3056 = vmatprep.subr.mxu0 0.0
        %3057 = vmatpush1.msra.mxu0 0.0
        %3058 = vmatprep.subr.mxu0 0.0
        %3059 = vmatpush1.msra.mxu0 0.0
        %3060 = vmatprep.subr.mxu0 0.0
        %3061 = vmatpush1.msra.mxu0 0.0
        %3062 = vmatprep.subr.mxu0 0.0
        %3063 = vmatpush1.msra.mxu0 0.0
        %3064 = vmatprep.subr.mxu0 0.0
        %3065 = vmatpush1.msra.mxu0 0.0
        %3066 = vmatprep.subr.mxu0 0.0
        %3067 = vmatpush1.msra.mxu0 0.0
        %3068 = vmatprep.subr.mxu0 0.0
        %3069 = vmatpush1.msra.mxu0 0.0
        %3070 = vmatprep.subr.mxu0 0.0
        %3071 = vmatpush1.msra.mxu0 0.0
        %3072 = vmatprep.subr.mxu0 0.0
        %3073 = vmatpush1.msra.mxu0 0.0
        %3074 = vmatprep.subr.mxu0 0.0
        %3075 = vmatpush1.msra.mxu0 0.0
        %3076 = vmatprep.subr.mxu0 0.0
        %3077 = vmatpush1.msra.mxu0 0.0
        %3078 = vmatprep.subr.mxu0 0.0
        %3079 = vmatpush1.msra.mxu0 0.0
        %3080 = vmatprep.subr.mxu0 0.0
        %3081 = vmatpush1.msra.mxu0 0.0
        %3082 = vmatprep.subr.mxu0 0.0
        %3083 = vmatpush1.msra.mxu0 0.0
        %3084 = vmatprep.subr.mxu0 0.0
        %3085 = vmatpush1.msra.mxu0 0.0
        %3086 = vmatprep.subr.mxu0 0.0
        %3087 = vmatpush1.msra.mxu0 0.0
        %3088 = vmatprep.subr.mxu0 0.0
        %3089 = vmatpush1.msra.mxu0 0.0
        %3090 = vmatprep.subr.mxu0 0.0
        %3091 = vmatpush1.msra.mxu0 0.0
        %3092 = vmatprep.subr.mxu0 0.0
        %3093 = vmatpush1.msra.mxu0 0.0
        %3094 = vmatprep.subr.mxu0 0.0
        %3095 = vmatpush1.msra.mxu0 0.0
        %3096 = vmatprep.subr.mxu0 0.0
        %3097 = vmatpush1.msra.mxu0 0.0
        %3098 = vmatprep.subr.mxu0 0.0
        %3099 = vmatpush1.msra.mxu0 0.0
        %3100 = vmatprep.subr.mxu0 0.0
        %3101 = vmatpush1.msra.mxu0 0.0
        %3102 = vmatprep.subr.mxu0 0.0
        %3103 = vmatpush1.msra.mxu0 0.0
        %3104 = vmatprep.subr.mxu0 0.0
        %3105 = vmatpush1.msra.mxu0 0.0
        %3106 = vmatprep.subr.mxu0 0.0
        %3107 = vmatpush1.msra.mxu0 0.0
        %3108 = vmatprep.subr.mxu0 0.0
        %3109 = vmatpush1.msra.mxu0 0.0
        %3110 = vmatprep.mubr.f32.mxu0 0.0
        %3111 = vmatmul.mubr.f32.gmra.mrb[0].mxu0 %v3042
        %v3112 = vpop.f32.mrb[0].mxu0
        %v3113 = vadd.f32 %v472, %v3112
        %v3114 = vpop.f32.mrb[0].mxu0
        %3115 = vmatprep.mubr.f32.mxu0 0.0
        %3116 = vmatmul.mubr.f32.gmra.mrb[0].mxu0 %v3044
        %v3117 = vpop.f32.mrb[0].mxu0
        %v3118 = vadd.f32 %v472, %v3117
        %v3119 = vpop.f32.mrb[0].mxu0
        %3120 = vdwg.mxu0
        %v3121 = vld [vmem:[#allocation10] sm:$0xff]
        %v3122 = vld [vmem:[#allocation10 + $0x8] sm:$0xff]
        %v3123 = vld [vmem:[#allocation10 + $0x10] sm:$0xff]
        %v3124 = vld [vmem:[#allocation10 + $0x18] sm:$0xff]
        %v3125 = vsel %vm493, %v2206, 0
        %v3127 = vsel %vm493, %v2208, 0
        %3129 = vmatprep.subr.mxu0 0.0
        %3130 = vmatpush1.msra.mxu0 %v3121
        %3131 = vmatprep.subr.mxu0 0.0
        %3132 = vmatpush1.msra.mxu0 %v3122
        %3133 = vmatprep.subr.mxu0 0.0
        %3134 = vmatpush1.msra.mxu0 %v3123
        %3135 = vmatprep.subr.mxu0 0.0
        %3136 = vmatpush1.msra.mxu0 %v3124
        %3137 = vmatprep.subr.mxu0 0.0
        %3138 = vmatpush1.msra.mxu0 0.0
        %3139 = vmatprep.subr.mxu0 0.0
        %3140 = vmatpush1.msra.mxu0 0.0
        %3141 = vmatprep.subr.mxu0 0.0
        %3142 = vmatpush1.msra.mxu0 0.0
        %3143 = vmatprep.subr.mxu0 0.0
        %3144 = vmatpush1.msra.mxu0 0.0
        %3145 = vmatprep.subr.mxu0 0.0
        %3146 = vmatpush1.msra.mxu0 0.0
        %3147 = vmatprep.subr.mxu0 0.0
        %3148 = vmatpush1.msra.mxu0 0.0
        %3149 = vmatprep.subr.mxu0 0.0
        %3150 = vmatpush1.msra.mxu0 0.0
        %3151 = vmatprep.subr.mxu0 0.0
        %3152 = vmatpush1.msra.mxu0 0.0
        %3153 = vmatprep.subr.mxu0 0.0
        %3154 = vmatpush1.msra.mxu0 0.0
        %3155 = vmatprep.subr.mxu0 0.0
        %3156 = vmatpush1.msra.mxu0 0.0
        %3157 = vmatprep.subr.mxu0 0.0
        %3158 = vmatpush1.msra.mxu0 0.0
        %3159 = vmatprep.subr.mxu0 0.0
        %3160 = vmatpush1.msra.mxu0 0.0
        %3161 = vmatprep.subr.mxu0 0.0
        %3162 = vmatpush1.msra.mxu0 0.0
        %3163 = vmatprep.subr.mxu0 0.0
        %3164 = vmatpush1.msra.mxu0 0.0
        %3165 = vmatprep.subr.mxu0 0.0
        %3166 = vmatpush1.msra.mxu0 0.0
        %3167 = vmatprep.subr.mxu0 0.0
        %3168 = vmatpush1.msra.mxu0 0.0
        %3169 = vmatprep.subr.mxu0 0.0
        %3170 = vmatpush1.msra.mxu0 0.0
        %3171 = vmatprep.subr.mxu0 0.0
        %3172 = vmatpush1.msra.mxu0 0.0
        %3173 = vmatprep.subr.mxu0 0.0
        %3174 = vmatpush1.msra.mxu0 0.0
        %3175 = vmatprep.subr.mxu0 0.0
        %3176 = vmatpush1.msra.mxu0 0.0
        %3177 = vmatprep.subr.mxu0 0.0
        %3178 = vmatpush1.msra.mxu0 0.0
        %3179 = vmatprep.subr.mxu0 0.0
        %3180 = vmatpush1.msra.mxu0 0.0
        %3181 = vmatprep.subr.mxu0 0.0
        %3182 = vmatpush1.msra.mxu0 0.0
        %3183 = vmatprep.subr.mxu0 0.0
        %3184 = vmatpush1.msra.mxu0 0.0
        %3185 = vmatprep.subr.mxu0 0.0
        %3186 = vmatpush1.msra.mxu0 0.0
        %3187 = vmatprep.subr.mxu0 0.0
        %3188 = vmatpush1.msra.mxu0 0.0
        %3189 = vmatprep.subr.mxu0 0.0
        %3190 = vmatpush1.msra.mxu0 0.0
        %3191 = vmatprep.subr.mxu0 0.0
        %3192 = vmatpush1.msra.mxu0 0.0
        %3193 = vmatprep.mubr.f32.mxu0 0.0
        %3194 = vmatmul.mubr.f32.gmra.mrb[0].mxu0 %v3125
        %v3195 = vpop.f32.mrb[0].mxu0
        %v3196 = vadd.f32 %v476, %v3195
        %v3197 = vpop.f32.mrb[0].mxu0
        %3198 = vmatprep.mubr.f32.mxu0 0.0
        %3199 = vmatmul.mubr.f32.gmra.mrb[0].mxu0 %v3127
        %v3200 = vpop.f32.mrb[0].mxu0
        %v3201 = vadd.f32 %v476, %v3200
        %v3202 = vpop.f32.mrb[0].mxu0
        %3203 = vdwg.mxu0
        %v3204 = vadd.f32 %v3113, %v3196
        %v3205 = vadd.f32 %v3118, %v3201
        %v3206 = vxor.u32 %v3204, 2147483648
        %v3207 = vxor.u32 %v3205, 2147483648
        %v3208 = vmul.f32 %v3206, 1.442695
        %v3209 = vpow.pop %v3208
        %v3210 = vmul.f32 %v3207, 1.442695
        %v3211 = vpow.pop %v3210
        %v3212 = vadd.f32 %v3209, 1.0
        %v3213 = vadd.f32 %v3211, 1.0
        %v3214 = vrcp.pop %v3212
        %v3215 = vmul.f32 1.0, %v3214
        %v3216 = vrcp.pop %v3213
        %v3217 = vmul.f32 1.0, %v3216
        %3220 = vrot.lane.b32.xlu0 %v3196, 64
        %v3221 = vpop.permute.xlu0 %3220
        %3222 = vrot.lane.b32.xlu0 %v3201, 64
        %v3223 = vpop.permute.xlu0 %3222
        %v3226 = vmul.f32 %v3215, %v3221
        %v3227 = vmul.f32 %v3217, %v3223
        %3230 = vrot.lane.b32.xlu0 %v3226, 64
        %v3231 = vpop.permute.xlu0 %3230
        %3232 = vrot.lane.b32.xlu0 %v3227, 64
        %v3233 = vpop.permute.xlu0 %3232
        %v3236 = vadd.f32 %v3113, %v3231
        %v3237 = vadd.f32 %v3118, %v3233
        %v3238 = vtanh.pop %v3236
        %v3239 = vtanh.pop %v3237
        %v3240 = vsub.f32 1.0, %v3215
        %v3241 = vsub.f32 1.0, %v3217
        %3244 = vrot.lane.b32.xlu0 %v3238, 96
        %v3245 = vpop.permute.xlu0 %3244
        %3246 = vrot.lane.b32.xlu0 %v3239, 96
        %v3247 = vpop.permute.xlu0 %3246
        %v3250 = vmul.f32 %v3240, %v3245
        %v3251 = vmul.f32 %v3241, %v3247
        %v3252 = vmul.f32 %v3215, %v2201
        %v3253 = vmul.f32 %v3217, %v2202
        %v3254 = vadd.f32 %v3250, %v3252
        %v3255 = vadd.f32 %v3251, %v3253
        %3258 = vrot.lane.b32.xlu0 %v3254, 96
        %v3259 = vpop.permute.xlu0 %3258
        %3260 = vrot.lane.b32.xlu0 %v3255, 96
        %v3261 = vpop.permute.xlu0 %3260
        %v3264 = vsel %vm493, %v3259, 0.0
        %3265 = vadd.xlane.f32.xlu0 %v3264
        %v3266 = vpop.xlane.xlu0 %3265
        %v3267 = vsel %vm493, %v3261, 0.0
        %3268 = vadd.xlane.f32.xlu0 %v3267
        %v3269 = vpop.xlane.xlu0 %3268
        %v3270 = vmul.f32 %v3266, %v518
        %v3271 = vmul.f32 %v3269, %v518
        %v3272 = vsub.f32 %v3254, %v3270
        %v3273 = vsub.f32 %v3255, %v3271
        %v3274 = vmul.f32 %v3272, %v3272
        %v3275 = vmul.f32 %v3273, %v3273
        %3278 = vrot.lane.b32.xlu0 %v3274, 96
        %v3279 = vpop.permute.xlu0 %3278
        %3280 = vrot.lane.b32.xlu0 %v3275, 96
        %v3281 = vpop.permute.xlu0 %3280
        %v3284 = vsel %vm493, %v3279, 0.0
        %3285 = vadd.xlane.f32.xlu0 %v3284
        %v3286 = vpop.xlane.xlu0 %3285
        %v3287 = vsel %vm493, %v3281, 0.0
        %3288 = vadd.xlane.f32.xlu0 %v3287
        %v3289 = vpop.xlane.xlu0 %3288
        %v3290 = vmul.f32 %v3286, %v518
        %v3291 = vmul.f32 %v3289, %v518
        %v3292 = vadd.f32 %v3290, 1e-05
        %v3293 = vadd.f32 %v3291, 1e-05
        %v3294 = vrsqrt.pop %v3292
        %v3295 = vrsqrt.pop %v3293
        %v3296 = vmul.f32 %v3272, %v3294
        %v3297 = vmul.f32 %v3273, %v3295
        %v3298 = vmul.f32 %v3296, %v1995
        %v3299 = vmul.f32 %v3297, %v1995
        %v3300 = vadd.f32 %v3298, %v2001
        %v3301 = vadd.f32 %v3299, %v2001
        %v3302 = vld [vmem:[#allocation11] sm:$0xff]
        %v3303 = vld [vmem:[#allocation11 + $0x8] sm:$0xff]
        %v3304 = vld [vmem:[#allocation11 + $0x10] sm:$0xff]
        %v3305 = vld [vmem:[#allocation11 + $0x18] sm:$0xff]
        %3308 = vrot.lane.b32.xlu0 %v3300, 96
        %v3309 = vpop.permute.xlu0 %3308
        %3310 = vrot.lane.b32.xlu0 %v3301, 96
        %v3311 = vpop.permute.xlu0 %3310
        %v3312 = vsel %vm493, %v3309, 0
        %v3314 = vsel %vm493, %v3311, 0
        %3316 = vmatprep.subr.mxu0 0.0
        %3317 = vmatpush1.msra.mxu0 %v3302
        %3318 = vmatprep.subr.mxu0 0.0
        %3319 = vmatpush1.msra.mxu0 %v3303
        %3320 = vmatprep.subr.mxu0 0.0
        %3321 = vmatpush1.msra.mxu0 %v3304
        %3322 = vmatprep.subr.mxu0 0.0
        %3323 = vmatpush1.msra.mxu0 %v3305
        %3324 = vmatprep.subr.mxu0 0.0
        %3325 = vmatpush1.msra.mxu0 0.0
        %3326 = vmatprep.subr.mxu0 0.0
        %3327 = vmatpush1.msra.mxu0 0.0
        %3328 = vmatprep.subr.mxu0 0.0
        %3329 = vmatpush1.msra.mxu0 0.0
        %3330 = vmatprep.subr.mxu0 0.0
        %3331 = vmatpush1.msra.mxu0 0.0
        %3332 = vmatprep.subr.mxu0 0.0
        %3333 = vmatpush1.msra.mxu0 0.0
        %3334 = vmatprep.subr.mxu0 0.0
        %3335 = vmatpush1.msra.mxu0 0.0
        %3336 = vmatprep.subr.mxu0 0.0
        %3337 = vmatpush1.msra.mxu0 0.0
        %3338 = vmatprep.subr.mxu0 0.0
        %3339 = vmatpush1.msra.mxu0 0.0
        %3340 = vmatprep.subr.mxu0 0.0
        %3341 = vmatpush1.msra.mxu0 0.0
        %3342 = vmatprep.subr.mxu0 0.0
        %3343 = vmatpush1.msra.mxu0 0.0
        %3344 = vmatprep.subr.mxu0 0.0
        %3345 = vmatpush1.msra.mxu0 0.0
        %3346 = vmatprep.subr.mxu0 0.0
        %3347 = vmatpush1.msra.mxu0 0.0
        %3348 = vmatprep.subr.mxu0 0.0
        %3349 = vmatpush1.msra.mxu0 0.0
        %3350 = vmatprep.subr.mxu0 0.0
        %3351 = vmatpush1.msra.mxu0 0.0
        %3352 = vmatprep.subr.mxu0 0.0
        %3353 = vmatpush1.msra.mxu0 0.0
        %3354 = vmatprep.subr.mxu0 0.0
        %3355 = vmatpush1.msra.mxu0 0.0
        %3356 = vmatprep.subr.mxu0 0.0
        %3357 = vmatpush1.msra.mxu0 0.0
        %3358 = vmatprep.subr.mxu0 0.0
        %3359 = vmatpush1.msra.mxu0 0.0
        %3360 = vmatprep.subr.mxu0 0.0
        %3361 = vmatpush1.msra.mxu0 0.0
        %3362 = vmatprep.subr.mxu0 0.0
        %3363 = vmatpush1.msra.mxu0 0.0
        %3364 = vmatprep.subr.mxu0 0.0
        %3365 = vmatpush1.msra.mxu0 0.0
        %3366 = vmatprep.subr.mxu0 0.0
        %3367 = vmatpush1.msra.mxu0 0.0
        %3368 = vmatprep.subr.mxu0 0.0
        %3369 = vmatpush1.msra.mxu0 0.0
        %3370 = vmatprep.subr.mxu0 0.0
        %3371 = vmatpush1.msra.mxu0 0.0
        %3372 = vmatprep.subr.mxu0 0.0
        %3373 = vmatpush1.msra.mxu0 0.0
        %3374 = vmatprep.subr.mxu0 0.0
        %3375 = vmatpush1.msra.mxu0 0.0
        %3376 = vmatprep.subr.mxu0 0.0
        %3377 = vmatpush1.msra.mxu0 0.0
        %3378 = vmatprep.subr.mxu0 0.0
        %3379 = vmatpush1.msra.mxu0 0.0
        %3380 = vmatprep.mubr.f32.mxu0 0.0
        %3381 = vmatmul.mubr.f32.gmra.mrb[0].mxu0 %v3312
        %v3382 = vpop.f32.mrb[0].mxu0
        %v3383 = vadd.f32 %v480, %v3382
        %v3384 = vpop.f32.mrb[0].mxu0
        %3385 = vmatprep.mubr.f32.mxu0 0.0
        %3386 = vmatmul.mubr.f32.gmra.mrb[0].mxu0 %v3314
        %v3387 = vpop.f32.mrb[0].mxu0
        %v3388 = vadd.f32 %v480, %v3387
        %v3389 = vpop.f32.mrb[0].mxu0
        %3390 = vdwg.mxu0
        %v3391 = vmax.f32 %v3383, 0.0
        %v3392 = vmax.f32 %v3388, 0.0
        %v3393 = vld [vmem:[%s8] sm:$0xff]
        %v3394 = vld [vmem:[%s8 + $0x8] sm:$0xff]
        %v3395 = vld [vmem:[%s8 + $0x10] sm:$0xff]
        %v3396 = vld [vmem:[%s8 + $0x18] sm:$0xff]
        %v3397 = vld [vmem:[%s8 + $0x20] sm:$0xff]
        %v3398 = vld [vmem:[%s8 + $0x28] sm:$0xff]
        %v3399 = vld [vmem:[%s8 + $0x30] sm:$0xff]
        %v3400 = vld [vmem:[%s8 + $0x38] sm:$0xff]
        %v3401 = vld [vmem:[%s8 + $0x40] sm:$0xff]
        %v3402 = vld [vmem:[%s8 + $0x48] sm:$0xff]
        %v3403 = vld [vmem:[%s8 + $0x50] sm:$0xff]
        %v3404 = vld [vmem:[%s8 + $0x58] sm:$0xff]
        %v3405 = vld [vmem:[%s8 + $0x60] sm:$0xff]
        %v3406 = vld [vmem:[%s8 + $0x68] sm:$0xff]
        %v3407 = vld [vmem:[%s8 + $0x70] sm:$0xff]
        %v3408 = vld [vmem:[%s8 + $0x78] sm:$0xff]
        %3409 = vmatprep.subr.mxu0 0.0
        %3410 = vmatpush1.msra.mxu0 %v3393
        %3411 = vmatprep.subr.mxu0 0.0
        %3412 = vmatpush1.msra.mxu0 %v3394
        %3413 = vmatprep.subr.mxu0 0.0
        %3414 = vmatpush1.msra.mxu0 %v3395
        %3415 = vmatprep.subr.mxu0 0.0
        %3416 = vmatpush1.msra.mxu0 %v3396
        %3417 = vmatprep.subr.mxu0 0.0
        %3418 = vmatpush1.msra.mxu0 %v3397
        %3419 = vmatprep.subr.mxu0 0.0
        %3420 = vmatpush1.msra.mxu0 %v3398
        %3421 = vmatprep.subr.mxu0 0.0
        %3422 = vmatpush1.msra.mxu0 %v3399
        %3423 = vmatprep.subr.mxu0 0.0
        %3424 = vmatpush1.msra.mxu0 %v3400
        %3425 = vmatprep.subr.mxu0 0.0
        %3426 = vmatpush1.msra.mxu0 %v3401
        %3427 = vmatprep.subr.mxu0 0.0
        %3428 = vmatpush1.msra.mxu0 %v3402
        %3429 = vmatprep.subr.mxu0 0.0
        %3430 = vmatpush1.msra.mxu0 %v3403
        %3431 = vmatprep.subr.mxu0 0.0
        %3432 = vmatpush1.msra.mxu0 %v3404
        %3433 = vmatprep.subr.mxu0 0.0
        %3434 = vmatpush1.msra.mxu0 %v3405
        %3435 = vmatprep.subr.mxu0 0.0
        %3436 = vmatpush1.msra.mxu0 %v3406
        %3437 = vmatprep.subr.mxu0 0.0
        %3438 = vmatpush1.msra.mxu0 %v3407
        %3439 = vmatprep.subr.mxu0 0.0
        %3440 = vmatpush1.msra.mxu0 %v3408
        %3441 = vmatprep.subr.mxu0 0.0
        %3442 = vmatpush1.msra.mxu0 0.0
        %3443 = vmatprep.subr.mxu0 0.0
        %3444 = vmatpush1.msra.mxu0 0.0
        %3445 = vmatprep.subr.mxu0 0.0
        %3446 = vmatpush1.msra.mxu0 0.0
        %3447 = vmatprep.subr.mxu0 0.0
        %3448 = vmatpush1.msra.mxu0 0.0
        %3449 = vmatprep.subr.mxu0 0.0
        %3450 = vmatpush1.msra.mxu0 0.0
        %3451 = vmatprep.subr.mxu0 0.0
        %3452 = vmatpush1.msra.mxu0 0.0
        %3453 = vmatprep.subr.mxu0 0.0
        %3454 = vmatpush1.msra.mxu0 0.0
        %3455 = vmatprep.subr.mxu0 0.0
        %3456 = vmatpush1.msra.mxu0 0.0
        %3457 = vmatprep.subr.mxu0 0.0
        %3458 = vmatpush1.msra.mxu0 0.0
        %3459 = vmatprep.subr.mxu0 0.0
        %3460 = vmatpush1.msra.mxu0 0.0
        %3461 = vmatprep.subr.mxu0 0.0
        %3462 = vmatpush1.msra.mxu0 0.0
        %3463 = vmatprep.subr.mxu0 0.0
        %3464 = vmatpush1.msra.mxu0 0.0
        %3465 = vmatprep.subr.mxu0 0.0
        %3466 = vmatpush1.msra.mxu0 0.0
        %3467 = vmatprep.subr.mxu0 0.0
        %3468 = vmatpush1.msra.mxu0 0.0
        %3469 = vmatprep.subr.mxu0 0.0
        %3470 = vmatpush1.msra.mxu0 0.0
        %3471 = vmatprep.subr.mxu0 0.0
        %3472 = vmatpush1.msra.mxu0 0.0
        %3473 = vmatprep.mubr.f32.mxu0 0.0
        %3474 = vmatmul.mubr.f32.gmra.mrb[0].mxu0 %v3391
        %v3475 = vpop.f32.mrb[0].mxu0
        %v3476 = vadd.f32 0.0, %v3475
        %v3477 = vpop.f32.mrb[0].mxu0
        %3478 = vmatprep.mubr.f32.mxu0 0.0
        %3479 = vmatmul.mubr.f32.gmra.mrb[0].mxu0 %v3392
        %v3480 = vpop.f32.mrb[0].mxu0
        %v3481 = vadd.f32 0.0, %v3480
        %v3482 = vpop.f32.mrb[0].mxu0
        %3483 = vdwg.mxu0
        %3486 = vrot.lane.b32.xlu0 %v3476, 32
        %v3487 = vpop.permute.xlu0 %3486
        %3488 = vrot.lane.b32.xlu0 %v3481, 32
        %v3489 = vpop.permute.xlu0 %3488
        %v3492 = vadd.f32 %v3254, %v3487
        %v3493 = vadd.f32 %v3255, %v3489
        %v3494 = vadd.f32 %v3492, %v2199
        %v3495 = vadd.f32 %v3493, %v2199
        %3498 = vrot.lane.b32.xlu0 %v3494, 96
        %v3499 = vpop.permute.xlu0 %3498
        %3500 = vrot.lane.b32.xlu0 %v3495, 96
        %v3501 = vpop.permute.xlu0 %3500
        %v3504 = vsel %vm493, %v3499, 0.0
        %3505 = vadd.xlane.f32.xlu0 %v3504
        %v3506 = vpop.xlane.xlu0 %3505
        %v3507 = vsel %vm493, %v3501, 0.0
        %3508 = vadd.xlane.f32.xlu0 %v3507
        %v3509 = vpop.xlane.xlu0 %3508
        %v3510 = vmul.f32 %v3506, %v518
        %v3511 = vmul.f32 %v3509, %v518
        %v3512 = vsub.f32 %v3494, %v3510
        %v3513 = vsub.f32 %v3495, %v3511
        %v3514 = vmul.f32 %v3512, %v3512
        %v3515 = vmul.f32 %v3513, %v3513
        %3518 = vrot.lane.b32.xlu0 %v3514, 96
        %v3519 = vpop.permute.xlu0 %3518
        %3520 = vrot.lane.b32.xlu0 %v3515, 96
        %v3521 = vpop.permute.xlu0 %3520
        %v3524 = vsel %vm493, %v3519, 0.0
        %3525 = vadd.xlane.f32.xlu0 %v3524
        %v3526 = vpop.xlane.xlu0 %3525
        %v3527 = vsel %vm493, %v3521, 0.0
        %3528 = vadd.xlane.f32.xlu0 %v3527
        %v3529 = vpop.xlane.xlu0 %3528
        %v3530 = vmul.f32 %v3526, %v518
        %v3531 = vmul.f32 %v3529, %v518
        %v3532 = vadd.f32 %v3530, 1e-05
        %v3533 = vadd.f32 %v3531, 1e-05
        %v3534 = vrsqrt.pop %v3532
        %v3535 = vrsqrt.pop %v3533
        %v3536 = vmul.f32 %v3512, %v3534
        %v3537 = vmul.f32 %v3513, %v3535
        %v3538 = vmul.f32 %v3536, %v2246
        %v3539 = vmul.f32 %v3537, %v2246
        %v3540 = vadd.f32 %v3538, %v2251
        %v3541 = vadd.f32 %v3539, %v2251
        %v3542 = vld [vmem:[#allocation7] sm:$0xff]
        %v3543 = vld [vmem:[#allocation7 + $0x8] sm:$0xff]
        %v3544 = vld [vmem:[#allocation7 + $0x10] sm:$0xff]
        %v3545 = vld [vmem:[#allocation7 + $0x18] sm:$0xff]
        %3548 = vrot.lane.b32.xlu0 %v3540, 96
        %v3549 = vpop.permute.xlu0 %3548
        %3550 = vrot.lane.b32.xlu0 %v3541, 96
        %v3551 = vpop.permute.xlu0 %3550
        %v3552 = vsel %vm493, %v3549, 0
        %v3554 = vsel %vm493, %v3551, 0
        %3556 = vmatprep.subr.mxu0 0.0
        %3557 = vmatpush1.msra.mxu0 %v3542
        %3558 = vmatprep.subr.mxu0 0.0
        %3559 = vmatpush1.msra.mxu0 %v3543
        %3560 = vmatprep.subr.mxu0 0.0
        %3561 = vmatpush1.msra.mxu0 %v3544
        %3562 = vmatprep.subr.mxu0 0.0
        %3563 = vmatpush1.msra.mxu0 %v3545
        %3564 = vmatprep.subr.mxu0 0.0
        %3565 = vmatpush1.msra.mxu0 0.0
        %3566 = vmatprep.subr.mxu0 0.0
        %3567 = vmatpush1.msra.mxu0 0.0
        %3568 = vmatprep.subr.mxu0 0.0
        %3569 = vmatpush1.msra.mxu0 0.0
        %3570 = vmatprep.subr.mxu0 0.0
        %3571 = vmatpush1.msra.mxu0 0.0
        %3572 = vmatprep.subr.mxu0 0.0
        %3573 = vmatpush1.msra.mxu0 0.0
        %3574 = vmatprep.subr.mxu0 0.0
        %3575 = vmatpush1.msra.mxu0 0.0
        %3576 = vmatprep.subr.mxu0 0.0
        %3577 = vmatpush1.msra.mxu0 0.0
        %3578 = vmatprep.subr.mxu0 0.0
        %3579 = vmatpush1.msra.mxu0 0.0
        %3580 = vmatprep.subr.mxu0 0.0
        %3581 = vmatpush1.msra.mxu0 0.0
        %3582 = vmatprep.subr.mxu0 0.0
        %3583 = vmatpush1.msra.mxu0 0.0
        %3584 = vmatprep.subr.mxu0 0.0
        %3585 = vmatpush1.msra.mxu0 0.0
        %3586 = vmatprep.subr.mxu0 0.0
        %3587 = vmatpush1.msra.mxu0 0.0
        %3588 = vmatprep.subr.mxu0 0.0
        %3589 = vmatpush1.msra.mxu0 0.0
        %3590 = vmatprep.subr.mxu0 0.0
        %3591 = vmatpush1.msra.mxu0 0.0
        %3592 = vmatprep.subr.mxu0 0.0
        %3593 = vmatpush1.msra.mxu0 0.0
        %3594 = vmatprep.subr.mxu0 0.0
        %3595 = vmatpush1.msra.mxu0 0.0
        %3596 = vmatprep.subr.mxu0 0.0
        %3597 = vmatpush1.msra.mxu0 0.0
        %3598 = vmatprep.subr.mxu0 0.0
        %3599 = vmatpush1.msra.mxu0 0.0
        %3600 = vmatprep.subr.mxu0 0.0
        %3601 = vmatpush1.msra.mxu0 0.0
        %3602 = vmatprep.subr.mxu0 0.0
        %3603 = vmatpush1.msra.mxu0 0.0
        %3604 = vmatprep.subr.mxu0 0.0
        %3605 = vmatpush1.msra.mxu0 0.0
        %3606 = vmatprep.subr.mxu0 0.0
        %3607 = vmatpush1.msra.mxu0 0.0
        %3608 = vmatprep.subr.mxu0 0.0
        %3609 = vmatpush1.msra.mxu0 0.0
        %3610 = vmatprep.subr.mxu0 0.0
        %3611 = vmatpush1.msra.mxu0 0.0
        %3612 = vmatprep.subr.mxu0 0.0
        %3613 = vmatpush1.msra.mxu0 0.0
        %3614 = vmatprep.subr.mxu0 0.0
        %3615 = vmatpush1.msra.mxu0 0.0
        %3616 = vmatprep.subr.mxu0 0.0
        %3617 = vmatpush1.msra.mxu0 0.0
        %3618 = vmatprep.subr.mxu0 0.0
        %3619 = vmatpush1.msra.mxu0 0.0
        %3620 = vmatprep.mubr.f32.mxu0 0.0
        %3621 = vmatmul.mubr.f32.gmra.mrb[0].mxu0 %v3552
        %v3622 = vpop.f32.mrb[0].mxu0
        %v3623 = vadd.f32 %v468, %v3622
        %v3624 = vpop.f32.mrb[0].mxu0
        %3625 = vmatprep.mubr.f32.mxu0 0.0
        %3626 = vmatmul.mubr.f32.gmra.mrb[0].mxu0 %v3554
        %v3627 = vpop.f32.mrb[0].mxu0
        %v3628 = vadd.f32 %v468, %v3627
        %v3629 = vpop.f32.mrb[0].mxu0
        %3630 = vdwg.mxu0
        %v3633 = vcombine.high %v3623, %v3623
        %v3634 = vcombine.high %v3628, %v3628
        %v3635 = vsel %vm493, %v3623, 0
        %3637 = vmatprep.subr.mxu0 0.0
        %3638 = vmatpush1.xpose.msra.mxu0 %v990
        %3639 = vmatprep.subr.mxu0 0.0
        %3640 = vmatpush1.xpose.msra.mxu0 %v993
        %3641 = vmatprep.subr.mxu0 0.0
        %3642 = vmatpush1.xpose.msra.mxu0 0.0
        %3643 = vmatprep.subr.mxu0 0.0
        %3644 = vmatpush1.xpose.msra.mxu0 0.0
        %3645 = vmatprep.subr.mxu0 0.0
        %3646 = vmatpush1.xpose.msra.mxu0 0.0
        %3647 = vmatprep.subr.mxu0 0.0
        %3648 = vmatpush1.xpose.msra.mxu0 0.0
        %3649 = vmatprep.subr.mxu0 0.0
        %3650 = vmatpush1.xpose.msra.mxu0 0.0
        %3651 = vmatprep.subr.mxu0 0.0
        %3652 = vmatpush1.xpose.msra.mxu0 0.0
        %3653 = vmatprep.subr.mxu0 0.0
        %3654 = vmatpush1.xpose.msra.mxu0 0.0
        %3655 = vmatprep.subr.mxu0 0.0
        %3656 = vmatpush1.xpose.msra.mxu0 0.0
        %3657 = vmatprep.subr.mxu0 0.0
        %3658 = vmatpush1.xpose.msra.mxu0 0.0
        %3659 = vmatprep.subr.mxu0 0.0
        %3660 = vmatpush1.xpose.msra.mxu0 0.0
        %3661 = vmatprep.subr.mxu0 0.0
        %3662 = vmatpush1.xpose.msra.mxu0 0.0
        %3663 = vmatprep.subr.mxu0 0.0
        %3664 = vmatpush1.xpose.msra.mxu0 0.0
        %3665 = vmatprep.subr.mxu0 0.0
        %3666 = vmatpush1.xpose.msra.mxu0 0.0
        %3667 = vmatprep.subr.mxu0 0.0
        %3668 = vmatpush1.xpose.msra.mxu0 0.0
        %3669 = vmatprep.subr.mxu0 0.0
        %3670 = vmatpush1.xpose.msra.mxu0 0.0
        %3671 = vmatprep.subr.mxu0 0.0
        %3672 = vmatpush1.xpose.msra.mxu0 0.0
        %3673 = vmatprep.subr.mxu0 0.0
        %3674 = vmatpush1.xpose.msra.mxu0 0.0
        %3675 = vmatprep.subr.mxu0 0.0
        %3676 = vmatpush1.xpose.msra.mxu0 0.0
        %3677 = vmatprep.subr.mxu0 0.0
        %3678 = vmatpush1.xpose.msra.mxu0 0.0
        %3679 = vmatprep.subr.mxu0 0.0
        %3680 = vmatpush1.xpose.msra.mxu0 0.0
        %3681 = vmatprep.subr.mxu0 0.0
        %3682 = vmatpush1.xpose.msra.mxu0 0.0
        %3683 = vmatprep.subr.mxu0 0.0
        %3684 = vmatpush1.xpose.msra.mxu0 0.0
        %3685 = vmatprep.subr.mxu0 0.0
        %3686 = vmatpush1.xpose.msra.mxu0 0.0
        %3687 = vmatprep.subr.mxu0 0.0
        %3688 = vmatpush1.xpose.msra.mxu0 0.0
        %3689 = vmatprep.subr.mxu0 0.0
        %3690 = vmatpush1.xpose.msra.mxu0 0.0
        %3691 = vmatprep.subr.mxu0 0.0
        %3692 = vmatpush1.xpose.msra.mxu0 0.0
        %3693 = vmatprep.subr.mxu0 0.0
        %3694 = vmatpush1.xpose.msra.mxu0 0.0
        %3695 = vmatprep.subr.mxu0 0.0
        %3696 = vmatpush1.xpose.msra.mxu0 0.0
        %3697 = vmatprep.subr.mxu0 0.0
        %3698 = vmatpush1.xpose.msra.mxu0 0.0
        %3699 = vmatprep.subr.mxu0 0.0
        %3700 = vmatpush1.xpose.msra.mxu0 0.0
        %3701 = vmatprep.mubr.f32.mxu0 0.0
        %3702 = vmatmul.mubr.f32.gmra.mrb[0].mxu0 %v3635
        %v3703 = vpop.f32.mrb[0].mxu0
        %v3704 = vadd.f32 0.0, %v3703
        %v3705 = vpop.f32.mrb[0].mxu0
        %3706 = vdwg.mxu0
        %v3707 = vsel %vm493, %v3633, 0
        %3709 = vmatprep.subr.mxu0 0.0
        %3710 = vmatpush1.xpose.msra.mxu0 %v1068
        %3711 = vmatprep.subr.mxu0 0.0
        %3712 = vmatpush1.xpose.msra.mxu0 %v1071
        %3713 = vmatprep.subr.mxu0 0.0
        %3714 = vmatpush1.xpose.msra.mxu0 0.0
        %3715 = vmatprep.subr.mxu0 0.0
        %3716 = vmatpush1.xpose.msra.mxu0 0.0
        %3717 = vmatprep.subr.mxu0 0.0
        %3718 = vmatpush1.xpose.msra.mxu0 0.0
        %3719 = vmatprep.subr.mxu0 0.0
        %3720 = vmatpush1.xpose.msra.mxu0 0.0
        %3721 = vmatprep.subr.mxu0 0.0
        %3722 = vmatpush1.xpose.msra.mxu0 0.0
        %3723 = vmatprep.subr.mxu0 0.0
        %3724 = vmatpush1.xpose.msra.mxu0 0.0
        %3725 = vmatprep.subr.mxu0 0.0
        %3726 = vmatpush1.xpose.msra.mxu0 0.0
        %3727 = vmatprep.subr.mxu0 0.0
        %3728 = vmatpush1.xpose.msra.mxu0 0.0
        %3729 = vmatprep.subr.mxu0 0.0
        %3730 = vmatpush1.xpose.msra.mxu0 0.0
        %3731 = vmatprep.subr.mxu0 0.0
        %3732 = vmatpush1.xpose.msra.mxu0 0.0
        %3733 = vmatprep.subr.mxu0 0.0
        %3734 = vmatpush1.xpose.msra.mxu0 0.0
        %3735 = vmatprep.subr.mxu0 0.0
        %3736 = vmatpush1.xpose.msra.mxu0 0.0
        %3737 = vmatprep.subr.mxu0 0.0
        %3738 = vmatpush1.xpose.msra.mxu0 0.0
        %3739 = vmatprep.subr.mxu0 0.0
        %3740 = vmatpush1.xpose.msra.mxu0 0.0
        %3741 = vmatprep.subr.mxu0 0.0
        %3742 = vmatpush1.xpose.msra.mxu0 0.0
        %3743 = vmatprep.subr.mxu0 0.0
        %3744 = vmatpush1.xpose.msra.mxu0 0.0
        %3745 = vmatprep.subr.mxu0 0.0
        %3746 = vmatpush1.xpose.msra.mxu0 0.0
        %3747 = vmatprep.subr.mxu0 0.0
        %3748 = vmatpush1.xpose.msra.mxu0 0.0
        %3749 = vmatprep.subr.mxu0 0.0
        %3750 = vmatpush1.xpose.msra.mxu0 0.0
        %3751 = vmatprep.subr.mxu0 0.0
        %3752 = vmatpush1.xpose.msra.mxu0 0.0
        %3753 = vmatprep.subr.mxu0 0.0
        %3754 = vmatpush1.xpose.msra.mxu0 0.0
        %3755 = vmatprep.subr.mxu0 0.0
        %3756 = vmatpush1.xpose.msra.mxu0 0.0
        %3757 = vmatprep.subr.mxu0 0.0
        %3758 = vmatpush1.xpose.msra.mxu0 0.0
        %3759 = vmatprep.subr.mxu0 0.0
        %3760 = vmatpush1.xpose.msra.mxu0 0.0
        %3761 = vmatprep.subr.mxu0 0.0
        %3762 = vmatpush1.xpose.msra.mxu0 0.0
        %3763 = vmatprep.subr.mxu0 0.0
        %3764 = vmatpush1.xpose.msra.mxu0 0.0
        %3765 = vmatprep.subr.mxu0 0.0
        %3766 = vmatpush1.xpose.msra.mxu0 0.0
        %3767 = vmatprep.subr.mxu0 0.0
        %3768 = vmatpush1.xpose.msra.mxu0 0.0
        %3769 = vmatprep.subr.mxu0 0.0
        %3770 = vmatpush1.xpose.msra.mxu0 0.0
        %3771 = vmatprep.subr.mxu0 0.0
        %3772 = vmatpush1.xpose.msra.mxu0 0.0
        %3773 = vmatprep.mubr.f32.mxu0 0.0
        %3774 = vmatmul.mubr.f32.gmra.mrb[0].mxu0 %v3707
        %v3775 = vpop.f32.mrb[0].mxu0
        %v3776 = vadd.f32 0.0, %v3775
        %v3777 = vpop.f32.mrb[0].mxu0
        %3778 = vdwg.mxu0
        %v3779 = vsel %vm493, %v3628, 0
        %3781 = vmatprep.subr.mxu0 0.0
        %3782 = vmatpush1.xpose.msra.mxu0 %v1146
        %3783 = vmatprep.subr.mxu0 0.0
        %3784 = vmatpush1.xpose.msra.mxu0 %v1149
        %3785 = vmatprep.subr.mxu0 0.0
        %3786 = vmatpush1.xpose.msra.mxu0 0.0
        %3787 = vmatprep.subr.mxu0 0.0
        %3788 = vmatpush1.xpose.msra.mxu0 0.0
        %3789 = vmatprep.subr.mxu0 0.0
        %3790 = vmatpush1.xpose.msra.mxu0 0.0
        %3791 = vmatprep.subr.mxu0 0.0
        %3792 = vmatpush1.xpose.msra.mxu0 0.0
        %3793 = vmatprep.subr.mxu0 0.0
        %3794 = vmatpush1.xpose.msra.mxu0 0.0
        %3795 = vmatprep.subr.mxu0 0.0
        %3796 = vmatpush1.xpose.msra.mxu0 0.0
        %3797 = vmatprep.subr.mxu0 0.0
        %3798 = vmatpush1.xpose.msra.mxu0 0.0
        %3799 = vmatprep.subr.mxu0 0.0
        %3800 = vmatpush1.xpose.msra.mxu0 0.0
        %3801 = vmatprep.subr.mxu0 0.0
        %3802 = vmatpush1.xpose.msra.mxu0 0.0
        %3803 = vmatprep.subr.mxu0 0.0
        %3804 = vmatpush1.xpose.msra.mxu0 0.0
        %3805 = vmatprep.subr.mxu0 0.0
        %3806 = vmatpush1.xpose.msra.mxu0 0.0
        %3807 = vmatprep.subr.mxu0 0.0
        %3808 = vmatpush1.xpose.msra.mxu0 0.0
        %3809 = vmatprep.subr.mxu0 0.0
        %3810 = vmatpush1.xpose.msra.mxu0 0.0
        %3811 = vmatprep.subr.mxu0 0.0
        %3812 = vmatpush1.xpose.msra.mxu0 0.0
        %3813 = vmatprep.subr.mxu0 0.0
        %3814 = vmatpush1.xpose.msra.mxu0 0.0
        %3815 = vmatprep.subr.mxu0 0.0
        %3816 = vmatpush1.xpose.msra.mxu0 0.0
        %3817 = vmatprep.subr.mxu0 0.0
        %3818 = vmatpush1.xpose.msra.mxu0 0.0
        %3819 = vmatprep.subr.mxu0 0.0
        %3820 = vmatpush1.xpose.msra.mxu0 0.0
        %3821 = vmatprep.subr.mxu0 0.0
        %3822 = vmatpush1.xpose.msra.mxu0 0.0
        %3823 = vmatprep.subr.mxu0 0.0
        %3824 = vmatpush1.xpose.msra.mxu0 0.0
        %3825 = vmatprep.subr.mxu0 0.0
        %3826 = vmatpush1.xpose.msra.mxu0 0.0
        %3827 = vmatprep.subr.mxu0 0.0
        %3828 = vmatpush1.xpose.msra.mxu0 0.0
        %3829 = vmatprep.subr.mxu0 0.0
        %3830 = vmatpush1.xpose.msra.mxu0 0.0
        %3831 = vmatprep.subr.mxu0 0.0
        %3832 = vmatpush1.xpose.msra.mxu0 0.0
        %3833 = vmatprep.subr.mxu0 0.0
        %3834 = vmatpush1.xpose.msra.mxu0 0.0
        %3835 = vmatprep.subr.mxu0 0.0
        %3836 = vmatpush1.xpose.msra.mxu0 0.0
        %3837 = vmatprep.subr.mxu0 0.0
        %3838 = vmatpush1.xpose.msra.mxu0 0.0
        %3839 = vmatprep.subr.mxu0 0.0
        %3840 = vmatpush1.xpose.msra.mxu0 0.0
        %3841 = vmatprep.subr.mxu0 0.0
        %3842 = vmatpush1.xpose.msra.mxu0 0.0
        %3843 = vmatprep.subr.mxu0 0.0
        %3844 = vmatpush1.xpose.msra.mxu0 0.0
        %3845 = vmatprep.mubr.f32.mxu0 0.0
        %3846 = vmatmul.mubr.f32.gmra.mrb[0].mxu0 %v3779
        %v3847 = vpop.f32.mrb[0].mxu0
        %v3848 = vadd.f32 0.0, %v3847
        %v3849 = vpop.f32.mrb[0].mxu0
        %3850 = vdwg.mxu0
        %v3851 = vsel %vm493, %v3634, 0
        %3853 = vmatprep.subr.mxu0 0.0
        %3854 = vmatpush1.xpose.msra.mxu0 %v1224
        %3855 = vmatprep.subr.mxu0 0.0
        %3856 = vmatpush1.xpose.msra.mxu0 %v1227
        %3857 = vmatprep.subr.mxu0 0.0
        %3858 = vmatpush1.xpose.msra.mxu0 0.0
        %3859 = vmatprep.subr.mxu0 0.0
        %3860 = vmatpush1.xpose.msra.mxu0 0.0
        %3861 = vmatprep.subr.mxu0 0.0
        %3862 = vmatpush1.xpose.msra.mxu0 0.0
        %3863 = vmatprep.subr.mxu0 0.0
        %3864 = vmatpush1.xpose.msra.mxu0 0.0
        %3865 = vmatprep.subr.mxu0 0.0
        %3866 = vmatpush1.xpose.msra.mxu0 0.0
        %3867 = vmatprep.subr.mxu0 0.0
        %3868 = vmatpush1.xpose.msra.mxu0 0.0
        %3869 = vmatprep.subr.mxu0 0.0
        %3870 = vmatpush1.xpose.msra.mxu0 0.0
        %3871 = vmatprep.subr.mxu0 0.0
        %3872 = vmatpush1.xpose.msra.mxu0 0.0
        %3873 = vmatprep.subr.mxu0 0.0
        %3874 = vmatpush1.xpose.msra.mxu0 0.0
        %3875 = vmatprep.subr.mxu0 0.0
        %3876 = vmatpush1.xpose.msra.mxu0 0.0
        %3877 = vmatprep.subr.mxu0 0.0
        %3878 = vmatpush1.xpose.msra.mxu0 0.0
        %3879 = vmatprep.subr.mxu0 0.0
        %3880 = vmatpush1.xpose.msra.mxu0 0.0
        %3881 = vmatprep.subr.mxu0 0.0
        %3882 = vmatpush1.xpose.msra.mxu0 0.0
        %3883 = vmatprep.subr.mxu0 0.0
        %3884 = vmatpush1.xpose.msra.mxu0 0.0
        %3885 = vmatprep.subr.mxu0 0.0
        %3886 = vmatpush1.xpose.msra.mxu0 0.0
        %3887 = vmatprep.subr.mxu0 0.0
        %3888 = vmatpush1.xpose.msra.mxu0 0.0
        %3889 = vmatprep.subr.mxu0 0.0
        %3890 = vmatpush1.xpose.msra.mxu0 0.0
        %3891 = vmatprep.subr.mxu0 0.0
        %3892 = vmatpush1.xpose.msra.mxu0 0.0
        %3893 = vmatprep.subr.mxu0 0.0
        %3894 = vmatpush1.xpose.msra.mxu0 0.0
        %3895 = vmatprep.subr.mxu0 0.0
        %3896 = vmatpush1.xpose.msra.mxu0 0.0
        %3897 = vmatprep.subr.mxu0 0.0
        %3898 = vmatpush1.xpose.msra.mxu0 0.0
        %3899 = vmatprep.subr.mxu0 0.0
        %3900 = vmatpush1.xpose.msra.mxu0 0.0
        %3901 = vmatprep.subr.mxu0 0.0
        %3902 = vmatpush1.xpose.msra.mxu0 0.0
        %3903 = vmatprep.subr.mxu0 0.0
        %3904 = vmatpush1.xpose.msra.mxu0 0.0
        %3905 = vmatprep.subr.mxu0 0.0
        %3906 = vmatpush1.xpose.msra.mxu0 0.0
        %3907 = vmatprep.subr.mxu0 0.0
        %3908 = vmatpush1.xpose.msra.mxu0 0.0
        %3909 = vmatprep.subr.mxu0 0.0
        %3910 = vmatpush1.xpose.msra.mxu0 0.0
        %3911 = vmatprep.subr.mxu0 0.0
        %3912 = vmatpush1.xpose.msra.mxu0 0.0
        %3913 = vmatprep.subr.mxu0 0.0
        %3914 = vmatpush1.xpose.msra.mxu0 0.0
        %3915 = vmatprep.subr.mxu0 0.0
        %3916 = vmatpush1.xpose.msra.mxu0 0.0
        %3917 = vmatprep.mubr.f32.mxu0 0.0
        %3918 = vmatmul.mubr.f32.gmra.mrb[0].mxu0 %v3851
        %v3919 = vpop.f32.mrb[0].mxu0
        %v3920 = vadd.f32 0.0, %v3919
        %v3921 = vpop.f32.mrb[0].mxu0
        %3922 = vdwg.mxu0
        %v3923 = vmul.f32 %v3704, 0.17677669
        %v3924 = vmul.f32 %v3776, 0.17677669
        %v3925 = vmul.f32 %v3848, 0.17677669
        %v3926 = vmul.f32 %v3920, 0.17677669
        %v3927 = vsel %vm1303, %v3923, -inf
        %v3928 = vrot.slane %v3927, 4
        %v3929 = vmax.f32 %v3927, %v3928
        %v3930 = vrot.slane %v3929, 2
        %v3931 = vmax.f32 %v3929, %v3930
        %v3932 = vrot.slane %v3931, 1
        %v3933 = vmax.f32 %v3931, %v3932
        %v3934 = vsel %vm1303, %v3924, -inf
        %v3935 = vrot.slane %v3934, 4
        %v3936 = vmax.f32 %v3934, %v3935
        %v3937 = vrot.slane %v3936, 2
        %v3938 = vmax.f32 %v3936, %v3937
        %v3939 = vrot.slane %v3938, 1
        %v3940 = vmax.f32 %v3938, %v3939
        %v3941 = vsel %vm1303, %v3925, -inf
        %v3942 = vrot.slane %v3941, 4
        %v3943 = vmax.f32 %v3941, %v3942
        %v3944 = vrot.slane %v3943, 2
        %v3945 = vmax.f32 %v3943, %v3944
        %v3946 = vrot.slane %v3945, 1
        %v3947 = vmax.f32 %v3945, %v3946
        %v3948 = vsel %vm1303, %v3926, -inf
        %v3949 = vrot.slane %v3948, 4
        %v3950 = vmax.f32 %v3948, %v3949
        %v3951 = vrot.slane %v3950, 2
        %v3952 = vmax.f32 %v3950, %v3951
        %v3953 = vrot.slane %v3952, 1
        %v3954 = vmax.f32 %v3952, %v3953
        %v3955 = vsub.f32 %v3923, %v3933
        %v3956 = vsub.f32 %v3924, %v3940
        %v3957 = vsub.f32 %v3925, %v3947
        %v3958 = vsub.f32 %v3926, %v3954
        %v3959 = vmul.f32 %v3955, 1.442695
        %v3960 = vpow.pop %v3959
        %v3961 = vmul.f32 %v3956, 1.442695
        %v3962 = vpow.pop %v3961
        %v3963 = vmul.f32 %v3957, 1.442695
        %v3964 = vpow.pop %v3963
        %v3965 = vmul.f32 %v3958, 1.442695
        %v3966 = vpow.pop %v3965
        %v3967 = vsel %vm1303, %v3960, 0.0
        %v3968 = vrot.slane %v3967, 4
        %v3969 = vadd.f32 %v3967, %v3968
        %v3970 = vrot.slane %v3969, 2
        %v3971 = vadd.f32 %v3969, %v3970
        %v3972 = vrot.slane %v3971, 1
        %v3973 = vadd.f32 %v3971, %v3972
        %v3974 = vsel %vm1303, %v3962, 0.0
        %v3975 = vrot.slane %v3974, 4
        %v3976 = vadd.f32 %v3974, %v3975
        %v3977 = vrot.slane %v3976, 2
        %v3978 = vadd.f32 %v3976, %v3977
        %v3979 = vrot.slane %v3978, 1
        %v3980 = vadd.f32 %v3978, %v3979
        %v3981 = vsel %vm1303, %v3964, 0.0
        %v3982 = vrot.slane %v3981, 4
        %v3983 = vadd.f32 %v3981, %v3982
        %v3984 = vrot.slane %v3983, 2
        %v3985 = vadd.f32 %v3983, %v3984
        %v3986 = vrot.slane %v3985, 1
        %v3987 = vadd.f32 %v3985, %v3986
        %v3988 = vsel %vm1303, %v3966, 0.0
        %v3989 = vrot.slane %v3988, 4
        %v3990 = vadd.f32 %v3988, %v3989
        %v3991 = vrot.slane %v3990, 2
        %v3992 = vadd.f32 %v3990, %v3991
        %v3993 = vrot.slane %v3992, 1
        %v3994 = vadd.f32 %v3992, %v3993
        %v3995 = vrcp.pop %v3973
        %v3996 = vrcp.pop %v3980
        %v3997 = vrcp.pop %v3987
        %v3998 = vrcp.pop %v3994
        %v3999 = vmul.f32 %v3960, %v3995
        %v4000 = vmul.f32 %v3962, %v3996
        %v4001 = vmul.f32 %v3964, %v3997
        %v4002 = vmul.f32 %v3966, %v3998
        %v4003 = vadd.f32 %v3999, 1e-08
        %v4004 = vadd.f32 %v4000, 1e-08
        %v4005 = vadd.f32 %v4001, 1e-08
        %v4006 = vadd.f32 %v4002, 1e-08
        %v4007 = vsel %vm1303, %v4003, 0.0
        %4008 = vadd.xlane.f32.xlu0 %v4007
        %v4009 = vpop.xlane.xlu0 %4008
        %v4010 = vsel %vm1303, %v4004, 0.0
        %4011 = vadd.xlane.f32.xlu0 %v4010
        %v4012 = vpop.xlane.xlu0 %4011
        %v4013 = vsel %vm1303, %v4005, 0.0
        %4014 = vadd.xlane.f32.xlu0 %v4013
        %v4015 = vpop.xlane.xlu0 %4014
        %v4016 = vsel %vm1303, %v4006, 0.0
        %4017 = vadd.xlane.f32.xlu0 %v4016
        %v4018 = vpop.xlane.xlu0 %4017
        %v4019 = vrcp.pop %v4009
        %v4020 = vrcp.pop %v4012
        %v4021 = vrcp.pop %v4015
        %v4022 = vrcp.pop %v4018
        %v4023 = vmul.f32 %v4003, %v4019
        %v4024 = vmul.f32 %v4004, %v4020
        %v4025 = vmul.f32 %v4005, %v4021
        %v4026 = vmul.f32 %v4006, %v4022
        %v4028 = vsel %vm1410, %v4023, 0
        %4030 = vmatprep.subr.mxu0 0.0
        %4031 = vmatpush1.msra.mxu0 %v1405
        %4032 = vmatprep.subr.mxu0 0.0
        %4033 = vmatpush1.msra.mxu0 %v1407
        %4034 = vmatprep.subr.mxu0 0.0
        %4035 = vmatpush1.msra.mxu0 0.0
        %4036 = vmatprep.subr.mxu0 0.0
        %4037 = vmatpush1.msra.mxu0 0.0
        %4038 = vmatprep.subr.mxu0 0.0
        %4039 = vmatpush1.msra.mxu0 0.0
        %4040 = vmatprep.subr.mxu0 0.0
        %4041 = vmatpush1.msra.mxu0 0.0
        %4042 = vmatprep.subr.mxu0 0.0
        %4043 = vmatpush1.msra.mxu0 0.0
        %4044 = vmatprep.subr.mxu0 0.0
        %4045 = vmatpush1.msra.mxu0 0.0
        %4046 = vmatprep.subr.mxu0 0.0
        %4047 = vmatpush1.msra.mxu0 0.0
        %4048 = vmatprep.subr.mxu0 0.0
        %4049 = vmatpush1.msra.mxu0 0.0
        %4050 = vmatprep.subr.mxu0 0.0
        %4051 = vmatpush1.msra.mxu0 0.0
        %4052 = vmatprep.subr.mxu0 0.0
        %4053 = vmatpush1.msra.mxu0 0.0
        %4054 = vmatprep.subr.mxu0 0.0
        %4055 = vmatpush1.msra.mxu0 0.0
        %4056 = vmatprep.subr.mxu0 0.0
        %4057 = vmatpush1.msra.mxu0 0.0
        %4058 = vmatprep.subr.mxu0 0.0
        %4059 = vmatpush1.msra.mxu0 0.0
        %4060 = vmatprep.subr.mxu0 0.0
        %4061 = vmatpush1.msra.mxu0 0.0
        %4062 = vmatprep.subr.mxu0 0.0
        %4063 = vmatpush1.msra.mxu0 0.0
        %4064 = vmatprep.subr.mxu0 0.0
        %4065 = vmatpush1.msra.mxu0 0.0
        %4066 = vmatprep.subr.mxu0 0.0
        %4067 = vmatpush1.msra.mxu0 0.0
        %4068 = vmatprep.subr.mxu0 0.0
        %4069 = vmatpush1.msra.mxu0 0.0
        %4070 = vmatprep.subr.mxu0 0.0
        %4071 = vmatpush1.msra.mxu0 0.0
        %4072 = vmatprep.subr.mxu0 0.0
        %4073 = vmatpush1.msra.mxu0 0.0
        %4074 = vmatprep.subr.mxu0 0.0
        %4075 = vmatpush1.msra.mxu0 0.0
        %4076 = vmatprep.subr.mxu0 0.0
        %4077 = vmatpush1.msra.mxu0 0.0
        %4078 = vmatprep.subr.mxu0 0.0
        %4079 = vmatpush1.msra.mxu0 0.0
        %4080 = vmatprep.subr.mxu0 0.0
        %4081 = vmatpush1.msra.mxu0 0.0
        %4082 = vmatprep.subr.mxu0 0.0
        %4083 = vmatpush1.msra.mxu0 0.0
        %4084 = vmatprep.subr.mxu0 0.0
        %4085 = vmatpush1.msra.mxu0 0.0
        %4086 = vmatprep.subr.mxu0 0.0
        %4087 = vmatpush1.msra.mxu0 0.0
        %4088 = vmatprep.subr.mxu0 0.0
        %4089 = vmatpush1.msra.mxu0 0.0
        %4090 = vmatprep.subr.mxu0 0.0
        %4091 = vmatpush1.msra.mxu0 0.0
        %4092 = vmatprep.subr.mxu0 0.0
        %4093 = vmatpush1.msra.mxu0 0.0
        %4094 = vmatprep.mubr.f32.mxu0 0.0
        %4095 = vmatmul.mubr.f32.gmra.mrb[0].mxu0 %v4028
        %v4096 = vpop.f32.mrb[0].mxu0
        %v4097 = vadd.f32 0.0, %v4096
        %v4098 = vpop.f32.mrb[0].mxu0
        %4099 = vdwg.mxu0
        %v4101 = vsel %vm1410, %v4024, 0
        %4103 = vmatprep.subr.mxu0 0.0
        %4104 = vmatpush1.msra.mxu0 %v1485
        %4105 = vmatprep.subr.mxu0 0.0
        %4106 = vmatpush1.msra.mxu0 %v1487
        %4107 = vmatprep.subr.mxu0 0.0
        %4108 = vmatpush1.msra.mxu0 0.0
        %4109 = vmatprep.subr.mxu0 0.0
        %4110 = vmatpush1.msra.mxu0 0.0
        %4111 = vmatprep.subr.mxu0 0.0
        %4112 = vmatpush1.msra.mxu0 0.0
        %4113 = vmatprep.subr.mxu0 0.0
        %4114 = vmatpush1.msra.mxu0 0.0
        %4115 = vmatprep.subr.mxu0 0.0
        %4116 = vmatpush1.msra.mxu0 0.0
        %4117 = vmatprep.subr.mxu0 0.0
        %4118 = vmatpush1.msra.mxu0 0.0
        %4119 = vmatprep.subr.mxu0 0.0
        %4120 = vmatpush1.msra.mxu0 0.0
        %4121 = vmatprep.subr.mxu0 0.0
        %4122 = vmatpush1.msra.mxu0 0.0
        %4123 = vmatprep.subr.mxu0 0.0
        %4124 = vmatpush1.msra.mxu0 0.0
        %4125 = vmatprep.subr.mxu0 0.0
        %4126 = vmatpush1.msra.mxu0 0.0
        %4127 = vmatprep.subr.mxu0 0.0
        %4128 = vmatpush1.msra.mxu0 0.0
        %4129 = vmatprep.subr.mxu0 0.0
        %4130 = vmatpush1.msra.mxu0 0.0
        %4131 = vmatprep.subr.mxu0 0.0
        %4132 = vmatpush1.msra.mxu0 0.0
        %4133 = vmatprep.subr.mxu0 0.0
        %4134 = vmatpush1.msra.mxu0 0.0
        %4135 = vmatprep.subr.mxu0 0.0
        %4136 = vmatpush1.msra.mxu0 0.0
        %4137 = vmatprep.subr.mxu0 0.0
        %4138 = vmatpush1.msra.mxu0 0.0
        %4139 = vmatprep.subr.mxu0 0.0
        %4140 = vmatpush1.msra.mxu0 0.0
        %4141 = vmatprep.subr.mxu0 0.0
        %4142 = vmatpush1.msra.mxu0 0.0
        %4143 = vmatprep.subr.mxu0 0.0
        %4144 = vmatpush1.msra.mxu0 0.0
        %4145 = vmatprep.subr.mxu0 0.0
        %4146 = vmatpush1.msra.mxu0 0.0
        %4147 = vmatprep.subr.mxu0 0.0
        %4148 = vmatpush1.msra.mxu0 0.0
        %4149 = vmatprep.subr.mxu0 0.0
        %4150 = vmatpush1.msra.mxu0 0.0
        %4151 = vmatprep.subr.mxu0 0.0
        %4152 = vmatpush1.msra.mxu0 0.0
        %4153 = vmatprep.subr.mxu0 0.0
        %4154 = vmatpush1.msra.mxu0 0.0
        %4155 = vmatprep.subr.mxu0 0.0
        %4156 = vmatpush1.msra.mxu0 0.0
        %4157 = vmatprep.subr.mxu0 0.0
        %4158 = vmatpush1.msra.mxu0 0.0
        %4159 = vmatprep.subr.mxu0 0.0
        %4160 = vmatpush1.msra.mxu0 0.0
        %4161 = vmatprep.subr.mxu0 0.0
        %4162 = vmatpush1.msra.mxu0 0.0
        %4163 = vmatprep.subr.mxu0 0.0
        %4164 = vmatpush1.msra.mxu0 0.0
        %4165 = vmatprep.subr.mxu0 0.0
        %4166 = vmatpush1.msra.mxu0 0.0
        %4167 = vmatprep.mubr.f32.mxu0 0.0
        %4168 = vmatmul.mubr.f32.gmra.mrb[0].mxu0 %v4101
        %v4169 = vpop.f32.mrb[0].mxu0
        %v4170 = vadd.f32 0.0, %v4169
        %v4171 = vpop.f32.mrb[0].mxu0
        %4172 = vdwg.mxu0
        %v4174 = vsel %vm1410, %v4025, 0
        %4176 = vmatprep.subr.mxu0 0.0
        %4177 = vmatpush1.msra.mxu0 %v1564
        %4178 = vmatprep.subr.mxu0 0.0
        %4179 = vmatpush1.msra.mxu0 %v1566
        %4180 = vmatprep.subr.mxu0 0.0
        %4181 = vmatpush1.msra.mxu0 0.0
        %4182 = vmatprep.subr.mxu0 0.0
        %4183 = vmatpush1.msra.mxu0 0.0
        %4184 = vmatprep.subr.mxu0 0.0
        %4185 = vmatpush1.msra.mxu0 0.0
        %4186 = vmatprep.subr.mxu0 0.0
        %4187 = vmatpush1.msra.mxu0 0.0
        %4188 = vmatprep.subr.mxu0 0.0
        %4189 = vmatpush1.msra.mxu0 0.0
        %4190 = vmatprep.subr.mxu0 0.0
        %4191 = vmatpush1.msra.mxu0 0.0
        %4192 = vmatprep.subr.mxu0 0.0
        %4193 = vmatpush1.msra.mxu0 0.0
        %4194 = vmatprep.subr.mxu0 0.0
        %4195 = vmatpush1.msra.mxu0 0.0
        %4196 = vmatprep.subr.mxu0 0.0
        %4197 = vmatpush1.msra.mxu0 0.0
        %4198 = vmatprep.subr.mxu0 0.0
        %4199 = vmatpush1.msra.mxu0 0.0
        %4200 = vmatprep.subr.mxu0 0.0
        %4201 = vmatpush1.msra.mxu0 0.0
        %4202 = vmatprep.subr.mxu0 0.0
        %4203 = vmatpush1.msra.mxu0 0.0
        %4204 = vmatprep.subr.mxu0 0.0
        %4205 = vmatpush1.msra.mxu0 0.0
        %4206 = vmatprep.subr.mxu0 0.0
        %4207 = vmatpush1.msra.mxu0 0.0
        %4208 = vmatprep.subr.mxu0 0.0
        %4209 = vmatpush1.msra.mxu0 0.0
        %4210 = vmatprep.subr.mxu0 0.0
        %4211 = vmatpush1.msra.mxu0 0.0
        %4212 = vmatprep.subr.mxu0 0.0
        %4213 = vmatpush1.msra.mxu0 0.0
        %4214 = vmatprep.subr.mxu0 0.0
        %4215 = vmatpush1.msra.mxu0 0.0
        %4216 = vmatprep.subr.mxu0 0.0
        %4217 = vmatpush1.msra.mxu0 0.0
        %4218 = vmatprep.subr.mxu0 0.0
        %4219 = vmatpush1.msra.mxu0 0.0
        %4220 = vmatprep.subr.mxu0 0.0
        %4221 = vmatpush1.msra.mxu0 0.0
        %4222 = vmatprep.subr.mxu0 0.0
        %4223 = vmatpush1.msra.mxu0 0.0
        %4224 = vmatprep.subr.mxu0 0.0
        %4225 = vmatpush1.msra.mxu0 0.0
        %4226 = vmatprep.subr.mxu0 0.0
        %4227 = vmatpush1.msra.mxu0 0.0
        %4228 = vmatprep.subr.mxu0 0.0
        %4229 = vmatpush1.msra.mxu0 0.0
        %4230 = vmatprep.subr.mxu0 0.0
        %4231 = vmatpush1.msra.mxu0 0.0
        %4232 = vmatprep.subr.mxu0 0.0
        %4233 = vmatpush1.msra.mxu0 0.0
        %4234 = vmatprep.subr.mxu0 0.0
        %4235 = vmatpush1.msra.mxu0 0.0
        %4236 = vmatprep.subr.mxu0 0.0
        %4237 = vmatpush1.msra.mxu0 0.0
        %4238 = vmatprep.subr.mxu0 0.0
        %4239 = vmatpush1.msra.mxu0 0.0
        %4240 = vmatprep.mubr.f32.mxu0 0.0
        %4241 = vmatmul.mubr.f32.gmra.mrb[0].mxu0 %v4174
        %v4242 = vpop.f32.mrb[0].mxu0
        %v4243 = vadd.f32 0.0, %v4242
        %v4244 = vpop.f32.mrb[0].mxu0
        %4245 = vdwg.mxu0
        %v4247 = vsel %vm1410, %v4026, 0
        %4249 = vmatprep.subr.mxu0 0.0
        %4250 = vmatpush1.msra.mxu0 %v1643
        %4251 = vmatprep.subr.mxu0 0.0
        %4252 = vmatpush1.msra.mxu0 %v1645
        %4253 = vmatprep.subr.mxu0 0.0
        %4254 = vmatpush1.msra.mxu0 0.0
        %4255 = vmatprep.subr.mxu0 0.0
        %4256 = vmatpush1.msra.mxu0 0.0
        %4257 = vmatprep.subr.mxu0 0.0
        %4258 = vmatpush1.msra.mxu0 0.0
        %4259 = vmatprep.subr.mxu0 0.0
        %4260 = vmatpush1.msra.mxu0 0.0
        %4261 = vmatprep.subr.mxu0 0.0
        %4262 = vmatpush1.msra.mxu0 0.0
        %4263 = vmatprep.subr.mxu0 0.0
        %4264 = vmatpush1.msra.mxu0 0.0
        %4265 = vmatprep.subr.mxu0 0.0
        %4266 = vmatpush1.msra.mxu0 0.0
        %4267 = vmatprep.subr.mxu0 0.0
        %4268 = vmatpush1.msra.mxu0 0.0
        %4269 = vmatprep.subr.mxu0 0.0
        %4270 = vmatpush1.msra.mxu0 0.0
        %4271 = vmatprep.subr.mxu0 0.0
        %4272 = vmatpush1.msra.mxu0 0.0
        %4273 = vmatprep.subr.mxu0 0.0
        %4274 = vmatpush1.msra.mxu0 0.0
        %4275 = vmatprep.subr.mxu0 0.0
        %4276 = vmatpush1.msra.mxu0 0.0
        %4277 = vmatprep.subr.mxu0 0.0
        %4278 = vmatpush1.msra.mxu0 0.0
        %4279 = vmatprep.subr.mxu0 0.0
        %4280 = vmatpush1.msra.mxu0 0.0
        %4281 = vmatprep.subr.mxu0 0.0
        %4282 = vmatpush1.msra.mxu0 0.0
        %4283 = vmatprep.subr.mxu0 0.0
        %4284 = vmatpush1.msra.mxu0 0.0
        %4285 = vmatprep.subr.mxu0 0.0
        %4286 = vmatpush1.msra.mxu0 0.0
        %4287 = vmatprep.subr.mxu0 0.0
        %4288 = vmatpush1.msra.mxu0 0.0
        %4289 = vmatprep.subr.mxu0 0.0
        %4290 = vmatpush1.msra.mxu0 0.0
        %4291 = vmatprep.subr.mxu0 0.0
        %4292 = vmatpush1.msra.mxu0 0.0
        %4293 = vmatprep.subr.mxu0 0.0
        %4294 = vmatpush1.msra.mxu0 0.0
        %4295 = vmatprep.subr.mxu0 0.0
        %4296 = vmatpush1.msra.mxu0 0.0
        %4297 = vmatprep.subr.mxu0 0.0
        %4298 = vmatpush1.msra.mxu0 0.0
        %4299 = vmatprep.subr.mxu0 0.0
        %4300 = vmatpush1.msra.mxu0 0.0
        %4301 = vmatprep.subr.mxu0 0.0
        %4302 = vmatpush1.msra.mxu0 0.0
        %4303 = vmatprep.subr.mxu0 0.0
        %4304 = vmatpush1.msra.mxu0 0.0
        %4305 = vmatprep.subr.mxu0 0.0
        %4306 = vmatpush1.msra.mxu0 0.0
        %4307 = vmatprep.subr.mxu0 0.0
        %4308 = vmatpush1.msra.mxu0 0.0
        %4309 = vmatprep.subr.mxu0 0.0
        %4310 = vmatpush1.msra.mxu0 0.0
        %4311 = vmatprep.subr.mxu0 0.0
        %4312 = vmatpush1.msra.mxu0 0.0
        %4313 = vmatprep.mubr.f32.mxu0 0.0
        %4314 = vmatmul.mubr.f32.gmra.mrb[0].mxu0 %v4247
        %v4315 = vpop.f32.mrb[0].mxu0
        %v4316 = vadd.f32 0.0, %v4315
        %v4317 = vpop.f32.mrb[0].mxu0
        %4318 = vdwg.mxu0
        %v4319 = vld [vmem:[#allocation8] sm:$0xff]
        %v4320 = vld [vmem:[#allocation8 + $0x8] sm:$0xff]
        %v4321 = vld [vmem:[#allocation8 + $0x10] sm:$0xff]
        %v4322 = vld [vmem:[#allocation8 + $0x18] sm:$0xff]
        %v4327 = vcombine.low %v4097, %v4170
        %v4328 = vcombine.low %v4243, %v4316
        %v4329 = vsel %vm493, %v4327, 0
        %v4331 = vsel %vm493, %v4328, 0
        %4333 = vmatprep.subr.mxu0 0.0
        %4334 = vmatpush1.msra.mxu0 %v4319
        %4335 = vmatprep.subr.mxu0 0.0
        %4336 = vmatpush1.msra.mxu0 %v4320
        %4337 = vmatprep.subr.mxu0 0.0
        %4338 = vmatpush1.msra.mxu0 %v4321
        %4339 = vmatprep.subr.mxu0 0.0
        %4340 = vmatpush1.msra.mxu0 %v4322
        %4341 = vmatprep.subr.mxu0 0.0
        %4342 = vmatpush1.msra.mxu0 0.0
        %4343 = vmatprep.subr.mxu0 0.0
        %4344 = vmatpush1.msra.mxu0 0.0
        %4345 = vmatprep.subr.mxu0 0.0
        %4346 = vmatpush1.msra.mxu0 0.0
        %4347 = vmatprep.subr.mxu0 0.0
        %4348 = vmatpush1.msra.mxu0 0.0
        %4349 = vmatprep.subr.mxu0 0.0
        %4350 = vmatpush1.msra.mxu0 0.0
        %4351 = vmatprep.subr.mxu0 0.0
        %4352 = vmatpush1.msra.mxu0 0.0
        %4353 = vmatprep.subr.mxu0 0.0
        %4354 = vmatpush1.msra.mxu0 0.0
        %4355 = vmatprep.subr.mxu0 0.0
        %4356 = vmatpush1.msra.mxu0 0.0
        %4357 = vmatprep.subr.mxu0 0.0
        %4358 = vmatpush1.msra.mxu0 0.0
        %4359 = vmatprep.subr.mxu0 0.0
        %4360 = vmatpush1.msra.mxu0 0.0
        %4361 = vmatprep.subr.mxu0 0.0
        %4362 = vmatpush1.msra.mxu0 0.0
        %4363 = vmatprep.subr.mxu0 0.0
        %4364 = vmatpush1.msra.mxu0 0.0
        %4365 = vmatprep.subr.mxu0 0.0
        %4366 = vmatpush1.msra.mxu0 0.0
        %4367 = vmatprep.subr.mxu0 0.0
        %4368 = vmatpush1.msra.mxu0 0.0
        %4369 = vmatprep.subr.mxu0 0.0
        %4370 = vmatpush1.msra.mxu0 0.0
        %4371 = vmatprep.subr.mxu0 0.0
        %4372 = vmatpush1.msra.mxu0 0.0
        %4373 = vmatprep.subr.mxu0 0.0
        %4374 = vmatpush1.msra.mxu0 0.0
        %4375 = vmatprep.subr.mxu0 0.0
        %4376 = vmatpush1.msra.mxu0 0.0
        %4377 = vmatprep.subr.mxu0 0.0
        %4378 = vmatpush1.msra.mxu0 0.0
        %4379 = vmatprep.subr.mxu0 0.0
        %4380 = vmatpush1.msra.mxu0 0.0
        %4381 = vmatprep.subr.mxu0 0.0
        %4382 = vmatpush1.msra.mxu0 0.0
        %4383 = vmatprep.subr.mxu0 0.0
        %4384 = vmatpush1.msra.mxu0 0.0
        %4385 = vmatprep.subr.mxu0 0.0
        %4386 = vmatpush1.msra.mxu0 0.0
        %4387 = vmatprep.subr.mxu0 0.0
        %4388 = vmatpush1.msra.mxu0 0.0
        %4389 = vmatprep.subr.mxu0 0.0
        %4390 = vmatpush1.msra.mxu0 0.0
        %4391 = vmatprep.subr.mxu0 0.0
        %4392 = vmatpush1.msra.mxu0 0.0
        %4393 = vmatprep.subr.mxu0 0.0
        %4394 = vmatpush1.msra.mxu0 0.0
        %4395 = vmatprep.subr.mxu0 0.0
        %4396 = vmatpush1.msra.mxu0 0.0
        %4397 = vmatprep.mubr.f32.mxu0 0.0
        %4398 = vmatmul.mubr.f32.gmra.mrb[0].mxu0 %v4329
        %v4399 = vpop.f32.mrb[0].mxu0
        %v4400 = vadd.f32 %v472, %v4399
        %v4401 = vpop.f32.mrb[0].mxu0
        %4402 = vmatprep.mubr.f32.mxu0 0.0
        %4403 = vmatmul.mubr.f32.gmra.mrb[0].mxu0 %v4331
        %v4404 = vpop.f32.mrb[0].mxu0
        %v4405 = vadd.f32 %v472, %v4404
        %v4406 = vpop.f32.mrb[0].mxu0
        %4407 = vdwg.mxu0
        %v4408 = vld [vmem:[#allocation10] sm:$0xff]
        %v4409 = vld [vmem:[#allocation10 + $0x8] sm:$0xff]
        %v4410 = vld [vmem:[#allocation10 + $0x10] sm:$0xff]
        %v4411 = vld [vmem:[#allocation10 + $0x18] sm:$0xff]
        %v4412 = vsel %vm493, %v3499, 0
        %v4414 = vsel %vm493, %v3501, 0
        %4416 = vmatprep.subr.mxu0 0.0
        %4417 = vmatpush1.msra.mxu0 %v4408
        %4418 = vmatprep.subr.mxu0 0.0
        %4419 = vmatpush1.msra.mxu0 %v4409
        %4420 = vmatprep.subr.mxu0 0.0
        %4421 = vmatpush1.msra.mxu0 %v4410
        %4422 = vmatprep.subr.mxu0 0.0
        %4423 = vmatpush1.msra.mxu0 %v4411
        %4424 = vmatprep.subr.mxu0 0.0
        %4425 = vmatpush1.msra.mxu0 0.0
        %4426 = vmatprep.subr.mxu0 0.0
        %4427 = vmatpush1.msra.mxu0 0.0
        %4428 = vmatprep.subr.mxu0 0.0
        %4429 = vmatpush1.msra.mxu0 0.0
        %4430 = vmatprep.subr.mxu0 0.0
        %4431 = vmatpush1.msra.mxu0 0.0
        %4432 = vmatprep.subr.mxu0 0.0
        %4433 = vmatpush1.msra.mxu0 0.0
        %4434 = vmatprep.subr.mxu0 0.0
        %4435 = vmatpush1.msra.mxu0 0.0
        %4436 = vmatprep.subr.mxu0 0.0
        %4437 = vmatpush1.msra.mxu0 0.0
        %4438 = vmatprep.subr.mxu0 0.0
        %4439 = vmatpush1.msra.mxu0 0.0
        %4440 = vmatprep.subr.mxu0 0.0
        %4441 = vmatpush1.msra.mxu0 0.0
        %4442 = vmatprep.subr.mxu0 0.0
        %4443 = vmatpush1.msra.mxu0 0.0
        %4444 = vmatprep.subr.mxu0 0.0
        %4445 = vmatpush1.msra.mxu0 0.0
        %4446 = vmatprep.subr.mxu0 0.0
        %4447 = vmatpush1.msra.mxu0 0.0
        %4448 = vmatprep.subr.mxu0 0.0
        %4449 = vmatpush1.msra.mxu0 0.0
        %4450 = vmatprep.subr.mxu0 0.0
        %4451 = vmatpush1.msra.mxu0 0.0
        %4452 = vmatprep.subr.mxu0 0.0
        %4453 = vmatpush1.msra.mxu0 0.0
        %4454 = vmatprep.subr.mxu0 0.0
        %4455 = vmatpush1.msra.mxu0 0.0
        %4456 = vmatprep.subr.mxu0 0.0
        %4457 = vmatpush1.msra.mxu0 0.0
        %4458 = vmatprep.subr.mxu0 0.0
        %4459 = vmatpush1.msra.mxu0 0.0
        %4460 = vmatprep.subr.mxu0 0.0
        %4461 = vmatpush1.msra.mxu0 0.0
        %4462 = vmatprep.subr.mxu0 0.0
        %4463 = vmatpush1.msra.mxu0 0.0
        %4464 = vmatprep.subr.mxu0 0.0
        %4465 = vmatpush1.msra.mxu0 0.0
        %4466 = vmatprep.subr.mxu0 0.0
        %4467 = vmatpush1.msra.mxu0 0.0
        %4468 = vmatprep.subr.mxu0 0.0
        %4469 = vmatpush1.msra.mxu0 0.0
        %4470 = vmatprep.subr.mxu0 0.0
        %4471 = vmatpush1.msra.mxu0 0.0
        %4472 = vmatprep.subr.mxu0 0.0
        %4473 = vmatpush1.msra.mxu0 0.0
        %4474 = vmatprep.subr.mxu0 0.0
        %4475 = vmatpush1.msra.mxu0 0.0
        %4476 = vmatprep.subr.mxu0 0.0
        %4477 = vmatpush1.msra.mxu0 0.0
        %4478 = vmatprep.subr.mxu0 0.0
        %4479 = vmatpush1.msra.mxu0 0.0
        %4480 = vmatprep.mubr.f32.mxu0 0.0
        %4481 = vmatmul.mubr.f32.gmra.mrb[0].mxu0 %v4412
        %v4482 = vpop.f32.mrb[0].mxu0
        %v4483 = vadd.f32 %v476, %v4482
        %v4484 = vpop.f32.mrb[0].mxu0
        %4485 = vmatprep.mubr.f32.mxu0 0.0
        %4486 = vmatmul.mubr.f32.gmra.mrb[0].mxu0 %v4414
        %v4487 = vpop.f32.mrb[0].mxu0
        %v4488 = vadd.f32 %v476, %v4487
        %v4489 = vpop.f32.mrb[0].mxu0
        %4490 = vdwg.mxu0
        %v4491 = vadd.f32 %v4400, %v4483
        %v4492 = vadd.f32 %v4405, %v4488
        %v4493 = vxor.u32 %v4491, 2147483648
        %v4494 = vxor.u32 %v4492, 2147483648
        %v4495 = vmul.f32 %v4493, 1.442695
        %v4496 = vpow.pop %v4495
        %v4497 = vmul.f32 %v4494, 1.442695
        %v4498 = vpow.pop %v4497
        %v4499 = vadd.f32 %v4496, 1.0
        %v4500 = vadd.f32 %v4498, 1.0
        %v4501 = vrcp.pop %v4499
        %v4502 = vmul.f32 1.0, %v4501
        %v4503 = vrcp.pop %v4500
        %v4504 = vmul.f32 1.0, %v4503
        %4507 = vrot.lane.b32.xlu0 %v4483, 64
        %v4508 = vpop.permute.xlu0 %4507
        %4509 = vrot.lane.b32.xlu0 %v4488, 64
        %v4510 = vpop.permute.xlu0 %4509
        %v4513 = vmul.f32 %v4502, %v4508
        %v4514 = vmul.f32 %v4504, %v4510
        %4517 = vrot.lane.b32.xlu0 %v4513, 64
        %v4518 = vpop.permute.xlu0 %4517
        %4519 = vrot.lane.b32.xlu0 %v4514, 64
        %v4520 = vpop.permute.xlu0 %4519
        %v4523 = vadd.f32 %v4400, %v4518
        %v4524 = vadd.f32 %v4405, %v4520
        %v4525 = vtanh.pop %v4523
        %v4526 = vtanh.pop %v4524
        %v4527 = vsub.f32 1.0, %v4502
        %v4528 = vsub.f32 1.0, %v4504
        %4531 = vrot.lane.b32.xlu0 %v4525, 96
        %v4532 = vpop.permute.xlu0 %4531
        %4533 = vrot.lane.b32.xlu0 %v4526, 96
        %v4534 = vpop.permute.xlu0 %4533
        %v4537 = vmul.f32 %v4527, %v4532
        %v4538 = vmul.f32 %v4528, %v4534
        %v4539 = vmul.f32 %v4502, %v3494
        %v4540 = vmul.f32 %v4504, %v3495
        %v4541 = vadd.f32 %v4537, %v4539
        %v4542 = vadd.f32 %v4538, %v4540
        %4545 = vrot.lane.b32.xlu0 %v4541, 96
        %v4546 = vpop.permute.xlu0 %4545
        %4547 = vrot.lane.b32.xlu0 %v4542, 96
        %v4548 = vpop.permute.xlu0 %4547
        %v4551 = vsel %vm493, %v4546, 0.0
        %4552 = vadd.xlane.f32.xlu0 %v4551
        %v4553 = vpop.xlane.xlu0 %4552
        %v4554 = vsel %vm493, %v4548, 0.0
        %4555 = vadd.xlane.f32.xlu0 %v4554
        %v4556 = vpop.xlane.xlu0 %4555
        %v4557 = vmul.f32 %v4553, %v518
        %v4558 = vmul.f32 %v4556, %v518
        %v4559 = vsub.f32 %v4541, %v4557
        %v4560 = vsub.f32 %v4542, %v4558
        %v4561 = vmul.f32 %v4559, %v4559
        %v4562 = vmul.f32 %v4560, %v4560
        %4565 = vrot.lane.b32.xlu0 %v4561, 96
        %v4566 = vpop.permute.xlu0 %4565
        %4567 = vrot.lane.b32.xlu0 %v4562, 96
        %v4568 = vpop.permute.xlu0 %4567
        %v4571 = vsel %vm493, %v4566, 0.0
        %4572 = vadd.xlane.f32.xlu0 %v4571
        %v4573 = vpop.xlane.xlu0 %4572
        %v4574 = vsel %vm493, %v4568, 0.0
        %4575 = vadd.xlane.f32.xlu0 %v4574
        %v4576 = vpop.xlane.xlu0 %4575
        %v4577 = vmul.f32 %v4573, %v518
        %v4578 = vmul.f32 %v4576, %v518
        %v4579 = vadd.f32 %v4577, 1e-05
        %v4580 = vadd.f32 %v4578, 1e-05
        %v4581 = vrsqrt.pop %v4579
        %v4582 = vrsqrt.pop %v4580
        %v4583 = vmul.f32 %v4559, %v4581
        %v4584 = vmul.f32 %v4560, %v4582
        %v4585 = vmul.f32 %v4583, %v1995
        %v4586 = vmul.f32 %v4584, %v1995
        %v4587 = vadd.f32 %v4585, %v2001
        %v4588 = vadd.f32 %v4586, %v2001
        %v4589 = vld [vmem:[#allocation11] sm:$0xff]
        %v4590 = vld [vmem:[#allocation11 + $0x8] sm:$0xff]
        %v4591 = vld [vmem:[#allocation11 + $0x10] sm:$0xff]
        %v4592 = vld [vmem:[#allocation11 + $0x18] sm:$0xff]
        %4595 = vrot.lane.b32.xlu0 %v4587, 96
        %v4596 = vpop.permute.xlu0 %4595
        %4597 = vrot.lane.b32.xlu0 %v4588, 96
        %v4598 = vpop.permute.xlu0 %4597
        %v4599 = vsel %vm493, %v4596, 0
        %v4601 = vsel %vm493, %v4598, 0
        %4603 = vmatprep.subr.mxu0 0.0
        %4604 = vmatpush1.msra.mxu0 %v4589
        %4605 = vmatprep.subr.mxu0 0.0
        %4606 = vmatpush1.msra.mxu0 %v4590
        %4607 = vmatprep.subr.mxu0 0.0
        %4608 = vmatpush1.msra.mxu0 %v4591
        %4609 = vmatprep.subr.mxu0 0.0
        %4610 = vmatpush1.msra.mxu0 %v4592
        %4611 = vmatprep.subr.mxu0 0.0
        %4612 = vmatpush1.msra.mxu0 0.0
        %4613 = vmatprep.subr.mxu0 0.0
        %4614 = vmatpush1.msra.mxu0 0.0
        %4615 = vmatprep.subr.mxu0 0.0
        %4616 = vmatpush1.msra.mxu0 0.0
        %4617 = vmatprep.subr.mxu0 0.0
        %4618 = vmatpush1.msra.mxu0 0.0
        %4619 = vmatprep.subr.mxu0 0.0
        %4620 = vmatpush1.msra.mxu0 0.0
        %4621 = vmatprep.subr.mxu0 0.0
        %4622 = vmatpush1.msra.mxu0 0.0
        %4623 = vmatprep.subr.mxu0 0.0
        %4624 = vmatpush1.msra.mxu0 0.0
        %4625 = vmatprep.subr.mxu0 0.0
        %4626 = vmatpush1.msra.mxu0 0.0
        %4627 = vmatprep.subr.mxu0 0.0
        %4628 = vmatpush1.msra.mxu0 0.0
        %4629 = vmatprep.subr.mxu0 0.0
        %4630 = vmatpush1.msra.mxu0 0.0
        %4631 = vmatprep.subr.mxu0 0.0
        %4632 = vmatpush1.msra.mxu0 0.0
        %4633 = vmatprep.subr.mxu0 0.0
        %4634 = vmatpush1.msra.mxu0 0.0
        %4635 = vmatprep.subr.mxu0 0.0
        %4636 = vmatpush1.msra.mxu0 0.0
        %4637 = vmatprep.subr.mxu0 0.0
        %4638 = vmatpush1.msra.mxu0 0.0
        %4639 = vmatprep.subr.mxu0 0.0
        %4640 = vmatpush1.msra.mxu0 0.0
        %4641 = vmatprep.subr.mxu0 0.0
        %4642 = vmatpush1.msra.mxu0 0.0
        %4643 = vmatprep.subr.mxu0 0.0
        %4644 = vmatpush1.msra.mxu0 0.0
        %4645 = vmatprep.subr.mxu0 0.0
        %4646 = vmatpush1.msra.mxu0 0.0
        %4647 = vmatprep.subr.mxu0 0.0
        %4648 = vmatpush1.msra.mxu0 0.0
        %4649 = vmatprep.subr.mxu0 0.0
        %4650 = vmatpush1.msra.mxu0 0.0
        %4651 = vmatprep.subr.mxu0 0.0
        %4652 = vmatpush1.msra.mxu0 0.0
        %4653 = vmatprep.subr.mxu0 0.0
        %4654 = vmatpush1.msra.mxu0 0.0
        %4655 = vmatprep.subr.mxu0 0.0
        %4656 = vmatpush1.msra.mxu0 0.0
        %4657 = vmatprep.subr.mxu0 0.0
        %4658 = vmatpush1.msra.mxu0 0.0
        %4659 = vmatprep.subr.mxu0 0.0
        %4660 = vmatpush1.msra.mxu0 0.0
        %4661 = vmatprep.subr.mxu0 0.0
        %4662 = vmatpush1.msra.mxu0 0.0
        %4663 = vmatprep.subr.mxu0 0.0
        %4664 = vmatpush1.msra.mxu0 0.0
        %4665 = vmatprep.subr.mxu0 0.0
        %4666 = vmatpush1.msra.mxu0 0.0
        %4667 = vmatprep.mubr.f32.mxu0 0.0
        %4668 = vmatmul.mubr.f32.gmra.mrb[0].mxu0 %v4599
        %v4669 = vpop.f32.mrb[0].mxu0
        %v4670 = vadd.f32 %v480, %v4669
        %v4671 = vpop.f32.mrb[0].mxu0
        %4672 = vmatprep.mubr.f32.mxu0 0.0
        %4673 = vmatmul.mubr.f32.gmra.mrb[0].mxu0 %v4601
        %v4674 = vpop.f32.mrb[0].mxu0
        %v4675 = vadd.f32 %v480, %v4674
        %v4676 = vpop.f32.mrb[0].mxu0
        %4677 = vdwg.mxu0
        %v4678 = vmax.f32 %v4670, 0.0
        %v4679 = vmax.f32 %v4675, 0.0
        %v4680 = vld [vmem:[%s8] sm:$0xff]
        %v4681 = vld [vmem:[%s8 + $0x8] sm:$0xff]
        %v4682 = vld [vmem:[%s8 + $0x10] sm:$0xff]
        %v4683 = vld [vmem:[%s8 + $0x18] sm:$0xff]
        %v4684 = vld [vmem:[%s8 + $0x20] sm:$0xff]
        %v4685 = vld [vmem:[%s8 + $0x28] sm:$0xff]
        %v4686 = vld [vmem:[%s8 + $0x30] sm:$0xff]
        %v4687 = vld [vmem:[%s8 + $0x38] sm:$0xff]
        %v4688 = vld [vmem:[%s8 + $0x40] sm:$0xff]
        %v4689 = vld [vmem:[%s8 + $0x48] sm:$0xff]
        %v4690 = vld [vmem:[%s8 + $0x50] sm:$0xff]
        %v4691 = vld [vmem:[%s8 + $0x58] sm:$0xff]
        %v4692 = vld [vmem:[%s8 + $0x60] sm:$0xff]
        %v4693 = vld [vmem:[%s8 + $0x68] sm:$0xff]
        %v4694 = vld [vmem:[%s8 + $0x70] sm:$0xff]
        %v4695 = vld [vmem:[%s8 + $0x78] sm:$0xff]
        %4696 = vmatprep.subr.mxu0 0.0
        %4697 = vmatpush1.msra.mxu0 %v4680
        %4698 = vmatprep.subr.mxu0 0.0
        %4699 = vmatpush1.msra.mxu0 %v4681
        %4700 = vmatprep.subr.mxu0 0.0
        %4701 = vmatpush1.msra.mxu0 %v4682
        %4702 = vmatprep.subr.mxu0 0.0
        %4703 = vmatpush1.msra.mxu0 %v4683
        %4704 = vmatprep.subr.mxu0 0.0
        %4705 = vmatpush1.msra.mxu0 %v4684
        %4706 = vmatprep.subr.mxu0 0.0
        %4707 = vmatpush1.msra.mxu0 %v4685
        %4708 = vmatprep.subr.mxu0 0.0
        %4709 = vmatpush1.msra.mxu0 %v4686
        %4710 = vmatprep.subr.mxu0 0.0
        %4711 = vmatpush1.msra.mxu0 %v4687
        %4712 = vmatprep.subr.mxu0 0.0
        %4713 = vmatpush1.msra.mxu0 %v4688
        %4714 = vmatprep.subr.mxu0 0.0
        %4715 = vmatpush1.msra.mxu0 %v4689
        %4716 = vmatprep.subr.mxu0 0.0
        %4717 = vmatpush1.msra.mxu0 %v4690
        %4718 = vmatprep.subr.mxu0 0.0
        %4719 = vmatpush1.msra.mxu0 %v4691
        %4720 = vmatprep.subr.mxu0 0.0
        %4721 = vmatpush1.msra.mxu0 %v4692
        %4722 = vmatprep.subr.mxu0 0.0
        %4723 = vmatpush1.msra.mxu0 %v4693
        %4724 = vmatprep.subr.mxu0 0.0
        %4725 = vmatpush1.msra.mxu0 %v4694
        %4726 = vmatprep.subr.mxu0 0.0
        %4727 = vmatpush1.msra.mxu0 %v4695
        %4728 = vmatprep.subr.mxu0 0.0
        %4729 = vmatpush1.msra.mxu0 0.0
        %4730 = vmatprep.subr.mxu0 0.0
        %4731 = vmatpush1.msra.mxu0 0.0
        %4732 = vmatprep.subr.mxu0 0.0
        %4733 = vmatpush1.msra.mxu0 0.0
        %4734 = vmatprep.subr.mxu0 0.0
        %4735 = vmatpush1.msra.mxu0 0.0
        %4736 = vmatprep.subr.mxu0 0.0
        %4737 = vmatpush1.msra.mxu0 0.0
        %4738 = vmatprep.subr.mxu0 0.0
        %4739 = vmatpush1.msra.mxu0 0.0
        %4740 = vmatprep.subr.mxu0 0.0
        %4741 = vmatpush1.msra.mxu0 0.0
        %4742 = vmatprep.subr.mxu0 0.0
        %4743 = vmatpush1.msra.mxu0 0.0
        %4744 = vmatprep.subr.mxu0 0.0
        %4745 = vmatpush1.msra.mxu0 0.0
        %4746 = vmatprep.subr.mxu0 0.0
        %4747 = vmatpush1.msra.mxu0 0.0
        %4748 = vmatprep.subr.mxu0 0.0
        %4749 = vmatpush1.msra.mxu0 0.0
        %4750 = vmatprep.subr.mxu0 0.0
        %4751 = vmatpush1.msra.mxu0 0.0
        %4752 = vmatprep.subr.mxu0 0.0
        %4753 = vmatpush1.msra.mxu0 0.0
        %4754 = vmatprep.subr.mxu0 0.0
        %4755 = vmatpush1.msra.mxu0 0.0
        %4756 = vmatprep.subr.mxu0 0.0
        %4757 = vmatpush1.msra.mxu0 0.0
        %4758 = vmatprep.subr.mxu0 0.0
        %4759 = vmatpush1.msra.mxu0 0.0
        %4760 = vmatprep.mubr.f32.mxu0 0.0
        %4761 = vmatmul.mubr.f32.gmra.mrb[0].mxu0 %v4678
        %v4762 = vpop.f32.mrb[0].mxu0
        %v4763 = vadd.f32 0.0, %v4762
        %v4764 = vpop.f32.mrb[0].mxu0
        %4765 = vmatprep.mubr.f32.mxu0 0.0
        %4766 = vmatmul.mubr.f32.gmra.mrb[0].mxu0 %v4679
        %v4767 = vpop.f32.mrb[0].mxu0
        %v4768 = vadd.f32 0.0, %v4767
        %v4769 = vpop.f32.mrb[0].mxu0
        %4770 = vdwg.mxu0
        %4773 = vrot.lane.b32.xlu0 %v4763, 32
        %v4774 = vpop.permute.xlu0 %4773
        %4775 = vrot.lane.b32.xlu0 %v4768, 32
        %v4776 = vpop.permute.xlu0 %4775
        %v4779 = vadd.f32 %v4541, %v4774
        %v4780 = vadd.f32 %v4542, %v4776
        %v4781 = vadd.f32 %v4779, %v2199
        %v4782 = vadd.f32 %v4780, %v2199
        %v4785 = vcombine.high %v4781, %v4781
        %v4786 = vcombine.high %v4782, %v4782
        %4787 = vrot.lane.b32.xlu0 %v4781, 96
        %v4788 = vpop.permute.xlu0 %4787
        %4789 = vrot.lane.b32.xlu0 %v4785, 96
        %v4790 = vpop.permute.xlu0 %4789
        %4791 = vrot.lane.b32.xlu0 %v4782, 96
        %v4792 = vpop.permute.xlu0 %4791
        %4793 = vrot.lane.b32.xlu0 %v4786, 96
        %v4794 = vpop.permute.xlu0 %4793
        %vm4799 = vcmask 257024
        %4800 = vst.msk [vmem:[%s432] sm:$0xf] %vm4799, %v4788
        %4801 = vst.msk [vmem:[%s432 + $0x4] sm:$0xf] %vm4799, %v4790
        %4802 = vst.msk [vmem:[%s432 + $0x8] sm:$0xf] %vm4799, %v4792
        %4803 = vst.msk [vmem:[%s432 + $0xc] sm:$0xf] %vm4799, %v4794
        %s4804 = sand.u32 %s234, 1
        %s4805 = scalar_lea.sflag [#allocation4], %s4804
        %s4806 = sand.u32 %s234, 1
        %s4807 = smul.addr %s4806, 16
        %s4808 = scalar_lea.vmem [#allocation13], %s4807
        // Predicated region
        $region81: #{tpu_custom_call.1} parent=55 // pred_check
          %p4809 = pneg %p244
        $region82: #{tpu_custom_call.1} parent=55 // pred_check_branch
          %4811 = sbr.rel (%p4809) target = $region84
        $region83: #{tpu_custom_call.1} parent=55 // pred_region
          %s4812 = smul.u32 4, %s27
          %s4814 = ssub.s32 256, 256
          %4815 = vsyncadd %s4805, %s4814
          %s4816 = smul.addr %s4812, 64
          %s4817 = scalar_lea.hbm %s9, %s4816
          %s4818 = sshll.u32 %s4808, 4
          %s4819 = int_to_ptr.vmem [resolvable:$true] %s4818
          %4824 = dma.vmem_to_hbm [thread:$0]  %s4819, 256, %s4817, %s4805, 64, 64, 4
        $region84: #{tpu_custom_call.1} parent=55 // pred_fallthru
          _
      $region56: #{tpu_custom_call.1} parent=5 // pred_fallthru
        _
      %p4825 = scmp.le.s32.totalorder 2, %s22
      // Predicated region
      $region85: #{tpu_custom_call.1} parent=5 // pred_check
        %p4826 = pneg %p4825
      $region86: #{tpu_custom_call.1} parent=5 // pred_check_branch
        %4828 = sbr.rel (%p4826) target = $region88
      $region87: #{tpu_custom_call.1} parent=5 // pred_region
        %s4829 = ssub.s32 %s22, 2
        // Predicated region
        $region89: #{tpu_custom_call.1} parent=87 // pred_check
          %p4830 = pneg %p250
        $region90: #{tpu_custom_call.1} parent=87 // pred_check_branch
          %4832 = sbr.rel (%p4830) target = $region92
        $region91: #{tpu_custom_call.1} parent=87 // pred_region
          %s4833 = sand.u32 %s235, 1
          %s4834 = scalar_lea.sflag [#allocation4], %s4833
          %s4835 = sand.u32 %s235, 1
          %s4836 = smul.addr %s4835, 16
          %s4837 = scalar_lea.vmem [#allocation13], %s4836
          %4838 = dma.done %s4834, 256
        $region92: #{tpu_custom_call.1} parent=87 // pred_fallthru
          _
      $region88: #{tpu_custom_call.1} parent=5 // pred_fallthru
        _
    $region6: #{tpu_custom_call.1} parent=1 // loop_footer
      %s26 = sadd.s32 1, %s22
    $region7: #{tpu_custom_call.1} parent=1 // loop_footer_branch
      %21 = sbr.rel target = $region3
    $region8: #{tpu_custom_call.1} parent=1 // loop_exit
      _
    %4839 = vsyncpa [#allocation3], 1
    %s4840 = scalar_lea.sflag [#allocation3], 1
    %4841 = vsyncpa %s4840, 1
    %4842 = vsyncpa [#allocation6], 1
    %4843 = vsyncpa [#allocation9], 1
    %4844 = vsyncpa [#allocation12], 1
    %4845 = vsyncpa [#allocation4], 1
    %s4846 = scalar_lea.sflag [#allocation4], 1
    %4847 = vsyncpa %s4846, 1

</llo_original>
